<compile_context>
chip_gen: v7x
topology: tpu7x:2x2x1
jax: 0.10.0
libtpu: 0.0.40
codegen_flags: <defaults>
</compile_context>

<pallas_src>
import functools
import math

import jax
import jax.numpy as jnp
from jax.experimental import pallas as pl
from jax.experimental.pallas import tpu as pltpu

VMEM_SPEC = pl.BlockSpec(memory_space=pltpu.MemorySpace.VMEM)
OUT_PAD = 128          # lane-dense padded width for the classifier output
LN_EPS = 1e-12


# --------------------------------------------------------------------------
# Fused Pallas kernel: embeddings-LN -> L x (attention + FFN) -> CLS head
# --------------------------------------------------------------------------
def _layernorm(x, g, b, eps):
    mean = jnp.mean(x, axis=-1, keepdims=True)
    xc = x - mean
    var = jnp.mean(xc * xc, axis=-1, keepdims=True)
    inv = jax.lax.rsqrt(var + eps)
    return xc * inv * g + b


def _gelu_tanh(x):
    # TODO(synk): exact erf-GELU replaced with tanh approximation (erf lowering
    # in Mosaic is not guaranteed); numerics differ at ~1e-3 level.
    return 0.5 * x * (1.0 + jnp.tanh(0.7978845608028654 * (x + 0.044715 * x * x * x)))


def _fused_bert_kernel(
    emb_ref,                      # (B*S, H)  word+pos+type embedding sum
    mask_ref,                     # (B, S)    attention mask as float (1.0 / 0.0)
    emb_ln_g_ref, emb_ln_b_ref,   # (1, H)
    qkv_w_ref, qkv_b_ref,         # (L, H, 3H), (L, 1, 3H)
    o_w_ref, o_b_ref,             # (L, H, H),  (L, 1, H)
    ln1_g_ref, ln1_b_ref,         # (L, 1, H)
    fc1_w_ref, fc1_b_ref,         # (L, H, I),  (L, 1, I)
    fc2_w_ref, fc2_b_ref,         # (L, I, H),  (L, 1, H)
    ln2_g_ref, ln2_b_ref,         # (L, 1, H)
    cls_w_ref, cls_b_ref,         # (H, OUT_PAD), (1, OUT_PAD)
    out_ref,                      # (B, OUT_PAD)
    *, num_layers, num_heads, B, S, H, eps):
    dh = H // num_heads
    scale = 1.0 / math.sqrt(dh)

    # Embedding LayerNorm (no residual).
    x = _layernorm(emb_ref[...], emb_ln_g_ref[...], emb_ln_b_ref[...], eps)   # (B*S, H)

    # Additive attention mask built in-kernel: (B, 1, S), broadcast over heads.
    neg_mask = ((1.0 - mask_ref[...]) * -10000.0)[:, None, :]

    for li in range(num_layers):
        # ---- Self-attention: fused QKV projection (one MXU pass) ----
        qkv = jnp.dot(x, qkv_w_ref[li], preferred_element_type=jnp.float32)
        qkv = qkv + qkv_b_ref[li]                                             # (B*S, 3H)

        ow = o_w_ref[li]                                                      # (H, H)
        attn_acc = None
        for h in range(num_heads):
            q_h = qkv[:, h * dh:(h + 1) * dh].reshape(B, S, dh)
            k_h = qkv[:, H + h * dh:H + (h + 1) * dh].reshape(B, S, dh)
            v_h = qkv[:, 2 * H + h * dh:2 * H + (h + 1) * dh].reshape(B, S, dh)

            s = jnp.einsum("bqd,bkd->bqk", q_h, k_h,
                           preferred_element_type=jnp.float32) * scale
            s = s + neg_mask
            m = jnp.max(s, axis=-1, keepdims=True)
            p = jnp.exp(s - m)
            denom = jnp.sum(p, axis=-1, keepdims=True)
            p = p * pl.reciprocal(denom, approx=True)                         # EUP, not VPU div
            ctx_h = jnp.einsum("bqk,bkd->bqd", p, v_h,
                               preferred_element_type=jnp.float32)            # (B, S, dh)
            ctx_h = ctx_h.reshape(B * S, dh)

            # Per-head slice of the output projection == concat-then-matmul.
            contrib = jnp.dot(ctx_h, ow[h * dh:(h + 1) * dh, :],
                              preferred_element_type=jnp.float32)
            attn_acc = contrib if attn_acc is None else attn_acc + contrib

        attn_out = attn_acc + o_b_ref[li]
        x = _layernorm(attn_out + x, ln1_g_ref[li], ln1_b_ref[li], eps)

        # ---- Feed-forward ----
        hmid = jnp.dot(x, fc1_w_ref[li], preferred_element_type=jnp.float32)
        hmid = _gelu_tanh(hmid + fc1_b_ref[li])
        ffn = jnp.dot(hmid, fc2_w_ref[li], preferred_element_type=jnp.float32)
        ffn = ffn + fc2_b_ref[li]
        x = _layernorm(ffn + x, ln2_g_ref[li], ln2_b_ref[li], eps)

    # ---- CLS token + classifier head (lane-dense padded output) ----
    cls = jnp.concatenate([x[b * S:b * S + 1, :] for b in range(B)], axis=0)  # (B, H)
    logits = jnp.dot(cls, cls_w_ref[...], preferred_element_type=jnp.float32)
    logits = logits + cls_b_ref[...]                                          # (B, OUT_PAD)
    out_ref[...] = pl.reciprocal(1.0 + jnp.exp(-logits), approx=True)         # sigmoid


# --------------------------------------------------------------------------
# Parameter construction (deterministic, synthetic, stacked per layer)
# --------------------------------------------------------------------------
def init_params(key, *, vocab=64, hidden=32, num_layers=2, num_heads=2,
                intermediate=64, max_pos=32, type_vocab=2, out_pad=OUT_PAD):
    def nrm(k, shape):
        return 0.02 * jax.random.normal(k, shape, dtype=jnp.float32)

    keys = jax.random.split(key, 4 + num_layers)
    qkv_w, o_w, fc1_w, fc2_w = [], [], [], []
    for li in range(num_layers):
        lk = jax.random.split(keys[4 + li], 6)
        q_w = nrm(lk[0], (hidden, hidden))
        k_w = nrm(lk[1], (hidden, hidden))
        v_w = nrm(lk[2], (hidden, hidden))
        qkv_w.append(jnp.concatenate([q_w, k_w, v_w], axis=1))    # (H, 3H)
        o_w.append(nrm(lk[3], (hidden, hidden)))
        fc1_w.append(nrm(lk[4], (hidden, intermediate)))
        fc2_w.append(nrm(lk[5], (intermediate, hidden)))

    L = num_layers
    cls_w = nrm(keys[3], (hidden, 1))
    cls_w_pad = jnp.zeros((hidden, out_pad), jnp.float32).at[:, :1].set(cls_w)

    return {
        "num_heads": num_heads,
        "word_emb": nrm(keys[0], (vocab, hidden)),
        "pos_emb": nrm(keys[1], (max_pos, hidden)),
        "type_emb": nrm(keys[2], (type_vocab, hidden)),
        "emb_ln_g": jnp.ones((1, hidden), jnp.float32),
        "emb_ln_b": jnp.zeros((1, hidden), jnp.float32),
        "qkv_w": jnp.stack(qkv_w),                                 # (L, H, 3H)
        "qkv_b": jnp.zeros((L, 1, 3 * hidden), jnp.float32),
        "o_w": jnp.stack(o_w),                                     # (L, H, H)
        "o_b": jnp.zeros((L, 1, hidden), jnp.float32),
        "ln1_g": jnp.ones((L, 1, hidden), jnp.float32),
        "ln1_b": jnp.zeros((L, 1, hidden), jnp.float32),
        "fc1_w": jnp.stack(fc1_w),                                 # (L, H, I)
        "fc1_b": jnp.zeros((L, 1, intermediate), jnp.float32),
        "fc2_w": jnp.stack(fc2_w),                                 # (L, I, H)
        "fc2_b": jnp.zeros((L, 1, hidden), jnp.float32),
        "ln2_g": jnp.ones((L, 1, hidden), jnp.float32),
        "ln2_b": jnp.zeros((L, 1, hidden), jnp.float32),
        "cls_w_pad": cls_w_pad,                                    # (H, OUT_PAD)
        "cls_b_pad": jnp.zeros((1, out_pad), jnp.float32),
    }


# --------------------------------------------------------------------------
# Forward pass: embedding gather in JAX (glue), everything else in ONE kernel
# --------------------------------------------------------------------------
def bert_classifier_forward(params, input_ids, attention_mask):
    B, S = input_ids.shape
    H = params["word_emb"].shape[1]
    nh = params["num_heads"]
    L = params["qkv_w"].shape[0]

    pos_ids = jnp.arange(S)
    emb = (params["word_emb"][input_ids]
           + params["pos_emb"][pos_ids][None, :, :]
           + params["type_emb"][0][None, None, :])
    emb = emb.reshape(B * S, H).astype(jnp.float32)
    mask_f = attention_mask.astype(jnp.float32)

    out_pad = pl.pallas_call(
        functools.partial(_fused_bert_kernel, num_layers=L, num_heads=nh,
                          B=B, S=S, H=H, eps=LN_EPS),
        out_shape=jax.ShapeDtypeStruct((B, OUT_PAD), jnp.float32),
        in_specs=[VMEM_SPEC] * 18,
        out_specs=VMEM_SPEC,
    )(emb, mask_f,
      params["emb_ln_g"], params["emb_ln_b"],
      params["qkv_w"], params["qkv_b"], params["o_w"], params["o_b"],
      params["ln1_g"], params["ln1_b"],
      params["fc1_w"], params["fc1_b"], params["fc2_w"], params["fc2_b"],
      params["ln2_g"], params["ln2_b"],
      params["cls_w_pad"], params["cls_b_pad"])

    return out_pad[:, :1]                                          # (B, 1)


# --------------------------------------------------------------------------
# Pure-JAX reference (same tanh-GELU) for a numerical sanity check
# --------------------------------------------------------------------------
def bert_classifier_reference(params, input_ids, attention_mask):
    B, S = input_ids.shape
    H = params["word_emb"].shape[1]
    nh = params["num_heads"]
    dh = H // nh
    L = params["qkv_w"].shape[0]

    def ln(v, g, b):
        m = jnp.mean(v, axis=-1, keepdims=True)
        c = v - m
        var = jnp.mean(c * c, axis=-1, keepdims=True)
        return c * jax.lax.rsqrt(var + LN_EPS) * g + b

    pos_ids = jnp.arange(S)
    x = (params["word_emb"][input_ids]
         + params["pos_emb"][pos_ids][None, :, :]
         + params["type_emb"][0][None, None, :]).astype(jnp.float32)   # (B,S,H)
    x = ln(x, params["emb_ln_g"][0], params["emb_ln_b"][0])
    neg = (1.0 - attention_mask.astype(jnp.float32)) * -10000.0        # (B,S)

    for li in range(L):
        qkv = x @ params["qkv_w"][li] + params["qkv_b"][li]
        q, k, v = qkv[..., :H], qkv[..., H:2 * H], qkv[..., 2 * H:]
        heads = lambda t: t.reshape(B, S, nh, dh).transpose(0, 2, 1, 3)
        s = jnp.einsum("bhqd,bhkd->bhqk", heads(q), heads(k)) / math.sqrt(dh)
        s = s + neg[:, None, None, :]
        p = jax.nn.softmax(s, axis=-1)
        ctx = jnp.einsum("bhqk,bhkd->bhqd", p, heads(v))
        ctx = ctx.transpose(0, 2, 1, 3).reshape(B, S, H)
        attn = ctx @ params["o_w"][li] + params["o_b"][li]
        x = ln(attn + x, params["ln1_g"][li], params["ln1_b"][li])
        h1 = x @ params["fc1_w"][li] + params["fc1_b"][li]
        h1 = 0.5 * h1 * (1.0 + jnp.tanh(0.7978845608028654 * (h1 + 0.044715 * h1 ** 3)))
        ffn = h1 @ params["fc2_w"][li] + params["fc2_b"][li]
        x = ln(ffn + x, params["ln2_g"][li], params["ln2_b"][li])

    cls = x[:, 0, :]
    logits = cls @ params["cls_w_pad"][:, :1] + params["cls_b_pad"][:, :1]
    return jax.nn.sigmoid(logits)


# --------------------------------------------------------------------------
if __name__ == "__main__":
    key = jax.random.PRNGKey(0)
    pkey, ikey = jax.random.split(key)

    B, S, VOCAB = 2, 8, 64
    params = init_params(pkey, vocab=VOCAB, hidden=32, num_layers=2,
                         num_heads=2, intermediate=64, max_pos=32)

    input_ids = jax.random.randint(ikey, (B, S), 0, VOCAB, dtype=jnp.int32)
    attention_mask = jnp.ones((B, S), dtype=jnp.int32)
    attention_mask = attention_mask.at[1, 6:].set(0)   # pad out last 2 tokens of item 1

    fwd = jax.jit(functools.partial(bert_classifier_forward, params))
    out = jax.block_until_ready(fwd(input_ids, attention_mask))

    ref = bert_classifier_reference(params, input_ids, attention_mask)

    assert out.shape == (B, 1)
    assert bool(jnp.all((out >= 0.0) & (out <= 1.0)))
    assert bool(jnp.allclose(out, ref, atol=2e-2, rtol=2e-2))
    print("KERNEL_OK")
</pallas_src>

<mosaic_0001>
module attributes {stable_mosaic.version = 11 : i64} {
  func.func @_fused_bert_kernel(%arg0: memref<16x32xf32, #tpu.memory_space<vmem>>, %arg1: memref<2x8xf32, #tpu.memory_space<vmem>>, %arg2: memref<1x32xf32, #tpu.memory_space<vmem>>, %arg3: memref<1x32xf32, #tpu.memory_space<vmem>>, %arg4: memref<2x32x96xf32, #tpu.memory_space<vmem>>, %arg5: memref<2x1x96xf32, #tpu.memory_space<vmem>>, %arg6: memref<2x32x32xf32, #tpu.memory_space<vmem>>, %arg7: memref<2x1x32xf32, #tpu.memory_space<vmem>>, %arg8: memref<2x1x32xf32, #tpu.memory_space<vmem>>, %arg9: memref<2x1x32xf32, #tpu.memory_space<vmem>>, %arg10: memref<2x32x64xf32, #tpu.memory_space<vmem>>, %arg11: memref<2x1x64xf32, #tpu.memory_space<vmem>>, %arg12: memref<2x64x32xf32, #tpu.memory_space<vmem>>, %arg13: memref<2x1x32xf32, #tpu.memory_space<vmem>>, %arg14: memref<2x1x32xf32, #tpu.memory_space<vmem>>, %arg15: memref<2x1x32xf32, #tpu.memory_space<vmem>>, %arg16: memref<32x128xf32, #tpu.memory_space<vmem>>, %arg17: memref<1x128xf32, #tpu.memory_space<vmem>>, %arg18: memref<2x128xf32, #tpu.memory_space<vmem>>) attributes {dimension_semantics = [], scalar_prefetch = 0 : i64, scratch_operands = 0 : i64, tpu.core_type = #tpu.core_type<tc>} {
    %c0 = arith.constant 0 : index
    %c0_0 = arith.constant 0 : index
    %0 = vector.load %arg0[%c0, %c0_0] : memref<16x32xf32, #tpu.memory_space<vmem>>, vector<16x32xf32>
    %c0_1 = arith.constant 0 : index
    %c0_2 = arith.constant 0 : index
    %1 = vector.load %arg2[%c0_1, %c0_2] : memref<1x32xf32, #tpu.memory_space<vmem>>, vector<1x32xf32>
    %c0_3 = arith.constant 0 : index
    %c0_4 = arith.constant 0 : index
    %2 = vector.load %arg3[%c0_3, %c0_4] : memref<1x32xf32, #tpu.memory_space<vmem>>, vector<1x32xf32>
    %cst = arith.constant dense<0.000000e+00> : vector<16xf32>
    %3 = vector.multi_reduction <add>, %0, %cst [1] : vector<16x32xf32> to vector<16xf32>
    %4 = vector.shape_cast %3 : vector<16xf32> to vector<16x1xf32>
    %cst_5 = arith.constant 3.200000e+01 : f32
    %5 = vector.broadcast %cst_5 : f32 to vector<16x1xf32>
    %6 = arith.divf %4, %5 : vector<16x1xf32>
    %7 = vector.broadcast %6 : vector<16x1xf32> to vector<16x32xf32>
    %8 = arith.subf %0, %7 : vector<16x32xf32>
    %9 = arith.mulf %8, %8 : vector<16x32xf32>
    %cst_6 = arith.constant dense<0.000000e+00> : vector<16xf32>
    %10 = vector.multi_reduction <add>, %9, %cst_6 [1] : vector<16x32xf32> to vector<16xf32>
    %11 = vector.shape_cast %10 : vector<16xf32> to vector<16x1xf32>
    %cst_7 = arith.constant 3.200000e+01 : f32
    %12 = vector.broadcast %cst_7 : f32 to vector<16x1xf32>
    %13 = arith.divf %11, %12 : vector<16x1xf32>
    %cst_8 = arith.constant 9.99999996E-13 : f32
    %14 = vector.broadcast %cst_8 : f32 to vector<16x1xf32>
    %15 = arith.addf %13, %14 : vector<16x1xf32>
    %16 = math.rsqrt %15 : vector<16x1xf32>
    %17 = vector.broadcast %16 : vector<16x1xf32> to vector<16x32xf32>
    %18 = arith.mulf %8, %17 : vector<16x32xf32>
    %19 = vector.broadcast %1 : vector<1x32xf32> to vector<16x32xf32>
    %20 = arith.mulf %18, %19 : vector<16x32xf32>
    %21 = vector.broadcast %2 : vector<1x32xf32> to vector<16x32xf32>
    %22 = arith.addf %20, %21 : vector<16x32xf32>
    %c0_9 = arith.constant 0 : index
    %c0_10 = arith.constant 0 : index
    %23 = vector.load %arg1[%c0_9, %c0_10] : memref<2x8xf32, #tpu.memory_space<vmem>>, vector<2x8xf32>
    %cst_11 = arith.constant 1.000000e+00 : f32
    %24 = vector.broadcast %cst_11 : f32 to vector<2x8xf32>
    %25 = arith.subf %24, %23 : vector<2x8xf32>
    %cst_12 = arith.constant -1.000000e+04 : f32
    %26 = vector.broadcast %cst_12 : f32 to vector<2x8xf32>
    %27 = arith.mulf %25, %26 : vector<2x8xf32>
    %28 = vector.shape_cast %27 : vector<2x8xf32> to vector<2x1x8xf32>
    %c0_13 = arith.constant 0 : index
    %c0_14 = arith.constant 0 : index
    %c0_15 = arith.constant 0 : index
    %29 = vector.load %arg4[%c0_13, %c0_14, %c0_15] : memref<2x32x96xf32, #tpu.memory_space<vmem>>, vector<1x32x96xf32>
    %30 = vector.shape_cast %29 : vector<1x32x96xf32> to vector<32x96xf32>
    %cst_16 = arith.constant dense<0.000000e+00> : vector<16x96xf32>
    %31 = tpu.matmul %22, %30, %cst_16 {dimension_numbers = #tpu.dot_dimension_numbers<[1], [0], [0], [1], [0, 0, 1, 1], [], []>} : vector<16x32xf32>, vector<32x96xf32>, vector<16x96xf32> -> vector<16x96xf32>
    %c0_17 = arith.constant 0 : index
    %c0_18 = arith.constant 0 : index
    %c0_19 = arith.constant 0 : index
    %32 = vector.load %arg5[%c0_17, %c0_18, %c0_19] : memref<2x1x96xf32, #tpu.memory_space<vmem>>, vector<1x1x96xf32>
    %33 = vector.shape_cast %32 : vector<1x1x96xf32> to vector<1x96xf32>
    %34 = vector.broadcast %33 : vector<1x96xf32> to vector<16x96xf32>
    %35 = arith.addf %31, %34 : vector<16x96xf32>
    %c0_20 = arith.constant 0 : index
    %c0_21 = arith.constant 0 : index
    %c0_22 = arith.constant 0 : index
    %36 = vector.load %arg6[%c0_20, %c0_21, %c0_22] : memref<2x32x32xf32, #tpu.memory_space<vmem>>, vector<1x32x32xf32>
    %37 = vector.shape_cast %36 : vector<1x32x32xf32> to vector<32x32xf32>
    %38 = vector.extract_strided_slice %35 {offsets = [0, 0], sizes = [16, 16], strides = [1, 1]} : vector<16x96xf32> to vector<16x16xf32>
    %39 = vector.shape_cast %38 : vector<16x16xf32> to vector<2x8x16xf32>
    %40 = vector.extract_strided_slice %35 {offsets = [0, 32], sizes = [16, 16], strides = [1, 1]} : vector<16x96xf32> to vector<16x16xf32>
    %41 = vector.shape_cast %40 : vector<16x16xf32> to vector<2x8x16xf32>
    %42 = vector.extract_strided_slice %35 {offsets = [0, 64], sizes = [16, 16], strides = [1, 1]} : vector<16x96xf32> to vector<16x16xf32>
    %43 = vector.shape_cast %42 : vector<16x16xf32> to vector<2x8x16xf32>
    "tpu.trace_start"() <{level = 10 : i32, message = "bqd,bkd->bqk"}> : () -> ()
    %cst_23 = arith.constant dense<0.000000e+00> : vector<2x8x8xf32>
    %44 = tpu.matmul %39, %41, %cst_23 {dimension_numbers = #tpu.dot_dimension_numbers<[2], [2], [1], [1], [0, 0, 0, 1, 1, 1], [0], [0]>} : vector<2x8x16xf32>, vector<2x8x16xf32>, vector<2x8x8xf32> -> vector<2x8x8xf32>
    "tpu.trace_stop"() : () -> ()
    %cst_24 = arith.constant 2.500000e-01 : f32
    %45 = vector.broadcast %cst_24 : f32 to vector<2x8x8xf32>
    %46 = arith.mulf %44, %45 : vector<2x8x8xf32>
    %47 = vector.broadcast %28 : vector<2x1x8xf32> to vector<2x8x8xf32>
    %48 = arith.addf %46, %47 : vector<2x8x8xf32>
    %cst_25 = arith.constant dense<0xFF800000> : vector<2x8xf32>
    %49 = vector.multi_reduction <maximumf>, %48, %cst_25 [2] : vector<2x8x8xf32> to vector<2x8xf32>
    %50 = vector.shape_cast %49 : vector<2x8xf32> to vector<2x8x1xf32>
    %51 = vector.broadcast %50 : vector<2x8x1xf32> to vector<2x8x8xf32>
    %52 = arith.subf %48, %51 : vector<2x8x8xf32>
    %53 = math.exp %52 : vector<2x8x8xf32>
    %cst_26 = arith.constant dense<0.000000e+00> : vector<2x8xf32>
    %54 = vector.multi_reduction <add>, %53, %cst_26 [2] : vector<2x8x8xf32> to vector<2x8xf32>
    %55 = vector.shape_cast %54 : vector<2x8xf32> to vector<2x8x1xf32>
    %56 = tpu.reciprocal %55 {approx = true} : vector<2x8x1xf32> -> vector<2x8x1xf32>
    %57 = vector.broadcast %56 : vector<2x8x1xf32> to vector<2x8x8xf32>
    %58 = arith.mulf %53, %57 : vector<2x8x8xf32>
    "tpu.trace_start"() <{level = 10 : i32, message = "bqk,bkd->bqd"}> : () -> ()
    %cst_27 = arith.constant dense<0.000000e+00> : vector<2x8x16xf32>
    %59 = tpu.matmul %58, %43, %cst_27 {dimension_numbers = #tpu.dot_dimension_numbers<[2], [1], [1], [2], [0, 0, 0, 1, 1, 2], [0], [0]>} : vector<2x8x8xf32>, vector<2x8x16xf32>, vector<2x8x16xf32> -> vector<2x8x16xf32>
    "tpu.trace_stop"() : () -> ()
    %60 = vector.shape_cast %59 : vector<2x8x16xf32> to vector<16x16xf32>
    %61 = vector.extract_strided_slice %37 {offsets = [0, 0], sizes = [16, 32], strides = [1, 1]} : vector<32x32xf32> to vector<16x32xf32>
    %cst_28 = arith.constant dense<0.000000e+00> : vector<16x32xf32>
    %62 = tpu.matmul %60, %61, %cst_28 {dimension_numbers = #tpu.dot_dimension_numbers<[1], [0], [0], [1], [0, 0, 1, 1], [], []>} : vector<16x16xf32>, vector<16x32xf32>, vector<16x32xf32> -> vector<16x32xf32>
    %63 = vector.extract_strided_slice %35 {offsets = [0, 16], sizes = [16, 16], strides = [1, 1]} : vector<16x96xf32> to vector<16x16xf32>
    %64 = vector.shape_cast %63 : vector<16x16xf32> to vector<2x8x16xf32>
    %65 = vector.extract_strided_slice %35 {offsets = [0, 48], sizes = [16, 16], strides = [1, 1]} : vector<16x96xf32> to vector<16x16xf32>
    %66 = vector.shape_cast %65 : vector<16x16xf32> to vector<2x8x16xf32>
    %67 = vector.extract_strided_slice %35 {offsets = [0, 80], sizes = [16, 16], strides = [1, 1]} : vector<16x96xf32> to vector<16x16xf32>
    %68 = vector.shape_cast %67 : vector<16x16xf32> to vector<2x8x16xf32>
    "tpu.trace_start"() <{level = 10 : i32, message = "bqd,bkd->bqk"}> : () -> ()
    %cst_29 = arith.constant dense<0.000000e+00> : vector<2x8x8xf32>
    %69 = tpu.matmul %64, %66, %cst_29 {dimension_numbers = #tpu.dot_dimension_numbers<[2], [2], [1], [1], [0, 0, 0, 1, 1, 1], [0], [0]>} : vector<2x8x16xf32>, vector<2x8x16xf32>, vector<2x8x8xf32> -> vector<2x8x8xf32>
    "tpu.trace_stop"() : () -> ()
    %cst_30 = arith.constant 2.500000e-01 : f32
    %70 = vector.broadcast %cst_30 : f32 to vector<2x8x8xf32>
    %71 = arith.mulf %69, %70 : vector<2x8x8xf32>
    %72 = vector.broadcast %28 : vector<2x1x8xf32> to vector<2x8x8xf32>
    %73 = arith.addf %71, %72 : vector<2x8x8xf32>
    %cst_31 = arith.constant dense<0xFF800000> : vector<2x8xf32>
    %74 = vector.multi_reduction <maximumf>, %73, %cst_31 [2] : vector<2x8x8xf32> to vector<2x8xf32>
    %75 = vector.shape_cast %74 : vector<2x8xf32> to vector<2x8x1xf32>
    %76 = vector.broadcast %75 : vector<2x8x1xf32> to vector<2x8x8xf32>
    %77 = arith.subf %73, %76 : vector<2x8x8xf32>
    %78 = math.exp %77 : vector<2x8x8xf32>
    %cst_32 = arith.constant dense<0.000000e+00> : vector<2x8xf32>
    %79 = vector.multi_reduction <add>, %78, %cst_32 [2] : vector<2x8x8xf32> to vector<2x8xf32>
    %80 = vector.shape_cast %79 : vector<2x8xf32> to vector<2x8x1xf32>
    %81 = tpu.reciprocal %80 {approx = true} : vector<2x8x1xf32> -> vector<2x8x1xf32>
    %82 = vector.broadcast %81 : vector<2x8x1xf32> to vector<2x8x8xf32>
    %83 = arith.mulf %78, %82 : vector<2x8x8xf32>
    "tpu.trace_start"() <{level = 10 : i32, message = "bqk,bkd->bqd"}> : () -> ()
    %cst_33 = arith.constant dense<0.000000e+00> : vector<2x8x16xf32>
    %84 = tpu.matmul %83, %68, %cst_33 {dimension_numbers = #tpu.dot_dimension_numbers<[2], [1], [1], [2], [0, 0, 0, 1, 1, 2], [0], [0]>} : vector<2x8x8xf32>, vector<2x8x16xf32>, vector<2x8x16xf32> -> vector<2x8x16xf32>
    "tpu.trace_stop"() : () -> ()
    %85 = vector.shape_cast %84 : vector<2x8x16xf32> to vector<16x16xf32>
    %86 = vector.extract_strided_slice %37 {offsets = [16, 0], sizes = [16, 32], strides = [1, 1]} : vector<32x32xf32> to vector<16x32xf32>
    %cst_34 = arith.constant dense<0.000000e+00> : vector<16x32xf32>
    %87 = tpu.matmul %85, %86, %cst_34 {dimension_numbers = #tpu.dot_dimension_numbers<[1], [0], [0], [1], [0, 0, 1, 1], [], []>} : vector<16x16xf32>, vector<16x32xf32>, vector<16x32xf32> -> vector<16x32xf32>
    %88 = arith.addf %62, %87 : vector<16x32xf32>
    %c0_35 = arith.constant 0 : index
    %c0_36 = arith.constant 0 : index
    %c0_37 = arith.constant 0 : index
    %89 = vector.load %arg7[%c0_35, %c0_36, %c0_37] : memref<2x1x32xf32, #tpu.memory_space<vmem>>, vector<1x1x32xf32>
    %90 = vector.shape_cast %89 : vector<1x1x32xf32> to vector<1x32xf32>
    %91 = vector.broadcast %90 : vector<1x32xf32> to vector<16x32xf32>
    %92 = arith.addf %88, %91 : vector<16x32xf32>
    %93 = arith.addf %92, %22 : vector<16x32xf32>
    %c0_38 = arith.constant 0 : index
    %c0_39 = arith.constant 0 : index
    %c0_40 = arith.constant 0 : index
    %94 = vector.load %arg8[%c0_38, %c0_39, %c0_40] : memref<2x1x32xf32, #tpu.memory_space<vmem>>, vector<1x1x32xf32>
    %95 = vector.shape_cast %94 : vector<1x1x32xf32> to vector<1x32xf32>
    %c0_41 = arith.constant 0 : index
    %c0_42 = arith.constant 0 : index
    %c0_43 = arith.constant 0 : index
    %96 = vector.load %arg9[%c0_41, %c0_42, %c0_43] : memref<2x1x32xf32, #tpu.memory_space<vmem>>, vector<1x1x32xf32>
    %97 = vector.shape_cast %96 : vector<1x1x32xf32> to vector<1x32xf32>
    %cst_44 = arith.constant dense<0.000000e+00> : vector<16xf32>
    %98 = vector.multi_reduction <add>, %93, %cst_44 [1] : vector<16x32xf32> to vector<16xf32>
    %99 = vector.shape_cast %98 : vector<16xf32> to vector<16x1xf32>
    %cst_45 = arith.constant 3.200000e+01 : f32
    %100 = vector.broadcast %cst_45 : f32 to vector<16x1xf32>
    %101 = arith.divf %99, %100 : vector<16x1xf32>
    %102 = vector.broadcast %101 : vector<16x1xf32> to vector<16x32xf32>
    %103 = arith.subf %93, %102 : vector<16x32xf32>
    %104 = arith.mulf %103, %103 : vector<16x32xf32>
    %cst_46 = arith.constant dense<0.000000e+00> : vector<16xf32>
    %105 = vector.multi_reduction <add>, %104, %cst_46 [1] : vector<16x32xf32> to vector<16xf32>
    %106 = vector.shape_cast %105 : vector<16xf32> to vector<16x1xf32>
    %cst_47 = arith.constant 3.200000e+01 : f32
    %107 = vector.broadcast %cst_47 : f32 to vector<16x1xf32>
    %108 = arith.divf %106, %107 : vector<16x1xf32>
    %cst_48 = arith.constant 9.99999996E-13 : f32
    %109 = vector.broadcast %cst_48 : f32 to vector<16x1xf32>
    %110 = arith.addf %108, %109 : vector<16x1xf32>
    %111 = math.rsqrt %110 : vector<16x1xf32>
    %112 = vector.broadcast %111 : vector<16x1xf32> to vector<16x32xf32>
    %113 = arith.mulf %103, %112 : vector<16x32xf32>
    %114 = vector.broadcast %95 : vector<1x32xf32> to vector<16x32xf32>
    %115 = arith.mulf %113, %114 : vector<16x32xf32>
    %116 = vector.broadcast %97 : vector<1x32xf32> to vector<16x32xf32>
    %117 = arith.addf %115, %116 : vector<16x32xf32>
    %c0_49 = arith.constant 0 : index
    %c0_50 = arith.constant 0 : index
    %c0_51 = arith.constant 0 : index
    %118 = vector.load %arg10[%c0_49, %c0_50, %c0_51] : memref<2x32x64xf32, #tpu.memory_space<vmem>>, vector<1x32x64xf32>
    %119 = vector.shape_cast %118 : vector<1x32x64xf32> to vector<32x64xf32>
    %cst_52 = arith.constant dense<0.000000e+00> : vector<16x64xf32>
    %120 = tpu.matmul %117, %119, %cst_52 {dimension_numbers = #tpu.dot_dimension_numbers<[1], [0], [0], [1], [0, 0, 1, 1], [], []>} : vector<16x32xf32>, vector<32x64xf32>, vector<16x64xf32> -> vector<16x64xf32>
    %c0_53 = arith.constant 0 : index
    %c0_54 = arith.constant 0 : index
    %c0_55 = arith.constant 0 : index
    %121 = vector.load %arg11[%c0_53, %c0_54, %c0_55] : memref<2x1x64xf32, #tpu.memory_space<vmem>>, vector<1x1x64xf32>
    %122 = vector.shape_cast %121 : vector<1x1x64xf32> to vector<1x64xf32>
    %123 = vector.broadcast %122 : vector<1x64xf32> to vector<16x64xf32>
    %124 = arith.addf %120, %123 : vector<16x64xf32>
    %cst_56 = arith.constant 5.000000e-01 : f32
    %125 = vector.broadcast %cst_56 : f32 to vector<16x64xf32>
    %126 = arith.mulf %125, %124 : vector<16x64xf32>
    %cst_57 = arith.constant 4.471500e-02 : f32
    %127 = vector.broadcast %cst_57 : f32 to vector<16x64xf32>
    %128 = arith.mulf %127, %124 : vector<16x64xf32>
    %129 = arith.mulf %128, %124 : vector<16x64xf32>
    %130 = arith.mulf %129, %124 : vector<16x64xf32>
    %131 = arith.addf %124, %130 : vector<16x64xf32>
    %cst_58 = arith.constant 0.797884583 : f32
    %132 = vector.broadcast %cst_58 : f32 to vector<16x64xf32>
    %133 = arith.mulf %132, %131 : vector<16x64xf32>
    %134 = math.tanh %133 : vector<16x64xf32>
    %cst_59 = arith.constant 1.000000e+00 : f32
    %135 = vector.broadcast %cst_59 : f32 to vector<16x64xf32>
    %136 = arith.addf %135, %134 : vector<16x64xf32>
    %137 = arith.mulf %126, %136 : vector<16x64xf32>
    %c0_60 = arith.constant 0 : index
    %c0_61 = arith.constant 0 : index
    %c0_62 = arith.constant 0 : index
    %138 = vector.load %arg12[%c0_60, %c0_61, %c0_62] : memref<2x64x32xf32, #tpu.memory_space<vmem>>, vector<1x64x32xf32>
    %139 = vector.shape_cast %138 : vector<1x64x32xf32> to vector<64x32xf32>
    %cst_63 = arith.constant dense<0.000000e+00> : vector<16x32xf32>
    %140 = tpu.matmul %137, %139, %cst_63 {dimension_numbers = #tpu.dot_dimension_numbers<[1], [0], [0], [1], [0, 0, 1, 1], [], []>} : vector<16x64xf32>, vector<64x32xf32>, vector<16x32xf32> -> vector<16x32xf32>
    %c0_64 = arith.constant 0 : index
    %c0_65 = arith.constant 0 : index
    %c0_66 = arith.constant 0 : index
    %141 = vector.load %arg13[%c0_64, %c0_65, %c0_66] : memref<2x1x32xf32, #tpu.memory_space<vmem>>, vector<1x1x32xf32>
    %142 = vector.shape_cast %141 : vector<1x1x32xf32> to vector<1x32xf32>
    %143 = vector.broadcast %142 : vector<1x32xf32> to vector<16x32xf32>
    %144 = arith.addf %140, %143 : vector<16x32xf32>
    %145 = arith.addf %144, %117 : vector<16x32xf32>
    %c0_67 = arith.constant 0 : index
    %c0_68 = arith.constant 0 : index
    %c0_69 = arith.constant 0 : index
    %146 = vector.load %arg14[%c0_67, %c0_68, %c0_69] : memref<2x1x32xf32, #tpu.memory_space<vmem>>, vector<1x1x32xf32>
    %147 = vector.shape_cast %146 : vector<1x1x32xf32> to vector<1x32xf32>
    %c0_70 = arith.constant 0 : index
    %c0_71 = arith.constant 0 : index
    %c0_72 = arith.constant 0 : index
    %148 = vector.load %arg15[%c0_70, %c0_71, %c0_72] : memref<2x1x32xf32, #tpu.memory_space<vmem>>, vector<1x1x32xf32>
    %149 = vector.shape_cast %148 : vector<1x1x32xf32> to vector<1x32xf32>
    %cst_73 = arith.constant dense<0.000000e+00> : vector<16xf32>
    %150 = vector.multi_reduction <add>, %145, %cst_73 [1] : vector<16x32xf32> to vector<16xf32>
    %151 = vector.shape_cast %150 : vector<16xf32> to vector<16x1xf32>
    %cst_74 = arith.constant 3.200000e+01 : f32
    %152 = vector.broadcast %cst_74 : f32 to vector<16x1xf32>
    %153 = arith.divf %151, %152 : vector<16x1xf32>
    %154 = vector.broadcast %153 : vector<16x1xf32> to vector<16x32xf32>
    %155 = arith.subf %145, %154 : vector<16x32xf32>
    %156 = arith.mulf %155, %155 : vector<16x32xf32>
    %cst_75 = arith.constant dense<0.000000e+00> : vector<16xf32>
    %157 = vector.multi_reduction <add>, %156, %cst_75 [1] : vector<16x32xf32> to vector<16xf32>
    %158 = vector.shape_cast %157 : vector<16xf32> to vector<16x1xf32>
    %cst_76 = arith.constant 3.200000e+01 : f32
    %159 = vector.broadcast %cst_76 : f32 to vector<16x1xf32>
    %160 = arith.divf %158, %159 : vector<16x1xf32>
    %cst_77 = arith.constant 9.99999996E-13 : f32
    %161 = vector.broadcast %cst_77 : f32 to vector<16x1xf32>
    %162 = arith.addf %160, %161 : vector<16x1xf32>
    %163 = math.rsqrt %162 : vector<16x1xf32>
    %164 = vector.broadcast %163 : vector<16x1xf32> to vector<16x32xf32>
    %165 = arith.mulf %155, %164 : vector<16x32xf32>
    %166 = vector.broadcast %147 : vector<1x32xf32> to vector<16x32xf32>
    %167 = arith.mulf %165, %166 : vector<16x32xf32>
    %168 = vector.broadcast %149 : vector<1x32xf32> to vector<16x32xf32>
    %169 = arith.addf %167, %168 : vector<16x32xf32>
    %c1 = arith.constant 1 : index
    %c0_78 = arith.constant 0 : index
    %c0_79 = arith.constant 0 : index
    %170 = vector.load %arg4[%c1, %c0_78, %c0_79] : memref<2x32x96xf32, #tpu.memory_space<vmem>>, vector<1x32x96xf32>
    %171 = vector.shape_cast %170 : vector<1x32x96xf32> to vector<32x96xf32>
    %cst_80 = arith.constant dense<0.000000e+00> : vector<16x96xf32>
    %172 = tpu.matmul %169, %171, %cst_80 {dimension_numbers = #tpu.dot_dimension_numbers<[1], [0], [0], [1], [0, 0, 1, 1], [], []>} : vector<16x32xf32>, vector<32x96xf32>, vector<16x96xf32> -> vector<16x96xf32>
    %c1_81 = arith.constant 1 : index
    %c0_82 = arith.constant 0 : index
    %c0_83 = arith.constant 0 : index
    %173 = vector.load %arg5[%c1_81, %c0_82, %c0_83] : memref<2x1x96xf32, #tpu.memory_space<vmem>>, vector<1x1x96xf32>
    %174 = vector.shape_cast %173 : vector<1x1x96xf32> to vector<1x96xf32>
    %175 = vector.broadcast %174 : vector<1x96xf32> to vector<16x96xf32>
    %176 = arith.addf %172, %175 : vector<16x96xf32>
    %c1_84 = arith.constant 1 : index
    %c0_85 = arith.constant 0 : index
    %c0_86 = arith.constant 0 : index
    %177 = vector.load %arg6[%c1_84, %c0_85, %c0_86] : memref<2x32x32xf32, #tpu.memory_space<vmem>>, vector<1x32x32xf32>
    %178 = vector.shape_cast %177 : vector<1x32x32xf32> to vector<32x32xf32>
    %179 = vector.extract_strided_slice %176 {offsets = [0, 0], sizes = [16, 16], strides = [1, 1]} : vector<16x96xf32> to vector<16x16xf32>
    %180 = vector.shape_cast %179 : vector<16x16xf32> to vector<2x8x16xf32>
    %181 = vector.extract_strided_slice %176 {offsets = [0, 32], sizes = [16, 16], strides = [1, 1]} : vector<16x96xf32> to vector<16x16xf32>
    %182 = vector.shape_cast %181 : vector<16x16xf32> to vector<2x8x16xf32>
    %183 = vector.extract_strided_slice %176 {offsets = [0, 64], sizes = [16, 16], strides = [1, 1]} : vector<16x96xf32> to vector<16x16xf32>
    %184 = vector.shape_cast %183 : vector<16x16xf32> to vector<2x8x16xf32>
    "tpu.trace_start"() <{level = 10 : i32, message = "bqd,bkd->bqk"}> : () -> ()
    %cst_87 = arith.constant dense<0.000000e+00> : vector<2x8x8xf32>
    %185 = tpu.matmul %180, %182, %cst_87 {dimension_numbers = #tpu.dot_dimension_numbers<[2], [2], [1], [1], [0, 0, 0, 1, 1, 1], [0], [0]>} : vector<2x8x16xf32>, vector<2x8x16xf32>, vector<2x8x8xf32> -> vector<2x8x8xf32>
    "tpu.trace_stop"() : () -> ()
    %cst_88 = arith.constant 2.500000e-01 : f32
    %186 = vector.broadcast %cst_88 : f32 to vector<2x8x8xf32>
    %187 = arith.mulf %185, %186 : vector<2x8x8xf32>
    %188 = vector.broadcast %28 : vector<2x1x8xf32> to vector<2x8x8xf32>
    %189 = arith.addf %187, %188 : vector<2x8x8xf32>
    %cst_89 = arith.constant dense<0xFF800000> : vector<2x8xf32>
    %190 = vector.multi_reduction <maximumf>, %189, %cst_89 [2] : vector<2x8x8xf32> to vector<2x8xf32>
    %191 = vector.shape_cast %190 : vector<2x8xf32> to vector<2x8x1xf32>
    %192 = vector.broadcast %191 : vector<2x8x1xf32> to vector<2x8x8xf32>
    %193 = arith.subf %189, %192 : vector<2x8x8xf32>
    %194 = math.exp %193 : vector<2x8x8xf32>
    %cst_90 = arith.constant dense<0.000000e+00> : vector<2x8xf32>
    %195 = vector.multi_reduction <add>, %194, %cst_90 [2] : vector<2x8x8xf32> to vector<2x8xf32>
    %196 = vector.shape_cast %195 : vector<2x8xf32> to vector<2x8x1xf32>
    %197 = tpu.reciprocal %196 {approx = true} : vector<2x8x1xf32> -> vector<2x8x1xf32>
    %198 = vector.broadcast %197 : vector<2x8x1xf32> to vector<2x8x8xf32>
    %199 = arith.mulf %194, %198 : vector<2x8x8xf32>
    "tpu.trace_start"() <{level = 10 : i32, message = "bqk,bkd->bqd"}> : () -> ()
    %cst_91 = arith.constant dense<0.000000e+00> : vector<2x8x16xf32>
    %200 = tpu.matmul %199, %184, %cst_91 {dimension_numbers = #tpu.dot_dimension_numbers<[2], [1], [1], [2], [0, 0, 0, 1, 1, 2], [0], [0]>} : vector<2x8x8xf32>, vector<2x8x16xf32>, vector<2x8x16xf32> -> vector<2x8x16xf32>
    "tpu.trace_stop"() : () -> ()
    %201 = vector.shape_cast %200 : vector<2x8x16xf32> to vector<16x16xf32>
    %202 = vector.extract_strided_slice %178 {offsets = [0, 0], sizes = [16, 32], strides = [1, 1]} : vector<32x32xf32> to vector<16x32xf32>
    %cst_92 = arith.constant dense<0.000000e+00> : vector<16x32xf32>
    %203 = tpu.matmul %201, %202, %cst_92 {dimension_numbers = #tpu.dot_dimension_numbers<[1], [0], [0], [1], [0, 0, 1, 1], [], []>} : vector<16x16xf32>, vector<16x32xf32>, vector<16x32xf32> -> vector<16x32xf32>
    %204 = vector.extract_strided_slice %176 {offsets = [0, 16], sizes = [16, 16], strides = [1, 1]} : vector<16x96xf32> to vector<16x16xf32>
    %205 = vector.shape_cast %204 : vector<16x16xf32> to vector<2x8x16xf32>
    %206 = vector.extract_strided_slice %176 {offsets = [0, 48], sizes = [16, 16], strides = [1, 1]} : vector<16x96xf32> to vector<16x16xf32>
    %207 = vector.shape_cast %206 : vector<16x16xf32> to vector<2x8x16xf32>
    %208 = vector.extract_strided_slice %176 {offsets = [0, 80], sizes = [16, 16], strides = [1, 1]} : vector<16x96xf32> to vector<16x16xf32>
    %209 = vector.shape_cast %208 : vector<16x16xf32> to vector<2x8x16xf32>
    "tpu.trace_start"() <{level = 10 : i32, message = "bqd,bkd->bqk"}> : () -> ()
    %cst_93 = arith.constant dense<0.000000e+00> : vector<2x8x8xf32>
    %210 = tpu.matmul %205, %207, %cst_93 {dimension_numbers = #tpu.dot_dimension_numbers<[2], [2], [1], [1], [0, 0, 0, 1, 1, 1], [0], [0]>} : vector<2x8x16xf32>, vector<2x8x16xf32>, vector<2x8x8xf32> -> vector<2x8x8xf32>
    "tpu.trace_stop"() : () -> ()
    %cst_94 = arith.constant 2.500000e-01 : f32
    %211 = vector.broadcast %cst_94 : f32 to vector<2x8x8xf32>
    %212 = arith.mulf %210, %211 : vector<2x8x8xf32>
    %213 = vector.broadcast %28 : vector<2x1x8xf32> to vector<2x8x8xf32>
    %214 = arith.addf %212, %213 : vector<2x8x8xf32>
    %cst_95 = arith.constant dense<0xFF800000> : vector<2x8xf32>
    %215 = vector.multi_reduction <maximumf>, %214, %cst_95 [2] : vector<2x8x8xf32> to vector<2x8xf32>
    %216 = vector.shape_cast %215 : vector<2x8xf32> to vector<2x8x1xf32>
    %217 = vector.broadcast %216 : vector<2x8x1xf32> to vector<2x8x8xf32>
    %218 = arith.subf %214, %217 : vector<2x8x8xf32>
    %219 = math.exp %218 : vector<2x8x8xf32>
    %cst_96 = arith.constant dense<0.000000e+00> : vector<2x8xf32>
    %220 = vector.multi_reduction <add>, %219, %cst_96 [2] : vector<2x8x8xf32> to vector<2x8xf32>
    %221 = vector.shape_cast %220 : vector<2x8xf32> to vector<2x8x1xf32>
    %222 = tpu.reciprocal %221 {approx = true} : vector<2x8x1xf32> -> vector<2x8x1xf32>
    %223 = vector.broadcast %222 : vector<2x8x1xf32> to vector<2x8x8xf32>
    %224 = arith.mulf %219, %223 : vector<2x8x8xf32>
    "tpu.trace_start"() <{level = 10 : i32, message = "bqk,bkd->bqd"}> : () -> ()
    %cst_97 = arith.constant dense<0.000000e+00> : vector<2x8x16xf32>
    %225 = tpu.matmul %224, %209, %cst_97 {dimension_numbers = #tpu.dot_dimension_numbers<[2], [1], [1], [2], [0, 0, 0, 1, 1, 2], [0], [0]>} : vector<2x8x8xf32>, vector<2x8x16xf32>, vector<2x8x16xf32> -> vector<2x8x16xf32>
    "tpu.trace_stop"() : () -> ()
    %226 = vector.shape_cast %225 : vector<2x8x16xf32> to vector<16x16xf32>
    %227 = vector.extract_strided_slice %178 {offsets = [16, 0], sizes = [16, 32], strides = [1, 1]} : vector<32x32xf32> to vector<16x32xf32>
    %cst_98 = arith.constant dense<0.000000e+00> : vector<16x32xf32>
    %228 = tpu.matmul %226, %227, %cst_98 {dimension_numbers = #tpu.dot_dimension_numbers<[1], [0], [0], [1], [0, 0, 1, 1], [], []>} : vector<16x16xf32>, vector<16x32xf32>, vector<16x32xf32> -> vector<16x32xf32>
    %229 = arith.addf %203, %228 : vector<16x32xf32>
    %c1_99 = arith.constant 1 : index
    %c0_100 = arith.constant 0 : index
    %c0_101 = arith.constant 0 : index
    %230 = vector.load %arg7[%c1_99, %c0_100, %c0_101] : memref<2x1x32xf32, #tpu.memory_space<vmem>>, vector<1x1x32xf32>
    %231 = vector.shape_cast %230 : vector<1x1x32xf32> to vector<1x32xf32>
    %232 = vector.broadcast %231 : vector<1x32xf32> to vector<16x32xf32>
    %233 = arith.addf %229, %232 : vector<16x32xf32>
    %234 = arith.addf %233, %169 : vector<16x32xf32>
    %c1_102 = arith.constant 1 : index
    %c0_103 = arith.constant 0 : index
    %c0_104 = arith.constant 0 : index
    %235 = vector.load %arg8[%c1_102, %c0_103, %c0_104] : memref<2x1x32xf32, #tpu.memory_space<vmem>>, vector<1x1x32xf32>
    %236 = vector.shape_cast %235 : vector<1x1x32xf32> to vector<1x32xf32>
    %c1_105 = arith.constant 1 : index
    %c0_106 = arith.constant 0 : index
    %c0_107 = arith.constant 0 : index
    %237 = vector.load %arg9[%c1_105, %c0_106, %c0_107] : memref<2x1x32xf32, #tpu.memory_space<vmem>>, vector<1x1x32xf32>
    %238 = vector.shape_cast %237 : vector<1x1x32xf32> to vector<1x32xf32>
    %cst_108 = arith.constant dense<0.000000e+00> : vector<16xf32>
    %239 = vector.multi_reduction <add>, %234, %cst_108 [1] : vector<16x32xf32> to vector<16xf32>
    %240 = vector.shape_cast %239 : vector<16xf32> to vector<16x1xf32>
    %cst_109 = arith.constant 3.200000e+01 : f32
    %241 = vector.broadcast %cst_109 : f32 to vector<16x1xf32>
    %242 = arith.divf %240, %241 : vector<16x1xf32>
    %243 = vector.broadcast %242 : vector<16x1xf32> to vector<16x32xf32>
    %244 = arith.subf %234, %243 : vector<16x32xf32>
    %245 = arith.mulf %244, %244 : vector<16x32xf32>
    %cst_110 = arith.constant dense<0.000000e+00> : vector<16xf32>
    %246 = vector.multi_reduction <add>, %245, %cst_110 [1] : vector<16x32xf32> to vector<16xf32>
    %247 = vector.shape_cast %246 : vector<16xf32> to vector<16x1xf32>
    %cst_111 = arith.constant 3.200000e+01 : f32
    %248 = vector.broadcast %cst_111 : f32 to vector<16x1xf32>
    %249 = arith.divf %247, %248 : vector<16x1xf32>
    %cst_112 = arith.constant 9.99999996E-13 : f32
    %250 = vector.broadcast %cst_112 : f32 to vector<16x1xf32>
    %251 = arith.addf %249, %250 : vector<16x1xf32>
    %252 = math.rsqrt %251 : vector<16x1xf32>
    %253 = vector.broadcast %252 : vector<16x1xf32> to vector<16x32xf32>
    %254 = arith.mulf %244, %253 : vector<16x32xf32>
    %255 = vector.broadcast %236 : vector<1x32xf32> to vector<16x32xf32>
    %256 = arith.mulf %254, %255 : vector<16x32xf32>
    %257 = vector.broadcast %238 : vector<1x32xf32> to vector<16x32xf32>
    %258 = arith.addf %256, %257 : vector<16x32xf32>
    %c1_113 = arith.constant 1 : index
    %c0_114 = arith.constant 0 : index
    %c0_115 = arith.constant 0 : index
    %259 = vector.load %arg10[%c1_113, %c0_114, %c0_115] : memref<2x32x64xf32, #tpu.memory_space<vmem>>, vector<1x32x64xf32>
    %260 = vector.shape_cast %259 : vector<1x32x64xf32> to vector<32x64xf32>
    %cst_116 = arith.constant dense<0.000000e+00> : vector<16x64xf32>
    %261 = tpu.matmul %258, %260, %cst_116 {dimension_numbers = #tpu.dot_dimension_numbers<[1], [0], [0], [1], [0, 0, 1, 1], [], []>} : vector<16x32xf32>, vector<32x64xf32>, vector<16x64xf32> -> vector<16x64xf32>
    %c1_117 = arith.constant 1 : index
    %c0_118 = arith.constant 0 : index
    %c0_119 = arith.constant 0 : index
    %262 = vector.load %arg11[%c1_117, %c0_118, %c0_119] : memref<2x1x64xf32, #tpu.memory_space<vmem>>, vector<1x1x64xf32>
    %263 = vector.shape_cast %262 : vector<1x1x64xf32> to vector<1x64xf32>
    %264 = vector.broadcast %263 : vector<1x64xf32> to vector<16x64xf32>
    %265 = arith.addf %261, %264 : vector<16x64xf32>
    %cst_120 = arith.constant 5.000000e-01 : f32
    %266 = vector.broadcast %cst_120 : f32 to vector<16x64xf32>
    %267 = arith.mulf %266, %265 : vector<16x64xf32>
    %cst_121 = arith.constant 4.471500e-02 : f32
    %268 = vector.broadcast %cst_121 : f32 to vector<16x64xf32>
    %269 = arith.mulf %268, %265 : vector<16x64xf32>
    %270 = arith.mulf %269, %265 : vector<16x64xf32>
    %271 = arith.mulf %270, %265 : vector<16x64xf32>
    %272 = arith.addf %265, %271 : vector<16x64xf32>
    %cst_122 = arith.constant 0.797884583 : f32
    %273 = vector.broadcast %cst_122 : f32 to vector<16x64xf32>
    %274 = arith.mulf %273, %272 : vector<16x64xf32>
    %275 = math.tanh %274 : vector<16x64xf32>
    %cst_123 = arith.constant 1.000000e+00 : f32
    %276 = vector.broadcast %cst_123 : f32 to vector<16x64xf32>
    %277 = arith.addf %276, %275 : vector<16x64xf32>
    %278 = arith.mulf %267, %277 : vector<16x64xf32>
    %c1_124 = arith.constant 1 : index
    %c0_125 = arith.constant 0 : index
    %c0_126 = arith.constant 0 : index
    %279 = vector.load %arg12[%c1_124, %c0_125, %c0_126] : memref<2x64x32xf32, #tpu.memory_space<vmem>>, vector<1x64x32xf32>
    %280 = vector.shape_cast %279 : vector<1x64x32xf32> to vector<64x32xf32>
    %cst_127 = arith.constant dense<0.000000e+00> : vector<16x32xf32>
    %281 = tpu.matmul %278, %280, %cst_127 {dimension_numbers = #tpu.dot_dimension_numbers<[1], [0], [0], [1], [0, 0, 1, 1], [], []>} : vector<16x64xf32>, vector<64x32xf32>, vector<16x32xf32> -> vector<16x32xf32>
    %c1_128 = arith.constant 1 : index
    %c0_129 = arith.constant 0 : index
    %c0_130 = arith.constant 0 : index
    %282 = vector.load %arg13[%c1_128, %c0_129, %c0_130] : memref<2x1x32xf32, #tpu.memory_space<vmem>>, vector<1x1x32xf32>
    %283 = vector.shape_cast %282 : vector<1x1x32xf32> to vector<1x32xf32>
    %284 = vector.broadcast %283 : vector<1x32xf32> to vector<16x32xf32>
    %285 = arith.addf %281, %284 : vector<16x32xf32>
    %286 = arith.addf %285, %258 : vector<16x32xf32>
    %c1_131 = arith.constant 1 : index
    %c0_132 = arith.constant 0 : index
    %c0_133 = arith.constant 0 : index
    %287 = vector.load %arg14[%c1_131, %c0_132, %c0_133] : memref<2x1x32xf32, #tpu.memory_space<vmem>>, vector<1x1x32xf32>
    %288 = vector.shape_cast %287 : vector<1x1x32xf32> to vector<1x32xf32>
    %c1_134 = arith.constant 1 : index
    %c0_135 = arith.constant 0 : index
    %c0_136 = arith.constant 0 : index
    %289 = vector.load %arg15[%c1_134, %c0_135, %c0_136] : memref<2x1x32xf32, #tpu.memory_space<vmem>>, vector<1x1x32xf32>
    %290 = vector.shape_cast %289 : vector<1x1x32xf32> to vector<1x32xf32>
    %cst_137 = arith.constant dense<0.000000e+00> : vector<16xf32>
    %291 = vector.multi_reduction <add>, %286, %cst_137 [1] : vector<16x32xf32> to vector<16xf32>
    %292 = vector.shape_cast %291 : vector<16xf32> to vector<16x1xf32>
    %cst_138 = arith.constant 3.200000e+01 : f32
    %293 = vector.broadcast %cst_138 : f32 to vector<16x1xf32>
    %294 = arith.divf %292, %293 : vector<16x1xf32>
    %295 = vector.broadcast %294 : vector<16x1xf32> to vector<16x32xf32>
    %296 = arith.subf %286, %295 : vector<16x32xf32>
    %297 = arith.mulf %296, %296 : vector<16x32xf32>
    %cst_139 = arith.constant dense<0.000000e+00> : vector<16xf32>
    %298 = vector.multi_reduction <add>, %297, %cst_139 [1] : vector<16x32xf32> to vector<16xf32>
    %299 = vector.shape_cast %298 : vector<16xf32> to vector<16x1xf32>
    %cst_140 = arith.constant 3.200000e+01 : f32
    %300 = vector.broadcast %cst_140 : f32 to vector<16x1xf32>
    %301 = arith.divf %299, %300 : vector<16x1xf32>
    %cst_141 = arith.constant 9.99999996E-13 : f32
    %302 = vector.broadcast %cst_141 : f32 to vector<16x1xf32>
    %303 = arith.addf %301, %302 : vector<16x1xf32>
    %304 = math.rsqrt %303 : vector<16x1xf32>
    %305 = vector.broadcast %304 : vector<16x1xf32> to vector<16x32xf32>
    %306 = arith.mulf %296, %305 : vector<16x32xf32>
    %307 = vector.broadcast %288 : vector<1x32xf32> to vector<16x32xf32>
    %308 = arith.mulf %306, %307 : vector<16x32xf32>
    %309 = vector.broadcast %290 : vector<1x32xf32> to vector<16x32xf32>
    %310 = arith.addf %308, %309 : vector<16x32xf32>
    %311 = vector.extract_strided_slice %310 {offsets = [0, 0], sizes = [1, 32], strides = [1, 1]} : vector<16x32xf32> to vector<1x32xf32>
    %312 = vector.extract_strided_slice %310 {offsets = [8, 0], sizes = [1, 32], strides = [1, 1]} : vector<16x32xf32> to vector<1x32xf32>
    %313 = tpu.concatenate %311, %312 in 0 : vector<1x32xf32>, vector<1x32xf32> -> vector<2x32xf32>
    %c0_142 = arith.constant 0 : index
    %c0_143 = arith.constant 0 : index
    %314 = vector.load %arg16[%c0_142, %c0_143] : memref<32x128xf32, #tpu.memory_space<vmem>>, vector<32x128xf32>
    %cst_144 = arith.constant dense<0.000000e+00> : vector<2x128xf32>
    %315 = tpu.matmul %313, %314, %cst_144 {dimension_numbers = #tpu.dot_dimension_numbers<[1], [0], [0], [1], [0, 0, 1, 1], [], []>} : vector<2x32xf32>, vector<32x128xf32>, vector<2x128xf32> -> vector<2x128xf32>
    %c0_145 = arith.constant 0 : index
    %c0_146 = arith.constant 0 : index
    %316 = vector.load %arg17[%c0_145, %c0_146] : memref<1x128xf32, #tpu.memory_space<vmem>>, vector<1x128xf32>
    %317 = vector.broadcast %316 : vector<1x128xf32> to vector<2x128xf32>
    %318 = arith.addf %315, %317 : vector<2x128xf32>
    %cst_147 = arith.constant 0.000000e+00 : f32
    %319 = vector.broadcast %cst_147 : f32 to vector<2x128xf32>
    %320 = arith.subf %319, %318 : vector<2x128xf32>
    %321 = math.exp %320 : vector<2x128xf32>
    %cst_148 = arith.constant 1.000000e+00 : f32
    %322 = vector.broadcast %cst_148 : f32 to vector<2x128xf32>
    %323 = arith.addf %322, %321 : vector<2x128xf32>
    %324 = tpu.reciprocal %323 {approx = true} : vector<2x128xf32> -> vector<2x128xf32>
    %c0_149 = arith.constant 0 : index
    %c0_150 = arith.constant 0 : index
    %325 = vector.load %arg18[%c0_149, %c0_150] : memref<2x128xf32, #tpu.memory_space<vmem>>, vector<2x128xf32>
    tpu.vector_store %arg18[%c0_149, %c0_150], %324 {strides = array<i32>} : memref<2x128xf32, #tpu.memory_space<vmem>>, vector<2x128xf32>,
    return
  }
}

</mosaic_0001>

<llo_original>
// kernel: bert_classifier_forward.1
$region0: #{bert_classifier_forward.1}
  #allocation0 [shape = 'u32[]', space=smem, size = 0x4, offset = 0x4, fixed_abs, tag = 'smem constant byte address 0x4 - core index']
  #allocation1 [shape = 'u32[144,128]{1,0:T(1,128)}', space=vmem, size = 0x12000, scoped, tag = 'internal scratch']
  %s0 = inlined_call_operand.vmem [shape: f32[16,32], index: 0, kind: input, shape index: {}]
  %s1 = inlined_call_operand.vmem [shape: f32[2,8], index: 1, kind: input, shape index: {}]
  %s2 = inlined_call_operand.vmem [shape: f32[1,32], index: 2, kind: input, shape index: {}]
  %s3 = inlined_call_operand.vmem [shape: f32[1,32], index: 3, kind: input, shape index: {}]
  %s4 = inlined_call_operand.vmem [shape: f32[2,32,96], index: 4, kind: input, shape index: {}]
  %s5 = inlined_call_operand.vmem [shape: f32[2,1,96], index: 5, kind: input, shape index: {}]
  %s6 = inlined_call_operand.hbm [shape: f32[2,32,32], index: 6, kind: input, shape index: {}]
  %s7 = inlined_call_operand.vmem [shape: f32[2,1,32], index: 7, kind: input, shape index: {}, may-alias: {7,9,13,15}]
  %s8 = inlined_call_operand.vmem [shape: f32[2,1,32], index: 8, kind: input, shape index: {}, may-alias: {8,14}]
  %s9 = inlined_call_operand.vmem [shape: f32[2,1,32], index: 9, kind: input, shape index: {}, may-alias: {7,9,13,15}]
  %s10 = inlined_call_operand.hbm [shape: f32[2,32,64], index: 10, kind: input, shape index: {}]
  %s11 = inlined_call_operand.vmem [shape: f32[2,1,64], index: 11, kind: input, shape index: {}]
  %s12 = inlined_call_operand.vmem [shape: f32[2,64,32], index: 12, kind: input, shape index: {}]
  %s13 = inlined_call_operand.vmem [shape: f32[2,1,32], index: 13, kind: input, shape index: {}, may-alias: {7,9,13,15}]
  %s14 = inlined_call_operand.vmem [shape: f32[2,1,32], index: 14, kind: input, shape index: {}, may-alias: {8,14}]
  %s15 = inlined_call_operand.vmem [shape: f32[2,1,32], index: 15, kind: input, shape index: {}, may-alias: {7,9,13,15}]
  %s16 = inlined_call_operand.vmem [shape: f32[32,128], index: 16, kind: input, shape index: {}]
  %s17 = inlined_call_operand.vmem [shape: f32[1,128], index: 17, kind: input, shape index: {}]
  %s18 = inlined_call_operand.vmem [shape: f32[2,128], index: 18, kind: output, shape index: {}]
  %s19 = sld [smem:[#allocation0]]
  $region90: #{bert_classifier_forward.1} parent=0
    _
  %s21 = ssub.s32 1, %s19
  %s22 = scalar_select 0, %s21, %s19
  $region1: #{bert_classifier_forward.1} parent=0
    #allocation2 [shape = 'u8[32768]{0}', space=vmem, size = 0x8000, scoped, tag = 'input window, operand 6, single buffered']
    #allocation3 [shape = 's32[1]{0}', space=sflag, size = 0x4, scoped, tag = 'scoped memory for bert_classifier_forward.1']
    #allocation4 [shape = 'u8[32768]{0}', space=vmem, size = 0x8000, scoped, tag = 'input window, operand 10, single buffered']
    #allocation5 [shape = 's32[1]{0}', space=sflag, size = 0x4, scoped, tag = 'scoped memory for bert_classifier_forward.1']
    %23 = vsyncpa [#allocation3], 0
    %24 = vsyncpa [#allocation5], 0
    // Predicated region
    $region2: #{bert_classifier_forward.1} parent=1 // pred_check
      _
    $region3: #{bert_classifier_forward.1} parent=1 // pred_check_branch
      %26 = sbr.rel (0) target = $region5
    $region4: #{bert_classifier_forward.1} parent=1 // pred_region
      _
    $region5: #{bert_classifier_forward.1} parent=1 // pred_fallthru
      _
    // Predicated region
    $region6: #{bert_classifier_forward.1} parent=1 // pred_check
      _
    $region7: #{bert_classifier_forward.1} parent=1 // pred_check_branch
      %28 = sbr.rel (0) target = $region9
    $region8: #{bert_classifier_forward.1} parent=1 // pred_region
      _
    $region9: #{bert_classifier_forward.1} parent=1 // pred_fallthru
      _
    // Predicated region
    $region10: #{bert_classifier_forward.1} parent=1 // pred_check
      _
    $region11: #{bert_classifier_forward.1} parent=1 // pred_check_branch
      %30 = sbr.rel (0) target = $region13
    $region12: #{bert_classifier_forward.1} parent=1 // pred_region
      _
    $region13: #{bert_classifier_forward.1} parent=1 // pred_fallthru
      _
    // Predicated region
    $region14: #{bert_classifier_forward.1} parent=1 // pred_check
      _
    $region15: #{bert_classifier_forward.1} parent=1 // pred_check_branch
      %32 = sbr.rel (0) target = $region17
    $region16: #{bert_classifier_forward.1} parent=1 // pred_region
      _
    $region17: #{bert_classifier_forward.1} parent=1 // pred_fallthru
      _
    // Predicated region
    $region18: #{bert_classifier_forward.1} parent=1 // pred_check
      _
    $region19: #{bert_classifier_forward.1} parent=1 // pred_check_branch
      %34 = sbr.rel (0) target = $region21
    $region20: #{bert_classifier_forward.1} parent=1 // pred_region
      _
    $region21: #{bert_classifier_forward.1} parent=1 // pred_fallthru
      _
    // Predicated region
    $region22: #{bert_classifier_forward.1} parent=1 // pred_check
      _
    $region23: #{bert_classifier_forward.1} parent=1 // pred_check_branch
      %36 = sbr.rel (0) target = $region25
    $region24: #{bert_classifier_forward.1} parent=1 // pred_region
      _
    $region25: #{bert_classifier_forward.1} parent=1 // pred_fallthru
      _
    // Predicated region
    $region26: #{bert_classifier_forward.1} parent=1 // pred_check
      _
    $region27: #{bert_classifier_forward.1} parent=1 // pred_check_branch
      %38 = sbr.rel (0) target = $region29
    $region28: #{bert_classifier_forward.1} parent=1 // pred_region
      %s40 = ssub.s32 1024, 1024
      %41 = vsyncadd [#allocation3], %s40
      %s42 = sshll.u32 [#allocation2], 4
      %s43 = int_to_ptr.vmem [resolvable:$true] %s42
      %48 = dma.hbm_to_vmem [thread:$0]  %s6, 1024, %s43, [#allocation3], 128, 128, 8
    $region29: #{bert_classifier_forward.1} parent=1 // pred_fallthru
      _
    // Predicated region
    $region30: #{bert_classifier_forward.1} parent=1 // pred_check
      _
    $region31: #{bert_classifier_forward.1} parent=1 // pred_check_branch
      %50 = sbr.rel (0) target = $region33
    $region32: #{bert_classifier_forward.1} parent=1 // pred_region
      _
    $region33: #{bert_classifier_forward.1} parent=1 // pred_fallthru
      _
    // Predicated region
    $region34: #{bert_classifier_forward.1} parent=1 // pred_check
      _
    $region35: #{bert_classifier_forward.1} parent=1 // pred_check_branch
      %52 = sbr.rel (0) target = $region37
    $region36: #{bert_classifier_forward.1} parent=1 // pred_region
      _
    $region37: #{bert_classifier_forward.1} parent=1 // pred_fallthru
      _
    // Predicated region
    $region38: #{bert_classifier_forward.1} parent=1 // pred_check
      _
    $region39: #{bert_classifier_forward.1} parent=1 // pred_check_branch
      %54 = sbr.rel (0) target = $region41
    $region40: #{bert_classifier_forward.1} parent=1 // pred_region
      _
    $region41: #{bert_classifier_forward.1} parent=1 // pred_fallthru
      _
    // Predicated region
    $region42: #{bert_classifier_forward.1} parent=1 // pred_check
      _
    $region43: #{bert_classifier_forward.1} parent=1 // pred_check_branch
      %56 = sbr.rel (0) target = $region45
    $region44: #{bert_classifier_forward.1} parent=1 // pred_region
      %s58 = ssub.s32 1024, 1024
      %59 = vsyncadd [#allocation5], %s58
      %s60 = sshll.u32 [#allocation4], 4
      %s61 = int_to_ptr.vmem [resolvable:$true] %s60
      %66 = dma.hbm_to_vmem [thread:$0]  %s10, 1024, %s61, [#allocation5], 128, 128, 8
    $region45: #{bert_classifier_forward.1} parent=1 // pred_fallthru
      _
    // Predicated region
    $region46: #{bert_classifier_forward.1} parent=1 // pred_check
      _
    $region47: #{bert_classifier_forward.1} parent=1 // pred_check_branch
      %68 = sbr.rel (0) target = $region49
    $region48: #{bert_classifier_forward.1} parent=1 // pred_region
      _
    $region49: #{bert_classifier_forward.1} parent=1 // pred_fallthru
      _
    // Predicated region
    $region50: #{bert_classifier_forward.1} parent=1 // pred_check
      _
    $region51: #{bert_classifier_forward.1} parent=1 // pred_check_branch
      %70 = sbr.rel (0) target = $region53
    $region52: #{bert_classifier_forward.1} parent=1 // pred_region
      _
    $region53: #{bert_classifier_forward.1} parent=1 // pred_fallthru
      _
    // Predicated region
    $region54: #{bert_classifier_forward.1} parent=1 // pred_check
      _
    $region55: #{bert_classifier_forward.1} parent=1 // pred_check_branch
      %72 = sbr.rel (0) target = $region57
    $region56: #{bert_classifier_forward.1} parent=1 // pred_region
      _
    $region57: #{bert_classifier_forward.1} parent=1 // pred_fallthru
      _
    // Predicated region
    $region58: #{bert_classifier_forward.1} parent=1 // pred_check
      _
    $region59: #{bert_classifier_forward.1} parent=1 // pred_check_branch
      %74 = sbr.rel (0) target = $region61
    $region60: #{bert_classifier_forward.1} parent=1 // pred_region
      _
    $region61: #{bert_classifier_forward.1} parent=1 // pred_fallthru
      _
    // Predicated region
    $region62: #{bert_classifier_forward.1} parent=1 // pred_check
      _
    $region63: #{bert_classifier_forward.1} parent=1 // pred_check_branch
      %76 = sbr.rel (0) target = $region65
    $region64: #{bert_classifier_forward.1} parent=1 // pred_region
      _
    $region65: #{bert_classifier_forward.1} parent=1 // pred_fallthru
      _
    // Predicated region
    $region66: #{bert_classifier_forward.1} parent=1 // pred_check
      _
    $region67: #{bert_classifier_forward.1} parent=1 // pred_check_branch
      %78 = sbr.rel (0) target = $region69
    $region68: #{bert_classifier_forward.1} parent=1 // pred_region
      _
    $region69: #{bert_classifier_forward.1} parent=1 // pred_fallthru
      _
    // Predicated region
    $region70: #{bert_classifier_forward.1} parent=1 // pred_check
      _
    $region71: #{bert_classifier_forward.1} parent=1 // pred_check_branch
      %80 = sbr.rel (0) target = $region73
    $region72: #{bert_classifier_forward.1} parent=1 // pred_region
      _
    $region73: #{bert_classifier_forward.1} parent=1 // pred_fallthru
      _
    // Predicated region
    $region74: #{bert_classifier_forward.1} parent=1 // pred_check
      _
    $region75: #{bert_classifier_forward.1} parent=1 // pred_check_branch
      %82 = sbr.rel (0) target = $region77
    $region76: #{bert_classifier_forward.1} parent=1 // pred_region
      %83 = dma.done [#allocation3], 1024
    $region77: #{bert_classifier_forward.1} parent=1 // pred_fallthru
      _
    // Predicated region
    $region78: #{bert_classifier_forward.1} parent=1 // pred_check
      _
    $region79: #{bert_classifier_forward.1} parent=1 // pred_check_branch
      %85 = sbr.rel (0) target = $region81
    $region80: #{bert_classifier_forward.1} parent=1 // pred_region
      %86 = dma.done [#allocation5], 1024
    $region81: #{bert_classifier_forward.1} parent=1 // pred_fallthru
      _
    %v87 = vld [vmem:[%s0] sm:$0xff]
    %v88 = vld [vmem:[%s0 + $0x8] sm:$0xff]
    %v89 = vld [vmem:[%s2] sm:$0x1]
    %v90 = vld [vmem:[%s3] sm:$0x1]
    %vm91 = vcmask 261120
    %v92 = vsel %vm91, %v87, 0.0
    %93 = vadd.xlane.f32.xlu0 %v92
    %v94 = vpop.xlane.xlu0 %93
    %v95 = vsel %vm91, %v88, 0.0
    %96 = vadd.xlane.f32.xlu0 %v95
    %v97 = vpop.xlane.xlu0 %96
    %v98 = vrcp.pop 32.0
    %v99 = vmul.f32 %v94, %v98
    %v100 = vmul.f32 %v97, %v98
    %v101 = vsub.f32 %v87, %v99
    %v102 = vsub.f32 %v88, %v100
    %v103 = vmul.f32 %v101, %v101
    %v104 = vmul.f32 %v102, %v102
    %v105 = vsel %vm91, %v103, 0.0
    %106 = vadd.xlane.f32.xlu0 %v105
    %v107 = vpop.xlane.xlu0 %106
    %v108 = vsel %vm91, %v104, 0.0
    %109 = vadd.xlane.f32.xlu0 %v108
    %v110 = vpop.xlane.xlu0 %109
    %v111 = vmul.f32 %v107, %v98
    %v112 = vmul.f32 %v110, %v98
    %v113 = vadd.f32 %v111, 1e-12
    %v114 = vadd.f32 %v112, 1e-12
    %v115 = vrsqrt.pop %v113
    %v116 = vrsqrt.pop %v114
    %v117 = vmul.f32 %v101, %v115
    %v118 = vmul.f32 %v102, %v116
    %v120 = vlaneseq
    %v121 = vshrl.u32 %v120, 7
    %v122 = vsub.s32 0, %v121
    %v123 = vrot.slane %v89, %v122
    %v125 = vmul.f32 %v117, %v123
    %v126 = vmul.f32 %v118, %v123
    %v128 = vlaneseq
    %v129 = vshrl.u32 %v128, 7
    %v130 = vsub.s32 0, %v129
    %v131 = vrot.slane %v90, %v130
    %v133 = vadd.f32 %v125, %v131
    %v134 = vadd.f32 %v126, %v131
    %v135 = vld [vmem:[%s1] sm:$0x3]
    %v136 = vsub.f32 1.0, %v135
    %v137 = vmul.f32 %v136, -10000.0
    %v140 = vunpack.c.l.s4 1966171168
    %v141 = vunpack.c.0.s8 %v140
    %v142 = vlaneseq
    %v143 = vshrl.u32 %v142, 7
    %v144 = vsub.s32 %v141, %v143
    %v145 = vrot.slane %v137, %v144
    %v146 = vcombine.high %v145, %v145
    %v148 = vunpack.c.l.s4 1966171168
    %v149 = vunpack.c.0.s8 %v148
    %v150 = vlaneseq
    %v151 = vshrl.u32 %v150, 7
    %v152 = vsub.s32 %v149, %v151
    %v153 = vrot.slane %v145, %v152
    %v155 = vunpack.c.l.s4 1966171168
    %v156 = vunpack.c.0.s8 %v155
    %v157 = vlaneseq
    %v158 = vshrl.u32 %v157, 7
    %v159 = vsub.s32 %v156, %v158
    %v160 = vrot.slane %v146, %v159
    %v161 = vld [vmem:[%s4] sm:$0xff]
    %v162 = vld [vmem:[%s4 + $0x8] sm:$0xff]
    %v163 = vld [vmem:[%s4 + $0x10] sm:$0xff]
    %v164 = vld [vmem:[%s4 + $0x18] sm:$0xff]
    %v165 = vld [vmem:[%s5] sm:$0x1]
    %v167 = vlaneseq
    %v168 = vshrl.u32 %v167, 7
    %v169 = vsub.s32 0, %v168
    %v170 = vrot.slane %v165, %v169
    %v173 = vsel %vm91, %v133, 0
    %v176 = vsel %vm91, %v134, 0
    %178 = vmatprep.subr.mxu0 0.0
    %179 = vmatpush1.msra.mxu0 %v161
    %180 = vmatprep.subr.mxu0 0.0
    %181 = vmatpush1.msra.mxu0 %v162
    %182 = vmatprep.subr.mxu0 0.0
    %183 = vmatpush1.msra.mxu0 %v163
    %184 = vmatprep.subr.mxu0 0.0
    %185 = vmatpush1.msra.mxu0 %v164
    %186 = vmatprep.subr.mxu0 0.0
    %187 = vmatpush1.msra.mxu0 0.0
    %188 = vmatprep.subr.mxu0 0.0
    %189 = vmatpush1.msra.mxu0 0.0
    %190 = vmatprep.subr.mxu0 0.0
    %191 = vmatpush1.msra.mxu0 0.0
    %192 = vmatprep.subr.mxu0 0.0
    %193 = vmatpush1.msra.mxu0 0.0
    %194 = vmatprep.subr.mxu0 0.0
    %195 = vmatpush1.msra.mxu0 0.0
    %196 = vmatprep.subr.mxu0 0.0
    %197 = vmatpush1.msra.mxu0 0.0
    %198 = vmatprep.subr.mxu0 0.0
    %199 = vmatpush1.msra.mxu0 0.0
    %200 = vmatprep.subr.mxu0 0.0
    %201 = vmatpush1.msra.mxu0 0.0
    %202 = vmatprep.subr.mxu0 0.0
    %203 = vmatpush1.msra.mxu0 0.0
    %204 = vmatprep.subr.mxu0 0.0
    %205 = vmatpush1.msra.mxu0 0.0
    %206 = vmatprep.subr.mxu0 0.0
    %207 = vmatpush1.msra.mxu0 0.0
    %208 = vmatprep.subr.mxu0 0.0
    %209 = vmatpush1.msra.mxu0 0.0
    %210 = vmatprep.subr.mxu0 0.0
    %211 = vmatpush1.msra.mxu0 0.0
    %212 = vmatprep.subr.mxu0 0.0
    %213 = vmatpush1.msra.mxu0 0.0
    %214 = vmatprep.subr.mxu0 0.0
    %215 = vmatpush1.msra.mxu0 0.0
    %216 = vmatprep.subr.mxu0 0.0
    %217 = vmatpush1.msra.mxu0 0.0
    %218 = vmatprep.subr.mxu0 0.0
    %219 = vmatpush1.msra.mxu0 0.0
    %220 = vmatprep.subr.mxu0 0.0
    %221 = vmatpush1.msra.mxu0 0.0
    %222 = vmatprep.subr.mxu0 0.0
    %223 = vmatpush1.msra.mxu0 0.0
    %224 = vmatprep.subr.mxu0 0.0
    %225 = vmatpush1.msra.mxu0 0.0
    %226 = vmatprep.subr.mxu0 0.0
    %227 = vmatpush1.msra.mxu0 0.0
    %228 = vmatprep.subr.mxu0 0.0
    %229 = vmatpush1.msra.mxu0 0.0
    %230 = vmatprep.subr.mxu0 0.0
    %231 = vmatpush1.msra.mxu0 0.0
    %232 = vmatprep.subr.mxu0 0.0
    %233 = vmatpush1.msra.mxu0 0.0
    %234 = vmatprep.subr.mxu0 0.0
    %235 = vmatpush1.msra.mxu0 0.0
    %236 = vmatprep.subr.mxu0 0.0
    %237 = vmatpush1.msra.mxu0 0.0
    %238 = vmatprep.subr.mxu0 0.0
    %239 = vmatpush1.msra.mxu0 0.0
    %240 = vmatprep.subr.mxu0 0.0
    %241 = vmatpush1.msra.mxu0 0.0
    %242 = vmatprep.mubr.f32.mxu0 0.0
    %243 = vmatmul.mubr.f32.gmra.mrb[0].mxu0 %v173
    %v244 = vpop.f32.mrb[0].mxu0
    %v245 = vadd.f32 %v170, %v244
    %v246 = vpop.f32.mrb[0].mxu0
    %247 = vmatprep.mubr.f32.mxu0 0.0
    %248 = vmatmul.mubr.f32.gmra.mrb[0].mxu0 %v176
    %v249 = vpop.f32.mrb[0].mxu0
    %v250 = vadd.f32 %v170, %v249
    %v251 = vpop.f32.mrb[0].mxu0
    %252 = vdwg.mxu0
    %v253 = vld [vmem:[#allocation2] sm:$0xff]
    %v254 = vld [vmem:[#allocation2 + $0x8] sm:$0xff]
    %v255 = vld [vmem:[#allocation2 + $0x10] sm:$0xff]
    %v256 = vld [vmem:[#allocation2 + $0x18] sm:$0xff]
    %258 = vrot.lane.b32.xlu0 %v245, 96
    %v259 = vpop.permute.xlu0 %258
    %vm260 = vcmask 130048
    %v261 = vsel %vm260, %v245, 0
    %v263 = vsel %vm260, %v259, 0
    %265 = vmatprep.subr.mxu0 0.0
    %266 = vmatpush1.xpose.msra.mxu0 %v263
    %267 = vmatprep.subr.mxu0 0.0
    %268 = vmatpush1.xpose.msra.mxu0 0.0
    %269 = vmatprep.subr.mxu0 0.0
    %270 = vmatpush1.xpose.msra.mxu0 0.0
    %271 = vmatprep.subr.mxu0 0.0
    %272 = vmatpush1.xpose.msra.mxu0 0.0
    %273 = vmatprep.subr.mxu0 0.0
    %274 = vmatpush1.xpose.msra.mxu0 0.0
    %275 = vmatprep.subr.mxu0 0.0
    %276 = vmatpush1.xpose.msra.mxu0 0.0
    %277 = vmatprep.subr.mxu0 0.0
    %278 = vmatpush1.xpose.msra.mxu0 0.0
    %279 = vmatprep.subr.mxu0 0.0
    %280 = vmatpush1.xpose.msra.mxu0 0.0
    %281 = vmatprep.subr.mxu0 0.0
    %282 = vmatpush1.xpose.msra.mxu0 0.0
    %283 = vmatprep.subr.mxu0 0.0
    %284 = vmatpush1.xpose.msra.mxu0 0.0
    %285 = vmatprep.subr.mxu0 0.0
    %286 = vmatpush1.xpose.msra.mxu0 0.0
    %287 = vmatprep.subr.mxu0 0.0
    %288 = vmatpush1.xpose.msra.mxu0 0.0
    %289 = vmatprep.subr.mxu0 0.0
    %290 = vmatpush1.xpose.msra.mxu0 0.0
    %291 = vmatprep.subr.mxu0 0.0
    %292 = vmatpush1.xpose.msra.mxu0 0.0
    %293 = vmatprep.subr.mxu0 0.0
    %294 = vmatpush1.xpose.msra.mxu0 0.0
    %295 = vmatprep.subr.mxu0 0.0
    %296 = vmatpush1.xpose.msra.mxu0 0.0
    %297 = vmatprep.subr.mxu0 0.0
    %298 = vmatpush1.xpose.msra.mxu0 0.0
    %299 = vmatprep.subr.mxu0 0.0
    %300 = vmatpush1.xpose.msra.mxu0 0.0
    %301 = vmatprep.subr.mxu0 0.0
    %302 = vmatpush1.xpose.msra.mxu0 0.0
    %303 = vmatprep.subr.mxu0 0.0
    %304 = vmatpush1.xpose.msra.mxu0 0.0
    %305 = vmatprep.subr.mxu0 0.0
    %306 = vmatpush1.xpose.msra.mxu0 0.0
    %307 = vmatprep.subr.mxu0 0.0
    %308 = vmatpush1.xpose.msra.mxu0 0.0
    %309 = vmatprep.subr.mxu0 0.0
    %310 = vmatpush1.xpose.msra.mxu0 0.0
    %311 = vmatprep.subr.mxu0 0.0
    %312 = vmatpush1.xpose.msra.mxu0 0.0
    %313 = vmatprep.subr.mxu0 0.0
    %314 = vmatpush1.xpose.msra.mxu0 0.0
    %315 = vmatprep.subr.mxu0 0.0
    %316 = vmatpush1.xpose.msra.mxu0 0.0
    %317 = vmatprep.subr.mxu0 0.0
    %318 = vmatpush1.xpose.msra.mxu0 0.0
    %319 = vmatprep.subr.mxu0 0.0
    %320 = vmatpush1.xpose.msra.mxu0 0.0
    %321 = vmatprep.subr.mxu0 0.0
    %322 = vmatpush1.xpose.msra.mxu0 0.0
    %323 = vmatprep.subr.mxu0 0.0
    %324 = vmatpush1.xpose.msra.mxu0 0.0
    %325 = vmatprep.subr.mxu0 0.0
    %326 = vmatpush1.xpose.msra.mxu0 0.0
    %327 = vmatprep.subr.mxu0 0.0
    %328 = vmatpush1.xpose.msra.mxu0 0.0
    %329 = vmatprep.mubr.f32.mxu0 0.0
    %330 = vmatmul.mubr.f32.gmra.mrb[0].mxu0 %v261
    %v331 = vpop.f32.mrb[0].mxu0
    %v332 = vadd.f32 0.0, %v331
    %v333 = vpop.f32.mrb[0].mxu0
    %334 = vdwg.mxu0
    %336 = vrot.lane.b32.xlu0 %v250, 96
    %v337 = vpop.permute.xlu0 %336
    %v338 = vsel %vm260, %v250, 0
    %v340 = vsel %vm260, %v337, 0
    %342 = vmatprep.subr.mxu0 0.0
    %343 = vmatpush1.xpose.msra.mxu0 %v340
    %344 = vmatprep.subr.mxu0 0.0
    %345 = vmatpush1.xpose.msra.mxu0 0.0
    %346 = vmatprep.subr.mxu0 0.0
    %347 = vmatpush1.xpose.msra.mxu0 0.0
    %348 = vmatprep.subr.mxu0 0.0
    %349 = vmatpush1.xpose.msra.mxu0 0.0
    %350 = vmatprep.subr.mxu0 0.0
    %351 = vmatpush1.xpose.msra.mxu0 0.0
    %352 = vmatprep.subr.mxu0 0.0
    %353 = vmatpush1.xpose.msra.mxu0 0.0
    %354 = vmatprep.subr.mxu0 0.0
    %355 = vmatpush1.xpose.msra.mxu0 0.0
    %356 = vmatprep.subr.mxu0 0.0
    %357 = vmatpush1.xpose.msra.mxu0 0.0
    %358 = vmatprep.subr.mxu0 0.0
    %359 = vmatpush1.xpose.msra.mxu0 0.0
    %360 = vmatprep.subr.mxu0 0.0
    %361 = vmatpush1.xpose.msra.mxu0 0.0
    %362 = vmatprep.subr.mxu0 0.0
    %363 = vmatpush1.xpose.msra.mxu0 0.0
    %364 = vmatprep.subr.mxu0 0.0
    %365 = vmatpush1.xpose.msra.mxu0 0.0
    %366 = vmatprep.subr.mxu0 0.0
    %367 = vmatpush1.xpose.msra.mxu0 0.0
    %368 = vmatprep.subr.mxu0 0.0
    %369 = vmatpush1.xpose.msra.mxu0 0.0
    %370 = vmatprep.subr.mxu0 0.0
    %371 = vmatpush1.xpose.msra.mxu0 0.0
    %372 = vmatprep.subr.mxu0 0.0
    %373 = vmatpush1.xpose.msra.mxu0 0.0
    %374 = vmatprep.subr.mxu0 0.0
    %375 = vmatpush1.xpose.msra.mxu0 0.0
    %376 = vmatprep.subr.mxu0 0.0
    %377 = vmatpush1.xpose.msra.mxu0 0.0
    %378 = vmatprep.subr.mxu0 0.0
    %379 = vmatpush1.xpose.msra.mxu0 0.0
    %380 = vmatprep.subr.mxu0 0.0
    %381 = vmatpush1.xpose.msra.mxu0 0.0
    %382 = vmatprep.subr.mxu0 0.0
    %383 = vmatpush1.xpose.msra.mxu0 0.0
    %384 = vmatprep.subr.mxu0 0.0
    %385 = vmatpush1.xpose.msra.mxu0 0.0
    %386 = vmatprep.subr.mxu0 0.0
    %387 = vmatpush1.xpose.msra.mxu0 0.0
    %388 = vmatprep.subr.mxu0 0.0
    %389 = vmatpush1.xpose.msra.mxu0 0.0
    %390 = vmatprep.subr.mxu0 0.0
    %391 = vmatpush1.xpose.msra.mxu0 0.0
    %392 = vmatprep.subr.mxu0 0.0
    %393 = vmatpush1.xpose.msra.mxu0 0.0
    %394 = vmatprep.subr.mxu0 0.0
    %395 = vmatpush1.xpose.msra.mxu0 0.0
    %396 = vmatprep.subr.mxu0 0.0
    %397 = vmatpush1.xpose.msra.mxu0 0.0
    %398 = vmatprep.subr.mxu0 0.0
    %399 = vmatpush1.xpose.msra.mxu0 0.0
    %400 = vmatprep.subr.mxu0 0.0
    %401 = vmatpush1.xpose.msra.mxu0 0.0
    %402 = vmatprep.subr.mxu0 0.0
    %403 = vmatpush1.xpose.msra.mxu0 0.0
    %404 = vmatprep.subr.mxu0 0.0
    %405 = vmatpush1.xpose.msra.mxu0 0.0
    %406 = vmatprep.mubr.f32.mxu0 0.0
    %407 = vmatmul.mubr.f32.gmra.mrb[0].mxu0 %v338
    %v408 = vpop.f32.mrb[0].mxu0
    %v409 = vadd.f32 0.0, %v408
    %v410 = vpop.f32.mrb[0].mxu0
    %411 = vdwg.mxu0
    %v412 = vmul.f32 %v332, 0.25
    %v413 = vmul.f32 %v409, 0.25
    %v414 = vlaneseq
    %v415 = vshrl.u32 %v414, 7
    %v416 = vsub.s32 0, %v415
    %v417 = vrot.slane %v153, %v416
    %v418 = vlaneseq
    %v419 = vshrl.u32 %v418, 7
    %v420 = vsub.s32 0, %v419
    %v421 = vrot.slane %v160, %v420
    %v424 = vadd.f32 %v412, %v417
    %v425 = vadd.f32 %v413, %v421
    %vm426 = vcmask 64512
    %v427 = vsel %vm426, %v424, -inf
    %428 = vmax.xlane.f32.xlu0 %v427
    %v429 = vpop.xlane.xlu0 %428
    %v430 = vsel %vm426, %v425, -inf
    %431 = vmax.xlane.f32.xlu0 %v430
    %v432 = vpop.xlane.xlu0 %431
    %v433 = vsub.f32 %v424, %v429
    %v434 = vsub.f32 %v425, %v432
    %v435 = vmul.f32 %v433, 1.442695
    %v436 = vpow.pop %v435
    %v437 = vmul.f32 %v434, 1.442695
    %v438 = vpow.pop %v437
    %v439 = vsel %vm426, %v436, 0.0
    %440 = vadd.xlane.f32.xlu0 %v439
    %v441 = vpop.xlane.xlu0 %440
    %v442 = vsel %vm426, %v438, 0.0
    %443 = vadd.xlane.f32.xlu0 %v442
    %v444 = vpop.xlane.xlu0 %443
    %v445 = vrcp.pop %v441
    %v446 = vrcp.pop %v444
    %v447 = vmul.f32 %v436, %v445
    %v448 = vmul.f32 %v438, %v446
    %449 = vrot.lane.b32.xlu0 %v245, 64
    %v450 = vpop.permute.xlu0 %449
    %v453 = vsel %vm426, %v447, 0
    %455 = vmatprep.subr.mxu0 0.0
    %456 = vmatpush1.msra.mxu0 %v450
    %457 = vmatprep.subr.mxu0 0.0
    %458 = vmatpush1.msra.mxu0 0.0
    %459 = vmatprep.subr.mxu0 0.0
    %460 = vmatpush1.msra.mxu0 0.0
    %461 = vmatprep.subr.mxu0 0.0
    %462 = vmatpush1.msra.mxu0 0.0
    %463 = vmatprep.subr.mxu0 0.0
    %464 = vmatpush1.msra.mxu0 0.0
    %465 = vmatprep.subr.mxu0 0.0
    %466 = vmatpush1.msra.mxu0 0.0
    %467 = vmatprep.subr.mxu0 0.0
    %468 = vmatpush1.msra.mxu0 0.0
    %469 = vmatprep.subr.mxu0 0.0
    %470 = vmatpush1.msra.mxu0 0.0
    %471 = vmatprep.subr.mxu0 0.0
    %472 = vmatpush1.msra.mxu0 0.0
    %473 = vmatprep.subr.mxu0 0.0
    %474 = vmatpush1.msra.mxu0 0.0
    %475 = vmatprep.subr.mxu0 0.0
    %476 = vmatpush1.msra.mxu0 0.0
    %477 = vmatprep.subr.mxu0 0.0
    %478 = vmatpush1.msra.mxu0 0.0
    %479 = vmatprep.subr.mxu0 0.0
    %480 = vmatpush1.msra.mxu0 0.0
    %481 = vmatprep.subr.mxu0 0.0
    %482 = vmatpush1.msra.mxu0 0.0
    %483 = vmatprep.subr.mxu0 0.0
    %484 = vmatpush1.msra.mxu0 0.0
    %485 = vmatprep.subr.mxu0 0.0
    %486 = vmatpush1.msra.mxu0 0.0
    %487 = vmatprep.subr.mxu0 0.0
    %488 = vmatpush1.msra.mxu0 0.0
    %489 = vmatprep.subr.mxu0 0.0
    %490 = vmatpush1.msra.mxu0 0.0
    %491 = vmatprep.subr.mxu0 0.0
    %492 = vmatpush1.msra.mxu0 0.0
    %493 = vmatprep.subr.mxu0 0.0
    %494 = vmatpush1.msra.mxu0 0.0
    %495 = vmatprep.subr.mxu0 0.0
    %496 = vmatpush1.msra.mxu0 0.0
    %497 = vmatprep.subr.mxu0 0.0
    %498 = vmatpush1.msra.mxu0 0.0
    %499 = vmatprep.subr.mxu0 0.0
    %500 = vmatpush1.msra.mxu0 0.0
    %501 = vmatprep.subr.mxu0 0.0
    %502 = vmatpush1.msra.mxu0 0.0
    %503 = vmatprep.subr.mxu0 0.0
    %504 = vmatpush1.msra.mxu0 0.0
    %505 = vmatprep.subr.mxu0 0.0
    %506 = vmatpush1.msra.mxu0 0.0
    %507 = vmatprep.subr.mxu0 0.0
    %508 = vmatpush1.msra.mxu0 0.0
    %509 = vmatprep.subr.mxu0 0.0
    %510 = vmatpush1.msra.mxu0 0.0
    %511 = vmatprep.subr.mxu0 0.0
    %512 = vmatpush1.msra.mxu0 0.0
    %513 = vmatprep.subr.mxu0 0.0
    %514 = vmatpush1.msra.mxu0 0.0
    %515 = vmatprep.subr.mxu0 0.0
    %516 = vmatpush1.msra.mxu0 0.0
    %517 = vmatprep.subr.mxu0 0.0
    %518 = vmatpush1.msra.mxu0 0.0
    %519 = vmatprep.mubr.f32.mxu0 0.0
    %520 = vmatmul.mubr.f32.gmra.mrb[0].mxu0 %v453
    %v521 = vpop.f32.mrb[0].mxu0
    %v522 = vadd.f32 0.0, %v521
    %v523 = vpop.f32.mrb[0].mxu0
    %524 = vdwg.mxu0
    %525 = vrot.lane.b32.xlu0 %v250, 64
    %v526 = vpop.permute.xlu0 %525
    %v529 = vsel %vm426, %v448, 0
    %531 = vmatprep.subr.mxu0 0.0
    %532 = vmatpush1.msra.mxu0 %v526
    %533 = vmatprep.subr.mxu0 0.0
    %534 = vmatpush1.msra.mxu0 0.0
    %535 = vmatprep.subr.mxu0 0.0
    %536 = vmatpush1.msra.mxu0 0.0
    %537 = vmatprep.subr.mxu0 0.0
    %538 = vmatpush1.msra.mxu0 0.0
    %539 = vmatprep.subr.mxu0 0.0
    %540 = vmatpush1.msra.mxu0 0.0
    %541 = vmatprep.subr.mxu0 0.0
    %542 = vmatpush1.msra.mxu0 0.0
    %543 = vmatprep.subr.mxu0 0.0
    %544 = vmatpush1.msra.mxu0 0.0
    %545 = vmatprep.subr.mxu0 0.0
    %546 = vmatpush1.msra.mxu0 0.0
    %547 = vmatprep.subr.mxu0 0.0
    %548 = vmatpush1.msra.mxu0 0.0
    %549 = vmatprep.subr.mxu0 0.0
    %550 = vmatpush1.msra.mxu0 0.0
    %551 = vmatprep.subr.mxu0 0.0
    %552 = vmatpush1.msra.mxu0 0.0
    %553 = vmatprep.subr.mxu0 0.0
    %554 = vmatpush1.msra.mxu0 0.0
    %555 = vmatprep.subr.mxu0 0.0
    %556 = vmatpush1.msra.mxu0 0.0
    %557 = vmatprep.subr.mxu0 0.0
    %558 = vmatpush1.msra.mxu0 0.0
    %559 = vmatprep.subr.mxu0 0.0
    %560 = vmatpush1.msra.mxu0 0.0
    %561 = vmatprep.subr.mxu0 0.0
    %562 = vmatpush1.msra.mxu0 0.0
    %563 = vmatprep.subr.mxu0 0.0
    %564 = vmatpush1.msra.mxu0 0.0
    %565 = vmatprep.subr.mxu0 0.0
    %566 = vmatpush1.msra.mxu0 0.0
    %567 = vmatprep.subr.mxu0 0.0
    %568 = vmatpush1.msra.mxu0 0.0
    %569 = vmatprep.subr.mxu0 0.0
    %570 = vmatpush1.msra.mxu0 0.0
    %571 = vmatprep.subr.mxu0 0.0
    %572 = vmatpush1.msra.mxu0 0.0
    %573 = vmatprep.subr.mxu0 0.0
    %574 = vmatpush1.msra.mxu0 0.0
    %575 = vmatprep.subr.mxu0 0.0
    %576 = vmatpush1.msra.mxu0 0.0
    %577 = vmatprep.subr.mxu0 0.0
    %578 = vmatpush1.msra.mxu0 0.0
    %579 = vmatprep.subr.mxu0 0.0
    %580 = vmatpush1.msra.mxu0 0.0
    %581 = vmatprep.subr.mxu0 0.0
    %582 = vmatpush1.msra.mxu0 0.0
    %583 = vmatprep.subr.mxu0 0.0
    %584 = vmatpush1.msra.mxu0 0.0
    %585 = vmatprep.subr.mxu0 0.0
    %586 = vmatpush1.msra.mxu0 0.0
    %587 = vmatprep.subr.mxu0 0.0
    %588 = vmatpush1.msra.mxu0 0.0
    %589 = vmatprep.subr.mxu0 0.0
    %590 = vmatpush1.msra.mxu0 0.0
    %591 = vmatprep.subr.mxu0 0.0
    %592 = vmatpush1.msra.mxu0 0.0
    %593 = vmatprep.subr.mxu0 0.0
    %594 = vmatpush1.msra.mxu0 0.0
    %595 = vmatprep.mubr.f32.mxu0 0.0
    %596 = vmatmul.mubr.f32.gmra.mrb[0].mxu0 %v529
    %v597 = vpop.f32.mrb[0].mxu0
    %v598 = vadd.f32 0.0, %v597
    %v599 = vpop.f32.mrb[0].mxu0
    %600 = vdwg.mxu0
    %601 = vrot.lane.b32.xlu0 %v245, 112
    %v602 = vpop.permute.xlu0 %601
    %603 = vrot.lane.b32.xlu0 %v245, 80
    %v604 = vpop.permute.xlu0 %603
    %v605 = vsel %vm260, %v602, 0
    %v607 = vsel %vm260, %v604, 0
    %609 = vmatprep.subr.mxu0 0.0
    %610 = vmatpush1.xpose.msra.mxu0 %v607
    %611 = vmatprep.subr.mxu0 0.0
    %612 = vmatpush1.xpose.msra.mxu0 0.0
    %613 = vmatprep.subr.mxu0 0.0
    %614 = vmatpush1.xpose.msra.mxu0 0.0
    %615 = vmatprep.subr.mxu0 0.0
    %616 = vmatpush1.xpose.msra.mxu0 0.0
    %617 = vmatprep.subr.mxu0 0.0
    %618 = vmatpush1.xpose.msra.mxu0 0.0
    %619 = vmatprep.subr.mxu0 0.0
    %620 = vmatpush1.xpose.msra.mxu0 0.0
    %621 = vmatprep.subr.mxu0 0.0
    %622 = vmatpush1.xpose.msra.mxu0 0.0
    %623 = vmatprep.subr.mxu0 0.0
    %624 = vmatpush1.xpose.msra.mxu0 0.0
    %625 = vmatprep.subr.mxu0 0.0
    %626 = vmatpush1.xpose.msra.mxu0 0.0
    %627 = vmatprep.subr.mxu0 0.0
    %628 = vmatpush1.xpose.msra.mxu0 0.0
    %629 = vmatprep.subr.mxu0 0.0
    %630 = vmatpush1.xpose.msra.mxu0 0.0
    %631 = vmatprep.subr.mxu0 0.0
    %632 = vmatpush1.xpose.msra.mxu0 0.0
    %633 = vmatprep.subr.mxu0 0.0
    %634 = vmatpush1.xpose.msra.mxu0 0.0
    %635 = vmatprep.subr.mxu0 0.0
    %636 = vmatpush1.xpose.msra.mxu0 0.0
    %637 = vmatprep.subr.mxu0 0.0
    %638 = vmatpush1.xpose.msra.mxu0 0.0
    %639 = vmatprep.subr.mxu0 0.0
    %640 = vmatpush1.xpose.msra.mxu0 0.0
    %641 = vmatprep.subr.mxu0 0.0
    %642 = vmatpush1.xpose.msra.mxu0 0.0
    %643 = vmatprep.subr.mxu0 0.0
    %644 = vmatpush1.xpose.msra.mxu0 0.0
    %645 = vmatprep.subr.mxu0 0.0
    %646 = vmatpush1.xpose.msra.mxu0 0.0
    %647 = vmatprep.subr.mxu0 0.0
    %648 = vmatpush1.xpose.msra.mxu0 0.0
    %649 = vmatprep.subr.mxu0 0.0
    %650 = vmatpush1.xpose.msra.mxu0 0.0
    %651 = vmatprep.subr.mxu0 0.0
    %652 = vmatpush1.xpose.msra.mxu0 0.0
    %653 = vmatprep.subr.mxu0 0.0
    %654 = vmatpush1.xpose.msra.mxu0 0.0
    %655 = vmatprep.subr.mxu0 0.0
    %656 = vmatpush1.xpose.msra.mxu0 0.0
    %657 = vmatprep.subr.mxu0 0.0
    %658 = vmatpush1.xpose.msra.mxu0 0.0
    %659 = vmatprep.subr.mxu0 0.0
    %660 = vmatpush1.xpose.msra.mxu0 0.0
    %661 = vmatprep.subr.mxu0 0.0
    %662 = vmatpush1.xpose.msra.mxu0 0.0
    %663 = vmatprep.subr.mxu0 0.0
    %664 = vmatpush1.xpose.msra.mxu0 0.0
    %665 = vmatprep.subr.mxu0 0.0
    %666 = vmatpush1.xpose.msra.mxu0 0.0
    %667 = vmatprep.subr.mxu0 0.0
    %668 = vmatpush1.xpose.msra.mxu0 0.0
    %669 = vmatprep.subr.mxu0 0.0
    %670 = vmatpush1.xpose.msra.mxu0 0.0
    %671 = vmatprep.subr.mxu0 0.0
    %672 = vmatpush1.xpose.msra.mxu0 0.0
    %673 = vmatprep.mubr.f32.mxu0 0.0
    %674 = vmatmul.mubr.f32.gmra.mrb[0].mxu0 %v605
    %v675 = vpop.f32.mrb[0].mxu0
    %v676 = vadd.f32 0.0, %v675
    %v677 = vpop.f32.mrb[0].mxu0
    %678 = vdwg.mxu0
    %679 = vrot.lane.b32.xlu0 %v250, 112
    %v680 = vpop.permute.xlu0 %679
    %681 = vrot.lane.b32.xlu0 %v250, 80
    %v682 = vpop.permute.xlu0 %681
    %v683 = vsel %vm260, %v680, 0
    %v685 = vsel %vm260, %v682, 0
    %687 = vmatprep.subr.mxu0 0.0
    %688 = vmatpush1.xpose.msra.mxu0 %v685
    %689 = vmatprep.subr.mxu0 0.0
    %690 = vmatpush1.xpose.msra.mxu0 0.0
    %691 = vmatprep.subr.mxu0 0.0
    %692 = vmatpush1.xpose.msra.mxu0 0.0
    %693 = vmatprep.subr.mxu0 0.0
    %694 = vmatpush1.xpose.msra.mxu0 0.0
    %695 = vmatprep.subr.mxu0 0.0
    %696 = vmatpush1.xpose.msra.mxu0 0.0
    %697 = vmatprep.subr.mxu0 0.0
    %698 = vmatpush1.xpose.msra.mxu0 0.0
    %699 = vmatprep.subr.mxu0 0.0
    %700 = vmatpush1.xpose.msra.mxu0 0.0
    %701 = vmatprep.subr.mxu0 0.0
    %702 = vmatpush1.xpose.msra.mxu0 0.0
    %703 = vmatprep.subr.mxu0 0.0
    %704 = vmatpush1.xpose.msra.mxu0 0.0
    %705 = vmatprep.subr.mxu0 0.0
    %706 = vmatpush1.xpose.msra.mxu0 0.0
    %707 = vmatprep.subr.mxu0 0.0
    %708 = vmatpush1.xpose.msra.mxu0 0.0
    %709 = vmatprep.subr.mxu0 0.0
    %710 = vmatpush1.xpose.msra.mxu0 0.0
    %711 = vmatprep.subr.mxu0 0.0
    %712 = vmatpush1.xpose.msra.mxu0 0.0
    %713 = vmatprep.subr.mxu0 0.0
    %714 = vmatpush1.xpose.msra.mxu0 0.0
    %715 = vmatprep.subr.mxu0 0.0
    %716 = vmatpush1.xpose.msra.mxu0 0.0
    %717 = vmatprep.subr.mxu0 0.0
    %718 = vmatpush1.xpose.msra.mxu0 0.0
    %719 = vmatprep.subr.mxu0 0.0
    %720 = vmatpush1.xpose.msra.mxu0 0.0
    %721 = vmatprep.subr.mxu0 0.0
    %722 = vmatpush1.xpose.msra.mxu0 0.0
    %723 = vmatprep.subr.mxu0 0.0
    %724 = vmatpush1.xpose.msra.mxu0 0.0
    %725 = vmatprep.subr.mxu0 0.0
    %726 = vmatpush1.xpose.msra.mxu0 0.0
    %727 = vmatprep.subr.mxu0 0.0
    %728 = vmatpush1.xpose.msra.mxu0 0.0
    %729 = vmatprep.subr.mxu0 0.0
    %730 = vmatpush1.xpose.msra.mxu0 0.0
    %731 = vmatprep.subr.mxu0 0.0
    %732 = vmatpush1.xpose.msra.mxu0 0.0
    %733 = vmatprep.subr.mxu0 0.0
    %734 = vmatpush1.xpose.msra.mxu0 0.0
    %735 = vmatprep.subr.mxu0 0.0
    %736 = vmatpush1.xpose.msra.mxu0 0.0
    %737 = vmatprep.subr.mxu0 0.0
    %738 = vmatpush1.xpose.msra.mxu0 0.0
    %739 = vmatprep.subr.mxu0 0.0
    %740 = vmatpush1.xpose.msra.mxu0 0.0
    %741 = vmatprep.subr.mxu0 0.0
    %742 = vmatpush1.xpose.msra.mxu0 0.0
    %743 = vmatprep.subr.mxu0 0.0
    %744 = vmatpush1.xpose.msra.mxu0 0.0
    %745 = vmatprep.subr.mxu0 0.0
    %746 = vmatpush1.xpose.msra.mxu0 0.0
    %747 = vmatprep.subr.mxu0 0.0
    %748 = vmatpush1.xpose.msra.mxu0 0.0
    %749 = vmatprep.subr.mxu0 0.0
    %750 = vmatpush1.xpose.msra.mxu0 0.0
    %751 = vmatprep.mubr.f32.mxu0 0.0
    %752 = vmatmul.mubr.f32.gmra.mrb[0].mxu0 %v683
    %v753 = vpop.f32.mrb[0].mxu0
    %v754 = vadd.f32 0.0, %v753
    %v755 = vpop.f32.mrb[0].mxu0
    %756 = vdwg.mxu0
    %v757 = vmul.f32 %v676, 0.25
    %v758 = vmul.f32 %v754, 0.25
    %v759 = vadd.f32 %v757, %v417
    %v760 = vadd.f32 %v758, %v421
    %v761 = vsel %vm426, %v759, -inf
    %762 = vmax.xlane.f32.xlu0 %v761
    %v763 = vpop.xlane.xlu0 %762
    %v764 = vsel %vm426, %v760, -inf
    %765 = vmax.xlane.f32.xlu0 %v764
    %v766 = vpop.xlane.xlu0 %765
    %v767 = vsub.f32 %v759, %v763
    %v768 = vsub.f32 %v760, %v766
    %v769 = vmul.f32 %v767, 1.442695
    %v770 = vpow.pop %v769
    %v771 = vmul.f32 %v768, 1.442695
    %v772 = vpow.pop %v771
    %v773 = vsel %vm426, %v770, 0.0
    %774 = vadd.xlane.f32.xlu0 %v773
    %v775 = vpop.xlane.xlu0 %774
    %v776 = vsel %vm426, %v772, 0.0
    %777 = vadd.xlane.f32.xlu0 %v776
    %v778 = vpop.xlane.xlu0 %777
    %v779 = vrcp.pop %v775
    %v780 = vrcp.pop %v778
    %v781 = vmul.f32 %v770, %v779
    %v782 = vmul.f32 %v772, %v780
    %783 = vrot.lane.b32.xlu0 %v245, 48
    %v784 = vpop.permute.xlu0 %783
    %v787 = vsel %vm426, %v781, 0
    %789 = vmatprep.subr.mxu0 0.0
    %790 = vmatpush1.msra.mxu0 %v784
    %791 = vmatprep.subr.mxu0 0.0
    %792 = vmatpush1.msra.mxu0 0.0
    %793 = vmatprep.subr.mxu0 0.0
    %794 = vmatpush1.msra.mxu0 0.0
    %795 = vmatprep.subr.mxu0 0.0
    %796 = vmatpush1.msra.mxu0 0.0
    %797 = vmatprep.subr.mxu0 0.0
    %798 = vmatpush1.msra.mxu0 0.0
    %799 = vmatprep.subr.mxu0 0.0
    %800 = vmatpush1.msra.mxu0 0.0
    %801 = vmatprep.subr.mxu0 0.0
    %802 = vmatpush1.msra.mxu0 0.0
    %803 = vmatprep.subr.mxu0 0.0
    %804 = vmatpush1.msra.mxu0 0.0
    %805 = vmatprep.subr.mxu0 0.0
    %806 = vmatpush1.msra.mxu0 0.0
    %807 = vmatprep.subr.mxu0 0.0
    %808 = vmatpush1.msra.mxu0 0.0
    %809 = vmatprep.subr.mxu0 0.0
    %810 = vmatpush1.msra.mxu0 0.0
    %811 = vmatprep.subr.mxu0 0.0
    %812 = vmatpush1.msra.mxu0 0.0
    %813 = vmatprep.subr.mxu0 0.0
    %814 = vmatpush1.msra.mxu0 0.0
    %815 = vmatprep.subr.mxu0 0.0
    %816 = vmatpush1.msra.mxu0 0.0
    %817 = vmatprep.subr.mxu0 0.0
    %818 = vmatpush1.msra.mxu0 0.0
    %819 = vmatprep.subr.mxu0 0.0
    %820 = vmatpush1.msra.mxu0 0.0
    %821 = vmatprep.subr.mxu0 0.0
    %822 = vmatpush1.msra.mxu0 0.0
    %823 = vmatprep.subr.mxu0 0.0
    %824 = vmatpush1.msra.mxu0 0.0
    %825 = vmatprep.subr.mxu0 0.0
    %826 = vmatpush1.msra.mxu0 0.0
    %827 = vmatprep.subr.mxu0 0.0
    %828 = vmatpush1.msra.mxu0 0.0
    %829 = vmatprep.subr.mxu0 0.0
    %830 = vmatpush1.msra.mxu0 0.0
    %831 = vmatprep.subr.mxu0 0.0
    %832 = vmatpush1.msra.mxu0 0.0
    %833 = vmatprep.subr.mxu0 0.0
    %834 = vmatpush1.msra.mxu0 0.0
    %835 = vmatprep.subr.mxu0 0.0
    %836 = vmatpush1.msra.mxu0 0.0
    %837 = vmatprep.subr.mxu0 0.0
    %838 = vmatpush1.msra.mxu0 0.0
    %839 = vmatprep.subr.mxu0 0.0
    %840 = vmatpush1.msra.mxu0 0.0
    %841 = vmatprep.subr.mxu0 0.0
    %842 = vmatpush1.msra.mxu0 0.0
    %843 = vmatprep.subr.mxu0 0.0
    %844 = vmatpush1.msra.mxu0 0.0
    %845 = vmatprep.subr.mxu0 0.0
    %846 = vmatpush1.msra.mxu0 0.0
    %847 = vmatprep.subr.mxu0 0.0
    %848 = vmatpush1.msra.mxu0 0.0
    %849 = vmatprep.subr.mxu0 0.0
    %850 = vmatpush1.msra.mxu0 0.0
    %851 = vmatprep.subr.mxu0 0.0
    %852 = vmatpush1.msra.mxu0 0.0
    %853 = vmatprep.mubr.f32.mxu0 0.0
    %854 = vmatmul.mubr.f32.gmra.mrb[0].mxu0 %v787
    %v855 = vpop.f32.mrb[0].mxu0
    %v856 = vadd.f32 0.0, %v855
    %v857 = vpop.f32.mrb[0].mxu0
    %858 = vdwg.mxu0
    %859 = vrot.lane.b32.xlu0 %v250, 48
    %v860 = vpop.permute.xlu0 %859
    %v863 = vsel %vm426, %v782, 0
    %865 = vmatprep.subr.mxu0 0.0
    %866 = vmatpush1.msra.mxu0 %v860
    %867 = vmatprep.subr.mxu0 0.0
    %868 = vmatpush1.msra.mxu0 0.0
    %869 = vmatprep.subr.mxu0 0.0
    %870 = vmatpush1.msra.mxu0 0.0
    %871 = vmatprep.subr.mxu0 0.0
    %872 = vmatpush1.msra.mxu0 0.0
    %873 = vmatprep.subr.mxu0 0.0
    %874 = vmatpush1.msra.mxu0 0.0
    %875 = vmatprep.subr.mxu0 0.0
    %876 = vmatpush1.msra.mxu0 0.0
    %877 = vmatprep.subr.mxu0 0.0
    %878 = vmatpush1.msra.mxu0 0.0
    %879 = vmatprep.subr.mxu0 0.0
    %880 = vmatpush1.msra.mxu0 0.0
    %881 = vmatprep.subr.mxu0 0.0
    %882 = vmatpush1.msra.mxu0 0.0
    %883 = vmatprep.subr.mxu0 0.0
    %884 = vmatpush1.msra.mxu0 0.0
    %885 = vmatprep.subr.mxu0 0.0
    %886 = vmatpush1.msra.mxu0 0.0
    %887 = vmatprep.subr.mxu0 0.0
    %888 = vmatpush1.msra.mxu0 0.0
    %889 = vmatprep.subr.mxu0 0.0
    %890 = vmatpush1.msra.mxu0 0.0
    %891 = vmatprep.subr.mxu0 0.0
    %892 = vmatpush1.msra.mxu0 0.0
    %893 = vmatprep.subr.mxu0 0.0
    %894 = vmatpush1.msra.mxu0 0.0
    %895 = vmatprep.subr.mxu0 0.0
    %896 = vmatpush1.msra.mxu0 0.0
    %897 = vmatprep.subr.mxu0 0.0
    %898 = vmatpush1.msra.mxu0 0.0
    %899 = vmatprep.subr.mxu0 0.0
    %900 = vmatpush1.msra.mxu0 0.0
    %901 = vmatprep.subr.mxu0 0.0
    %902 = vmatpush1.msra.mxu0 0.0
    %903 = vmatprep.subr.mxu0 0.0
    %904 = vmatpush1.msra.mxu0 0.0
    %905 = vmatprep.subr.mxu0 0.0
    %906 = vmatpush1.msra.mxu0 0.0
    %907 = vmatprep.subr.mxu0 0.0
    %908 = vmatpush1.msra.mxu0 0.0
    %909 = vmatprep.subr.mxu0 0.0
    %910 = vmatpush1.msra.mxu0 0.0
    %911 = vmatprep.subr.mxu0 0.0
    %912 = vmatpush1.msra.mxu0 0.0
    %913 = vmatprep.subr.mxu0 0.0
    %914 = vmatpush1.msra.mxu0 0.0
    %915 = vmatprep.subr.mxu0 0.0
    %916 = vmatpush1.msra.mxu0 0.0
    %917 = vmatprep.subr.mxu0 0.0
    %918 = vmatpush1.msra.mxu0 0.0
    %919 = vmatprep.subr.mxu0 0.0
    %920 = vmatpush1.msra.mxu0 0.0
    %921 = vmatprep.subr.mxu0 0.0
    %922 = vmatpush1.msra.mxu0 0.0
    %923 = vmatprep.subr.mxu0 0.0
    %924 = vmatpush1.msra.mxu0 0.0
    %925 = vmatprep.subr.mxu0 0.0
    %926 = vmatpush1.msra.mxu0 0.0
    %927 = vmatprep.subr.mxu0 0.0
    %928 = vmatpush1.msra.mxu0 0.0
    %929 = vmatprep.mubr.f32.mxu0 0.0
    %930 = vmatmul.mubr.f32.gmra.mrb[0].mxu0 %v863
    %v931 = vpop.f32.mrb[0].mxu0
    %v932 = vadd.f32 0.0, %v931
    %v933 = vpop.f32.mrb[0].mxu0
    %934 = vdwg.mxu0
    %v936 = vsel %vm260, %v856, 0
    %v939 = vsel %vm260, %v932, 0
    %941 = vmatprep.subr.mxu0 0.0
    %942 = vmatpush1.msra.mxu0 %v255
    %943 = vmatprep.subr.mxu0 0.0
    %944 = vmatpush1.msra.mxu0 %v256
    %945 = vmatprep.subr.mxu0 0.0
    %946 = vmatpush1.msra.mxu0 0.0
    %947 = vmatprep.subr.mxu0 0.0
    %948 = vmatpush1.msra.mxu0 0.0
    %949 = vmatprep.subr.mxu0 0.0
    %950 = vmatpush1.msra.mxu0 0.0
    %951 = vmatprep.subr.mxu0 0.0
    %952 = vmatpush1.msra.mxu0 0.0
    %953 = vmatprep.subr.mxu0 0.0
    %954 = vmatpush1.msra.mxu0 0.0
    %955 = vmatprep.subr.mxu0 0.0
    %956 = vmatpush1.msra.mxu0 0.0
    %957 = vmatprep.subr.mxu0 0.0
    %958 = vmatpush1.msra.mxu0 0.0
    %959 = vmatprep.subr.mxu0 0.0
    %960 = vmatpush1.msra.mxu0 0.0
    %961 = vmatprep.subr.mxu0 0.0
    %962 = vmatpush1.msra.mxu0 0.0
    %963 = vmatprep.subr.mxu0 0.0
    %964 = vmatpush1.msra.mxu0 0.0
    %965 = vmatprep.subr.mxu0 0.0
    %966 = vmatpush1.msra.mxu0 0.0
    %967 = vmatprep.subr.mxu0 0.0
    %968 = vmatpush1.msra.mxu0 0.0
    %969 = vmatprep.subr.mxu0 0.0
    %970 = vmatpush1.msra.mxu0 0.0
    %971 = vmatprep.subr.mxu0 0.0
    %972 = vmatpush1.msra.mxu0 0.0
    %973 = vmatprep.subr.mxu0 0.0
    %974 = vmatpush1.msra.mxu0 0.0
    %975 = vmatprep.subr.mxu0 0.0
    %976 = vmatpush1.msra.mxu0 0.0
    %977 = vmatprep.subr.mxu0 0.0
    %978 = vmatpush1.msra.mxu0 0.0
    %979 = vmatprep.subr.mxu0 0.0
    %980 = vmatpush1.msra.mxu0 0.0
    %981 = vmatprep.subr.mxu0 0.0
    %982 = vmatpush1.msra.mxu0 0.0
    %983 = vmatprep.subr.mxu0 0.0
    %984 = vmatpush1.msra.mxu0 0.0
    %985 = vmatprep.subr.mxu0 0.0
    %986 = vmatpush1.msra.mxu0 0.0
    %987 = vmatprep.subr.mxu0 0.0
    %988 = vmatpush1.msra.mxu0 0.0
    %989 = vmatprep.subr.mxu0 0.0
    %990 = vmatpush1.msra.mxu0 0.0
    %991 = vmatprep.subr.mxu0 0.0
    %992 = vmatpush1.msra.mxu0 0.0
    %993 = vmatprep.subr.mxu0 0.0
    %994 = vmatpush1.msra.mxu0 0.0
    %995 = vmatprep.subr.mxu0 0.0
    %996 = vmatpush1.msra.mxu0 0.0
    %997 = vmatprep.subr.mxu0 0.0
    %998 = vmatpush1.msra.mxu0 0.0
    %999 = vmatprep.subr.mxu0 0.0
    %1000 = vmatpush1.msra.mxu0 0.0
    %1001 = vmatprep.subr.mxu0 0.0
    %1002 = vmatpush1.msra.mxu0 0.0
    %1003 = vmatprep.subr.mxu0 0.0
    %1004 = vmatpush1.msra.mxu0 0.0
    %1005 = vmatprep.mubr.f32.mxu0 0.0
    %1006 = vmatmul.mubr.f32.gmra.mrb[0].mxu0 %v936
    %v1007 = vpop.f32.mrb[0].mxu0
    %v1008 = vadd.f32 0.0, %v1007
    %v1009 = vpop.f32.mrb[0].mxu0
    %1010 = vmatprep.mubr.f32.mxu0 0.0
    %1011 = vmatmul.mubr.f32.gmra.mrb[0].mxu0 %v939
    %v1012 = vpop.f32.mrb[0].mxu0
    %v1013 = vadd.f32 0.0, %v1012
    %v1014 = vpop.f32.mrb[0].mxu0
    %1015 = vdwg.mxu0
    %v1017 = vsel %vm260, %v522, 0
    %v1020 = vsel %vm260, %v598, 0
    %1022 = vmatprep.subr.mxu0 0.0
    %1023 = vmatpush1.msra.mxu0 %v253
    %1024 = vmatprep.subr.mxu0 0.0
    %1025 = vmatpush1.msra.mxu0 %v254
    %1026 = vmatprep.subr.mxu0 0.0
    %1027 = vmatpush1.msra.mxu0 0.0
    %1028 = vmatprep.subr.mxu0 0.0
    %1029 = vmatpush1.msra.mxu0 0.0
    %1030 = vmatprep.subr.mxu0 0.0
    %1031 = vmatpush1.msra.mxu0 0.0
    %1032 = vmatprep.subr.mxu0 0.0
    %1033 = vmatpush1.msra.mxu0 0.0
    %1034 = vmatprep.subr.mxu0 0.0
    %1035 = vmatpush1.msra.mxu0 0.0
    %1036 = vmatprep.subr.mxu0 0.0
    %1037 = vmatpush1.msra.mxu0 0.0
    %1038 = vmatprep.subr.mxu0 0.0
    %1039 = vmatpush1.msra.mxu0 0.0
    %1040 = vmatprep.subr.mxu0 0.0
    %1041 = vmatpush1.msra.mxu0 0.0
    %1042 = vmatprep.subr.mxu0 0.0
    %1043 = vmatpush1.msra.mxu0 0.0
    %1044 = vmatprep.subr.mxu0 0.0
    %1045 = vmatpush1.msra.mxu0 0.0
    %1046 = vmatprep.subr.mxu0 0.0
    %1047 = vmatpush1.msra.mxu0 0.0
    %1048 = vmatprep.subr.mxu0 0.0
    %1049 = vmatpush1.msra.mxu0 0.0
    %1050 = vmatprep.subr.mxu0 0.0
    %1051 = vmatpush1.msra.mxu0 0.0
    %1052 = vmatprep.subr.mxu0 0.0
    %1053 = vmatpush1.msra.mxu0 0.0
    %1054 = vmatprep.subr.mxu0 0.0
    %1055 = vmatpush1.msra.mxu0 0.0
    %1056 = vmatprep.subr.mxu0 0.0
    %1057 = vmatpush1.msra.mxu0 0.0
    %1058 = vmatprep.subr.mxu0 0.0
    %1059 = vmatpush1.msra.mxu0 0.0
    %1060 = vmatprep.subr.mxu0 0.0
    %1061 = vmatpush1.msra.mxu0 0.0
    %1062 = vmatprep.subr.mxu0 0.0
    %1063 = vmatpush1.msra.mxu0 0.0
    %1064 = vmatprep.subr.mxu0 0.0
    %1065 = vmatpush1.msra.mxu0 0.0
    %1066 = vmatprep.subr.mxu0 0.0
    %1067 = vmatpush1.msra.mxu0 0.0
    %1068 = vmatprep.subr.mxu0 0.0
    %1069 = vmatpush1.msra.mxu0 0.0
    %1070 = vmatprep.subr.mxu0 0.0
    %1071 = vmatpush1.msra.mxu0 0.0
    %1072 = vmatprep.subr.mxu0 0.0
    %1073 = vmatpush1.msra.mxu0 0.0
    %1074 = vmatprep.subr.mxu0 0.0
    %1075 = vmatpush1.msra.mxu0 0.0
    %1076 = vmatprep.subr.mxu0 0.0
    %1077 = vmatpush1.msra.mxu0 0.0
    %1078 = vmatprep.subr.mxu0 0.0
    %1079 = vmatpush1.msra.mxu0 0.0
    %1080 = vmatprep.subr.mxu0 0.0
    %1081 = vmatpush1.msra.mxu0 0.0
    %1082 = vmatprep.subr.mxu0 0.0
    %1083 = vmatpush1.msra.mxu0 0.0
    %1084 = vmatprep.subr.mxu0 0.0
    %1085 = vmatpush1.msra.mxu0 0.0
    %1086 = vmatprep.mubr.f32.mxu0 0.0
    %1087 = vmatmul.mubr.f32.gmra.mrb[0].mxu0 %v1017
    %v1088 = vpop.f32.mrb[0].mxu0
    %v1089 = vadd.f32 %v1008, %v1088
    %v1090 = vpop.f32.mrb[0].mxu0
    %1091 = vmatprep.mubr.f32.mxu0 0.0
    %1092 = vmatmul.mubr.f32.gmra.mrb[0].mxu0 %v1020
    %v1093 = vpop.f32.mrb[0].mxu0
    %v1094 = vadd.f32 %v1013, %v1093
    %v1095 = vpop.f32.mrb[0].mxu0
    %1096 = vdwg.mxu0
    %v1097 = vld [vmem:[%s7] sm:$0x1]
    %v1099 = vlaneseq
    %v1100 = vshrl.u32 %v1099, 7
    %v1101 = vsub.s32 0, %v1100
    %v1102 = vrot.slane %v1097, %v1101
    %v1104 = vadd.f32 %v1089, %v1102
    %v1105 = vadd.f32 %v1094, %v1102
    %v1106 = vadd.f32 %v1104, %v133
    %v1107 = vadd.f32 %v1105, %v134
    %v1108 = vld [vmem:[%s8] sm:$0x1]
    %v1109 = vld [vmem:[%s9] sm:$0x1]
    %v1110 = vsel %vm91, %v1106, 0.0
    %1111 = vadd.xlane.f32.xlu0 %v1110
    %v1112 = vpop.xlane.xlu0 %1111
    %v1113 = vsel %vm91, %v1107, 0.0
    %1114 = vadd.xlane.f32.xlu0 %v1113
    %v1115 = vpop.xlane.xlu0 %1114
    %v1116 = vmul.f32 %v1112, %v98
    %v1117 = vmul.f32 %v1115, %v98
    %v1118 = vsub.f32 %v1106, %v1116
    %v1119 = vsub.f32 %v1107, %v1117
    %v1120 = vmul.f32 %v1118, %v1118
    %v1121 = vmul.f32 %v1119, %v1119
    %v1122 = vsel %vm91, %v1120, 0.0
    %1123 = vadd.xlane.f32.xlu0 %v1122
    %v1124 = vpop.xlane.xlu0 %1123
    %v1125 = vsel %vm91, %v1121, 0.0
    %1126 = vadd.xlane.f32.xlu0 %v1125
    %v1127 = vpop.xlane.xlu0 %1126
    %v1128 = vmul.f32 %v1124, %v98
    %v1129 = vmul.f32 %v1127, %v98
    %v1130 = vadd.f32 %v1128, 1e-12
    %v1131 = vadd.f32 %v1129, 1e-12
    %v1132 = vrsqrt.pop %v1130
    %v1133 = vrsqrt.pop %v1131
    %v1134 = vmul.f32 %v1118, %v1132
    %v1135 = vmul.f32 %v1119, %v1133
    %v1137 = vlaneseq
    %v1138 = vshrl.u32 %v1137, 7
    %v1139 = vsub.s32 0, %v1138
    %v1140 = vrot.slane %v1108, %v1139
    %v1142 = vmul.f32 %v1134, %v1140
    %v1143 = vmul.f32 %v1135, %v1140
    %v1145 = vlaneseq
    %v1146 = vshrl.u32 %v1145, 7
    %v1147 = vsub.s32 0, %v1146
    %v1148 = vrot.slane %v1109, %v1147
    %v1150 = vadd.f32 %v1142, %v1148
    %v1151 = vadd.f32 %v1143, %v1148
    %v1152 = vld [vmem:[#allocation4] sm:$0xff]
    %v1153 = vld [vmem:[#allocation4 + $0x8] sm:$0xff]
    %v1154 = vld [vmem:[#allocation4 + $0x10] sm:$0xff]
    %v1155 = vld [vmem:[#allocation4 + $0x18] sm:$0xff]
    %v1156 = vld [vmem:[%s11] sm:$0x1]
    %v1158 = vlaneseq
    %v1159 = vshrl.u32 %v1158, 7
    %v1160 = vsub.s32 0, %v1159
    %v1161 = vrot.slane %v1156, %v1160
    %v1164 = vsel %vm91, %v1150, 0
    %v1167 = vsel %vm91, %v1151, 0
    %1169 = vmatprep.subr.mxu0 0.0
    %1170 = vmatpush1.msra.mxu0 %v1152
    %1171 = vmatprep.subr.mxu0 0.0
    %1172 = vmatpush1.msra.mxu0 %v1153
    %1173 = vmatprep.subr.mxu0 0.0
    %1174 = vmatpush1.msra.mxu0 %v1154
    %1175 = vmatprep.subr.mxu0 0.0
    %1176 = vmatpush1.msra.mxu0 %v1155
    %1177 = vmatprep.subr.mxu0 0.0
    %1178 = vmatpush1.msra.mxu0 0.0
    %1179 = vmatprep.subr.mxu0 0.0
    %1180 = vmatpush1.msra.mxu0 0.0
    %1181 = vmatprep.subr.mxu0 0.0
    %1182 = vmatpush1.msra.mxu0 0.0
    %1183 = vmatprep.subr.mxu0 0.0
    %1184 = vmatpush1.msra.mxu0 0.0
    %1185 = vmatprep.subr.mxu0 0.0
    %1186 = vmatpush1.msra.mxu0 0.0
    %1187 = vmatprep.subr.mxu0 0.0
    %1188 = vmatpush1.msra.mxu0 0.0
    %1189 = vmatprep.subr.mxu0 0.0
    %1190 = vmatpush1.msra.mxu0 0.0
    %1191 = vmatprep.subr.mxu0 0.0
    %1192 = vmatpush1.msra.mxu0 0.0
    %1193 = vmatprep.subr.mxu0 0.0
    %1194 = vmatpush1.msra.mxu0 0.0
    %1195 = vmatprep.subr.mxu0 0.0
    %1196 = vmatpush1.msra.mxu0 0.0
    %1197 = vmatprep.subr.mxu0 0.0
    %1198 = vmatpush1.msra.mxu0 0.0
    %1199 = vmatprep.subr.mxu0 0.0
    %1200 = vmatpush1.msra.mxu0 0.0
    %1201 = vmatprep.subr.mxu0 0.0
    %1202 = vmatpush1.msra.mxu0 0.0
    %1203 = vmatprep.subr.mxu0 0.0
    %1204 = vmatpush1.msra.mxu0 0.0
    %1205 = vmatprep.subr.mxu0 0.0
    %1206 = vmatpush1.msra.mxu0 0.0
    %1207 = vmatprep.subr.mxu0 0.0
    %1208 = vmatpush1.msra.mxu0 0.0
    %1209 = vmatprep.subr.mxu0 0.0
    %1210 = vmatpush1.msra.mxu0 0.0
    %1211 = vmatprep.subr.mxu0 0.0
    %1212 = vmatpush1.msra.mxu0 0.0
    %1213 = vmatprep.subr.mxu0 0.0
    %1214 = vmatpush1.msra.mxu0 0.0
    %1215 = vmatprep.subr.mxu0 0.0
    %1216 = vmatpush1.msra.mxu0 0.0
    %1217 = vmatprep.subr.mxu0 0.0
    %1218 = vmatpush1.msra.mxu0 0.0
    %1219 = vmatprep.subr.mxu0 0.0
    %1220 = vmatpush1.msra.mxu0 0.0
    %1221 = vmatprep.subr.mxu0 0.0
    %1222 = vmatpush1.msra.mxu0 0.0
    %1223 = vmatprep.subr.mxu0 0.0
    %1224 = vmatpush1.msra.mxu0 0.0
    %1225 = vmatprep.subr.mxu0 0.0
    %1226 = vmatpush1.msra.mxu0 0.0
    %1227 = vmatprep.subr.mxu0 0.0
    %1228 = vmatpush1.msra.mxu0 0.0
    %1229 = vmatprep.subr.mxu0 0.0
    %1230 = vmatpush1.msra.mxu0 0.0
    %1231 = vmatprep.subr.mxu0 0.0
    %1232 = vmatpush1.msra.mxu0 0.0
    %1233 = vmatprep.mubr.f32.mxu0 0.0
    %1234 = vmatmul.mubr.f32.gmra.mrb[0].mxu0 %v1164
    %v1235 = vpop.f32.mrb[0].mxu0
    %v1236 = vadd.f32 %v1161, %v1235
    %v1237 = vpop.f32.mrb[0].mxu0
    %1238 = vmatprep.mubr.f32.mxu0 0.0
    %1239 = vmatmul.mubr.f32.gmra.mrb[0].mxu0 %v1167
    %v1240 = vpop.f32.mrb[0].mxu0
    %v1241 = vadd.f32 %v1161, %v1240
    %v1242 = vpop.f32.mrb[0].mxu0
    %1243 = vdwg.mxu0
    %v1244 = vmul.f32 %v1236, 0.5
    %v1245 = vmul.f32 %v1241, 0.5
    %v1246 = vmul.f32 %v1236, 0.044715
    %v1247 = vmul.f32 %v1241, 0.044715
    %v1248 = vmul.f32 %v1246, %v1236
    %v1249 = vmul.f32 %v1247, %v1241
    %v1250 = vmul.f32 %v1248, %v1236
    %v1251 = vmul.f32 %v1249, %v1241
    %v1252 = vadd.f32 %v1236, %v1250
    %v1253 = vadd.f32 %v1241, %v1251
    %v1254 = vmul.f32 %v1252, 0.7978846
    %v1255 = vmul.f32 %v1253, 0.7978846
    %v1256 = vtanh.pop %v1254
    %v1257 = vtanh.pop %v1255
    %v1258 = vadd.f32 %v1256, 1.0
    %v1259 = vadd.f32 %v1257, 1.0
    %v1260 = vmul.f32 %v1244, %v1258
    %v1261 = vmul.f32 %v1245, %v1259
    %v1262 = vld [vmem:[%s12] sm:$0xff]
    %v1263 = vld [vmem:[%s12 + $0x8] sm:$0xff]
    %v1264 = vld [vmem:[%s12 + $0x10] sm:$0xff]
    %v1265 = vld [vmem:[%s12 + $0x18] sm:$0xff]
    %v1266 = vld [vmem:[%s12 + $0x20] sm:$0xff]
    %v1267 = vld [vmem:[%s12 + $0x28] sm:$0xff]
    %v1268 = vld [vmem:[%s12 + $0x30] sm:$0xff]
    %v1269 = vld [vmem:[%s12 + $0x38] sm:$0xff]
    %v1270 = vld [vmem:[%s13] sm:$0x1]
    %v1272 = vlaneseq
    %v1273 = vshrl.u32 %v1272, 7
    %v1274 = vsub.s32 0, %v1273
    %v1275 = vrot.slane %v1270, %v1274
    %vm1277 = vcmask 523264
    %v1279 = vsel %vm1277, %v1260, 0
    %v1282 = vsel %vm1277, %v1261, 0
    %1284 = vmatprep.subr.mxu0 0.0
    %1285 = vmatpush1.msra.mxu0 %v1262
    %1286 = vmatprep.subr.mxu0 0.0
    %1287 = vmatpush1.msra.mxu0 %v1263
    %1288 = vmatprep.subr.mxu0 0.0
    %1289 = vmatpush1.msra.mxu0 %v1264
    %1290 = vmatprep.subr.mxu0 0.0
    %1291 = vmatpush1.msra.mxu0 %v1265
    %1292 = vmatprep.subr.mxu0 0.0
    %1293 = vmatpush1.msra.mxu0 %v1266
    %1294 = vmatprep.subr.mxu0 0.0
    %1295 = vmatpush1.msra.mxu0 %v1267
    %1296 = vmatprep.subr.mxu0 0.0
    %1297 = vmatpush1.msra.mxu0 %v1268
    %1298 = vmatprep.subr.mxu0 0.0
    %1299 = vmatpush1.msra.mxu0 %v1269
    %1300 = vmatprep.subr.mxu0 0.0
    %1301 = vmatpush1.msra.mxu0 0.0
    %1302 = vmatprep.subr.mxu0 0.0
    %1303 = vmatpush1.msra.mxu0 0.0
    %1304 = vmatprep.subr.mxu0 0.0
    %1305 = vmatpush1.msra.mxu0 0.0
    %1306 = vmatprep.subr.mxu0 0.0
    %1307 = vmatpush1.msra.mxu0 0.0
    %1308 = vmatprep.subr.mxu0 0.0
    %1309 = vmatpush1.msra.mxu0 0.0
    %1310 = vmatprep.subr.mxu0 0.0
    %1311 = vmatpush1.msra.mxu0 0.0
    %1312 = vmatprep.subr.mxu0 0.0
    %1313 = vmatpush1.msra.mxu0 0.0
    %1314 = vmatprep.subr.mxu0 0.0
    %1315 = vmatpush1.msra.mxu0 0.0
    %1316 = vmatprep.subr.mxu0 0.0
    %1317 = vmatpush1.msra.mxu0 0.0
    %1318 = vmatprep.subr.mxu0 0.0
    %1319 = vmatpush1.msra.mxu0 0.0
    %1320 = vmatprep.subr.mxu0 0.0
    %1321 = vmatpush1.msra.mxu0 0.0
    %1322 = vmatprep.subr.mxu0 0.0
    %1323 = vmatpush1.msra.mxu0 0.0
    %1324 = vmatprep.subr.mxu0 0.0
    %1325 = vmatpush1.msra.mxu0 0.0
    %1326 = vmatprep.subr.mxu0 0.0
    %1327 = vmatpush1.msra.mxu0 0.0
    %1328 = vmatprep.subr.mxu0 0.0
    %1329 = vmatpush1.msra.mxu0 0.0
    %1330 = vmatprep.subr.mxu0 0.0
    %1331 = vmatpush1.msra.mxu0 0.0
    %1332 = vmatprep.subr.mxu0 0.0
    %1333 = vmatpush1.msra.mxu0 0.0
    %1334 = vmatprep.subr.mxu0 0.0
    %1335 = vmatpush1.msra.mxu0 0.0
    %1336 = vmatprep.subr.mxu0 0.0
    %1337 = vmatpush1.msra.mxu0 0.0
    %1338 = vmatprep.subr.mxu0 0.0
    %1339 = vmatpush1.msra.mxu0 0.0
    %1340 = vmatprep.subr.mxu0 0.0
    %1341 = vmatpush1.msra.mxu0 0.0
    %1342 = vmatprep.subr.mxu0 0.0
    %1343 = vmatpush1.msra.mxu0 0.0
    %1344 = vmatprep.subr.mxu0 0.0
    %1345 = vmatpush1.msra.mxu0 0.0
    %1346 = vmatprep.subr.mxu0 0.0
    %1347 = vmatpush1.msra.mxu0 0.0
    %1348 = vmatprep.mubr.f32.mxu0 0.0
    %1349 = vmatmul.mubr.f32.gmra.mrb[0].mxu0 %v1279
    %v1350 = vpop.f32.mrb[0].mxu0
    %v1351 = vadd.f32 %v1275, %v1350
    %v1352 = vpop.f32.mrb[0].mxu0
    %1353 = vmatprep.mubr.f32.mxu0 0.0
    %1354 = vmatmul.mubr.f32.gmra.mrb[0].mxu0 %v1282
    %v1355 = vpop.f32.mrb[0].mxu0
    %v1356 = vadd.f32 %v1275, %v1355
    %v1357 = vpop.f32.mrb[0].mxu0
    %1358 = vdwg.mxu0
    %v1359 = vadd.f32 %v1351, %v1150
    %v1360 = vadd.f32 %v1356, %v1151
    %v1361 = vld [vmem:[%s14] sm:$0x1]
    %v1362 = vld [vmem:[%s15] sm:$0x1]
    %v1363 = vsel %vm91, %v1359, 0.0
    %1364 = vadd.xlane.f32.xlu0 %v1363
    %v1365 = vpop.xlane.xlu0 %1364
    %v1366 = vsel %vm91, %v1360, 0.0
    %1367 = vadd.xlane.f32.xlu0 %v1366
    %v1368 = vpop.xlane.xlu0 %1367
    %v1369 = vmul.f32 %v1365, %v98
    %v1370 = vmul.f32 %v1368, %v98
    %v1371 = vsub.f32 %v1359, %v1369
    %v1372 = vsub.f32 %v1360, %v1370
    %v1373 = vmul.f32 %v1371, %v1371
    %v1374 = vmul.f32 %v1372, %v1372
    %v1375 = vsel %vm91, %v1373, 0.0
    %1376 = vadd.xlane.f32.xlu0 %v1375
    %v1377 = vpop.xlane.xlu0 %1376
    %v1378 = vsel %vm91, %v1374, 0.0
    %1379 = vadd.xlane.f32.xlu0 %v1378
    %v1380 = vpop.xlane.xlu0 %1379
    %v1381 = vmul.f32 %v1377, %v98
    %v1382 = vmul.f32 %v1380, %v98
    %v1383 = vadd.f32 %v1381, 1e-12
    %v1384 = vadd.f32 %v1382, 1e-12
    %v1385 = vrsqrt.pop %v1383
    %v1386 = vrsqrt.pop %v1384
    %v1387 = vmul.f32 %v1371, %v1385
    %v1388 = vmul.f32 %v1372, %v1386
    %v1390 = vlaneseq
    %v1391 = vshrl.u32 %v1390, 7
    %v1392 = vsub.s32 0, %v1391
    %v1393 = vrot.slane %v1361, %v1392
    %v1395 = vmul.f32 %v1387, %v1393
    %v1396 = vmul.f32 %v1388, %v1393
    %v1398 = vlaneseq
    %v1399 = vshrl.u32 %v1398, 7
    %v1400 = vsub.s32 0, %v1399
    %v1401 = vrot.slane %v1362, %v1400
    %v1403 = vadd.f32 %v1395, %v1401
    %v1404 = vadd.f32 %v1396, %v1401
    %s1405 = scalar_lea.vmem %s4, 32
    %v1406 = vld [vmem:[%s1405] sm:$0xff]
    %v1407 = vld [vmem:[%s1405 + $0x8] sm:$0xff]
    %v1408 = vld [vmem:[%s1405 + $0x10] sm:$0xff]
    %v1409 = vld [vmem:[%s1405 + $0x18] sm:$0xff]
    %s1410 = scalar_lea.vmem %s5, 1
    %v1411 = vld [vmem:[%s1410] sm:$0x1]
    %v1413 = vlaneseq
    %v1414 = vshrl.u32 %v1413, 7
    %v1415 = vsub.s32 0, %v1414
    %v1416 = vrot.slane %v1411, %v1415
    %v1419 = vsel %vm91, %v1403, 0
    %v1422 = vsel %vm91, %v1404, 0
    %1424 = vmatprep.subr.mxu0 0.0
    %1425 = vmatpush1.msra.mxu0 %v1406
    %1426 = vmatprep.subr.mxu0 0.0
    %1427 = vmatpush1.msra.mxu0 %v1407
    %1428 = vmatprep.subr.mxu0 0.0
    %1429 = vmatpush1.msra.mxu0 %v1408
    %1430 = vmatprep.subr.mxu0 0.0
    %1431 = vmatpush1.msra.mxu0 %v1409
    %1432 = vmatprep.subr.mxu0 0.0
    %1433 = vmatpush1.msra.mxu0 0.0
    %1434 = vmatprep.subr.mxu0 0.0
    %1435 = vmatpush1.msra.mxu0 0.0
    %1436 = vmatprep.subr.mxu0 0.0
    %1437 = vmatpush1.msra.mxu0 0.0
    %1438 = vmatprep.subr.mxu0 0.0
    %1439 = vmatpush1.msra.mxu0 0.0
    %1440 = vmatprep.subr.mxu0 0.0
    %1441 = vmatpush1.msra.mxu0 0.0
    %1442 = vmatprep.subr.mxu0 0.0
    %1443 = vmatpush1.msra.mxu0 0.0
    %1444 = vmatprep.subr.mxu0 0.0
    %1445 = vmatpush1.msra.mxu0 0.0
    %1446 = vmatprep.subr.mxu0 0.0
    %1447 = vmatpush1.msra.mxu0 0.0
    %1448 = vmatprep.subr.mxu0 0.0
    %1449 = vmatpush1.msra.mxu0 0.0
    %1450 = vmatprep.subr.mxu0 0.0
    %1451 = vmatpush1.msra.mxu0 0.0
    %1452 = vmatprep.subr.mxu0 0.0
    %1453 = vmatpush1.msra.mxu0 0.0
    %1454 = vmatprep.subr.mxu0 0.0
    %1455 = vmatpush1.msra.mxu0 0.0
    %1456 = vmatprep.subr.mxu0 0.0
    %1457 = vmatpush1.msra.mxu0 0.0
    %1458 = vmatprep.subr.mxu0 0.0
    %1459 = vmatpush1.msra.mxu0 0.0
    %1460 = vmatprep.subr.mxu0 0.0
    %1461 = vmatpush1.msra.mxu0 0.0
    %1462 = vmatprep.subr.mxu0 0.0
    %1463 = vmatpush1.msra.mxu0 0.0
    %1464 = vmatprep.subr.mxu0 0.0
    %1465 = vmatpush1.msra.mxu0 0.0
    %1466 = vmatprep.subr.mxu0 0.0
    %1467 = vmatpush1.msra.mxu0 0.0
    %1468 = vmatprep.subr.mxu0 0.0
    %1469 = vmatpush1.msra.mxu0 0.0
    %1470 = vmatprep.subr.mxu0 0.0
    %1471 = vmatpush1.msra.mxu0 0.0
    %1472 = vmatprep.subr.mxu0 0.0
    %1473 = vmatpush1.msra.mxu0 0.0
    %1474 = vmatprep.subr.mxu0 0.0
    %1475 = vmatpush1.msra.mxu0 0.0
    %1476 = vmatprep.subr.mxu0 0.0
    %1477 = vmatpush1.msra.mxu0 0.0
    %1478 = vmatprep.subr.mxu0 0.0
    %1479 = vmatpush1.msra.mxu0 0.0
    %1480 = vmatprep.subr.mxu0 0.0
    %1481 = vmatpush1.msra.mxu0 0.0
    %1482 = vmatprep.subr.mxu0 0.0
    %1483 = vmatpush1.msra.mxu0 0.0
    %1484 = vmatprep.subr.mxu0 0.0
    %1485 = vmatpush1.msra.mxu0 0.0
    %1486 = vmatprep.subr.mxu0 0.0
    %1487 = vmatpush1.msra.mxu0 0.0
    %1488 = vmatprep.mubr.f32.mxu0 0.0
    %1489 = vmatmul.mubr.f32.gmra.mrb[0].mxu0 %v1419
    %v1490 = vpop.f32.mrb[0].mxu0
    %v1491 = vadd.f32 %v1416, %v1490
    %v1492 = vpop.f32.mrb[0].mxu0
    %1493 = vmatprep.mubr.f32.mxu0 0.0
    %1494 = vmatmul.mubr.f32.gmra.mrb[0].mxu0 %v1422
    %v1495 = vpop.f32.mrb[0].mxu0
    %v1496 = vadd.f32 %v1416, %v1495
    %v1497 = vpop.f32.mrb[0].mxu0
    %1498 = vdwg.mxu0
    %s1499 = scalar_lea.vmem [#allocation2], 32
    %v1500 = vld [vmem:[%s1499] sm:$0xff]
    %v1501 = vld [vmem:[%s1499 + $0x8] sm:$0xff]
    %v1502 = vld [vmem:[%s1499 + $0x10] sm:$0xff]
    %v1503 = vld [vmem:[%s1499 + $0x18] sm:$0xff]
    %1505 = vrot.lane.b32.xlu0 %v1491, 96
    %v1506 = vpop.permute.xlu0 %1505
    %v1507 = vsel %vm260, %v1491, 0
    %v1509 = vsel %vm260, %v1506, 0
    %1511 = vmatprep.subr.mxu0 0.0
    %1512 = vmatpush1.xpose.msra.mxu0 %v1509
    %1513 = vmatprep.subr.mxu0 0.0
    %1514 = vmatpush1.xpose.msra.mxu0 0.0
    %1515 = vmatprep.subr.mxu0 0.0
    %1516 = vmatpush1.xpose.msra.mxu0 0.0
    %1517 = vmatprep.subr.mxu0 0.0
    %1518 = vmatpush1.xpose.msra.mxu0 0.0
    %1519 = vmatprep.subr.mxu0 0.0
    %1520 = vmatpush1.xpose.msra.mxu0 0.0
    %1521 = vmatprep.subr.mxu0 0.0
    %1522 = vmatpush1.xpose.msra.mxu0 0.0
    %1523 = vmatprep.subr.mxu0 0.0
    %1524 = vmatpush1.xpose.msra.mxu0 0.0
    %1525 = vmatprep.subr.mxu0 0.0
    %1526 = vmatpush1.xpose.msra.mxu0 0.0
    %1527 = vmatprep.subr.mxu0 0.0
    %1528 = vmatpush1.xpose.msra.mxu0 0.0
    %1529 = vmatprep.subr.mxu0 0.0
    %1530 = vmatpush1.xpose.msra.mxu0 0.0
    %1531 = vmatprep.subr.mxu0 0.0
    %1532 = vmatpush1.xpose.msra.mxu0 0.0
    %1533 = vmatprep.subr.mxu0 0.0
    %1534 = vmatpush1.xpose.msra.mxu0 0.0
    %1535 = vmatprep.subr.mxu0 0.0
    %1536 = vmatpush1.xpose.msra.mxu0 0.0
    %1537 = vmatprep.subr.mxu0 0.0
    %1538 = vmatpush1.xpose.msra.mxu0 0.0
    %1539 = vmatprep.subr.mxu0 0.0
    %1540 = vmatpush1.xpose.msra.mxu0 0.0
    %1541 = vmatprep.subr.mxu0 0.0
    %1542 = vmatpush1.xpose.msra.mxu0 0.0
    %1543 = vmatprep.subr.mxu0 0.0
    %1544 = vmatpush1.xpose.msra.mxu0 0.0
    %1545 = vmatprep.subr.mxu0 0.0
    %1546 = vmatpush1.xpose.msra.mxu0 0.0
    %1547 = vmatprep.subr.mxu0 0.0
    %1548 = vmatpush1.xpose.msra.mxu0 0.0
    %1549 = vmatprep.subr.mxu0 0.0
    %1550 = vmatpush1.xpose.msra.mxu0 0.0
    %1551 = vmatprep.subr.mxu0 0.0
    %1552 = vmatpush1.xpose.msra.mxu0 0.0
    %1553 = vmatprep.subr.mxu0 0.0
    %1554 = vmatpush1.xpose.msra.mxu0 0.0
    %1555 = vmatprep.subr.mxu0 0.0
    %1556 = vmatpush1.xpose.msra.mxu0 0.0
    %1557 = vmatprep.subr.mxu0 0.0
    %1558 = vmatpush1.xpose.msra.mxu0 0.0
    %1559 = vmatprep.subr.mxu0 0.0
    %1560 = vmatpush1.xpose.msra.mxu0 0.0
    %1561 = vmatprep.subr.mxu0 0.0
    %1562 = vmatpush1.xpose.msra.mxu0 0.0
    %1563 = vmatprep.subr.mxu0 0.0
    %1564 = vmatpush1.xpose.msra.mxu0 0.0
    %1565 = vmatprep.subr.mxu0 0.0
    %1566 = vmatpush1.xpose.msra.mxu0 0.0
    %1567 = vmatprep.subr.mxu0 0.0
    %1568 = vmatpush1.xpose.msra.mxu0 0.0
    %1569 = vmatprep.subr.mxu0 0.0
    %1570 = vmatpush1.xpose.msra.mxu0 0.0
    %1571 = vmatprep.subr.mxu0 0.0
    %1572 = vmatpush1.xpose.msra.mxu0 0.0
    %1573 = vmatprep.subr.mxu0 0.0
    %1574 = vmatpush1.xpose.msra.mxu0 0.0
    %1575 = vmatprep.mubr.f32.mxu0 0.0
    %1576 = vmatmul.mubr.f32.gmra.mrb[0].mxu0 %v1507
    %v1577 = vpop.f32.mrb[0].mxu0
    %v1578 = vadd.f32 0.0, %v1577
    %v1579 = vpop.f32.mrb[0].mxu0
    %1580 = vdwg.mxu0
    %1582 = vrot.lane.b32.xlu0 %v1496, 96
    %v1583 = vpop.permute.xlu0 %1582
    %v1584 = vsel %vm260, %v1496, 0
    %v1586 = vsel %vm260, %v1583, 0
    %1588 = vmatprep.subr.mxu0 0.0
    %1589 = vmatpush1.xpose.msra.mxu0 %v1586
    %1590 = vmatprep.subr.mxu0 0.0
    %1591 = vmatpush1.xpose.msra.mxu0 0.0
    %1592 = vmatprep.subr.mxu0 0.0
    %1593 = vmatpush1.xpose.msra.mxu0 0.0
    %1594 = vmatprep.subr.mxu0 0.0
    %1595 = vmatpush1.xpose.msra.mxu0 0.0
    %1596 = vmatprep.subr.mxu0 0.0
    %1597 = vmatpush1.xpose.msra.mxu0 0.0
    %1598 = vmatprep.subr.mxu0 0.0
    %1599 = vmatpush1.xpose.msra.mxu0 0.0
    %1600 = vmatprep.subr.mxu0 0.0
    %1601 = vmatpush1.xpose.msra.mxu0 0.0
    %1602 = vmatprep.subr.mxu0 0.0
    %1603 = vmatpush1.xpose.msra.mxu0 0.0
    %1604 = vmatprep.subr.mxu0 0.0
    %1605 = vmatpush1.xpose.msra.mxu0 0.0
    %1606 = vmatprep.subr.mxu0 0.0
    %1607 = vmatpush1.xpose.msra.mxu0 0.0
    %1608 = vmatprep.subr.mxu0 0.0
    %1609 = vmatpush1.xpose.msra.mxu0 0.0
    %1610 = vmatprep.subr.mxu0 0.0
    %1611 = vmatpush1.xpose.msra.mxu0 0.0
    %1612 = vmatprep.subr.mxu0 0.0
    %1613 = vmatpush1.xpose.msra.mxu0 0.0
    %1614 = vmatprep.subr.mxu0 0.0
    %1615 = vmatpush1.xpose.msra.mxu0 0.0
    %1616 = vmatprep.subr.mxu0 0.0
    %1617 = vmatpush1.xpose.msra.mxu0 0.0
    %1618 = vmatprep.subr.mxu0 0.0
    %1619 = vmatpush1.xpose.msra.mxu0 0.0
    %1620 = vmatprep.subr.mxu0 0.0
    %1621 = vmatpush1.xpose.msra.mxu0 0.0
    %1622 = vmatprep.subr.mxu0 0.0
    %1623 = vmatpush1.xpose.msra.mxu0 0.0
    %1624 = vmatprep.subr.mxu0 0.0
    %1625 = vmatpush1.xpose.msra.mxu0 0.0
    %1626 = vmatprep.subr.mxu0 0.0
    %1627 = vmatpush1.xpose.msra.mxu0 0.0
    %1628 = vmatprep.subr.mxu0 0.0
    %1629 = vmatpush1.xpose.msra.mxu0 0.0
    %1630 = vmatprep.subr.mxu0 0.0
    %1631 = vmatpush1.xpose.msra.mxu0 0.0
    %1632 = vmatprep.subr.mxu0 0.0
    %1633 = vmatpush1.xpose.msra.mxu0 0.0
    %1634 = vmatprep.subr.mxu0 0.0
    %1635 = vmatpush1.xpose.msra.mxu0 0.0
    %1636 = vmatprep.subr.mxu0 0.0
    %1637 = vmatpush1.xpose.msra.mxu0 0.0
    %1638 = vmatprep.subr.mxu0 0.0
    %1639 = vmatpush1.xpose.msra.mxu0 0.0
    %1640 = vmatprep.subr.mxu0 0.0
    %1641 = vmatpush1.xpose.msra.mxu0 0.0
    %1642 = vmatprep.subr.mxu0 0.0
    %1643 = vmatpush1.xpose.msra.mxu0 0.0
    %1644 = vmatprep.subr.mxu0 0.0
    %1645 = vmatpush1.xpose.msra.mxu0 0.0
    %1646 = vmatprep.subr.mxu0 0.0
    %1647 = vmatpush1.xpose.msra.mxu0 0.0
    %1648 = vmatprep.subr.mxu0 0.0
    %1649 = vmatpush1.xpose.msra.mxu0 0.0
    %1650 = vmatprep.subr.mxu0 0.0
    %1651 = vmatpush1.xpose.msra.mxu0 0.0
    %1652 = vmatprep.mubr.f32.mxu0 0.0
    %1653 = vmatmul.mubr.f32.gmra.mrb[0].mxu0 %v1584
    %v1654 = vpop.f32.mrb[0].mxu0
    %v1655 = vadd.f32 0.0, %v1654
    %v1656 = vpop.f32.mrb[0].mxu0
    %1657 = vdwg.mxu0
    %v1658 = vmul.f32 %v1578, 0.25
    %v1659 = vmul.f32 %v1655, 0.25
    %v1660 = vadd.f32 %v1658, %v417
    %v1661 = vadd.f32 %v1659, %v421
    %v1662 = vsel %vm426, %v1660, -inf
    %1663 = vmax.xlane.f32.xlu0 %v1662
    %v1664 = vpop.xlane.xlu0 %1663
    %v1665 = vsel %vm426, %v1661, -inf
    %1666 = vmax.xlane.f32.xlu0 %v1665
    %v1667 = vpop.xlane.xlu0 %1666
    %v1668 = vsub.f32 %v1660, %v1664
    %v1669 = vsub.f32 %v1661, %v1667
    %v1670 = vmul.f32 %v1668, 1.442695
    %v1671 = vpow.pop %v1670
    %v1672 = vmul.f32 %v1669, 1.442695
    %v1673 = vpow.pop %v1672
    %v1674 = vsel %vm426, %v1671, 0.0
    %1675 = vadd.xlane.f32.xlu0 %v1674
    %v1676 = vpop.xlane.xlu0 %1675
    %v1677 = vsel %vm426, %v1673, 0.0
    %1678 = vadd.xlane.f32.xlu0 %v1677
    %v1679 = vpop.xlane.xlu0 %1678
    %v1680 = vrcp.pop %v1676
    %v1681 = vrcp.pop %v1679
    %v1682 = vmul.f32 %v1671, %v1680
    %v1683 = vmul.f32 %v1673, %v1681
    %1684 = vrot.lane.b32.xlu0 %v1491, 64
    %v1685 = vpop.permute.xlu0 %1684
    %v1688 = vsel %vm426, %v1682, 0
    %1690 = vmatprep.subr.mxu0 0.0
    %1691 = vmatpush1.msra.mxu0 %v1685
    %1692 = vmatprep.subr.mxu0 0.0
    %1693 = vmatpush1.msra.mxu0 0.0
    %1694 = vmatprep.subr.mxu0 0.0
    %1695 = vmatpush1.msra.mxu0 0.0
    %1696 = vmatprep.subr.mxu0 0.0
    %1697 = vmatpush1.msra.mxu0 0.0
    %1698 = vmatprep.subr.mxu0 0.0
    %1699 = vmatpush1.msra.mxu0 0.0
    %1700 = vmatprep.subr.mxu0 0.0
    %1701 = vmatpush1.msra.mxu0 0.0
    %1702 = vmatprep.subr.mxu0 0.0
    %1703 = vmatpush1.msra.mxu0 0.0
    %1704 = vmatprep.subr.mxu0 0.0
    %1705 = vmatpush1.msra.mxu0 0.0
    %1706 = vmatprep.subr.mxu0 0.0
    %1707 = vmatpush1.msra.mxu0 0.0
    %1708 = vmatprep.subr.mxu0 0.0
    %1709 = vmatpush1.msra.mxu0 0.0
    %1710 = vmatprep.subr.mxu0 0.0
    %1711 = vmatpush1.msra.mxu0 0.0
    %1712 = vmatprep.subr.mxu0 0.0
    %1713 = vmatpush1.msra.mxu0 0.0
    %1714 = vmatprep.subr.mxu0 0.0
    %1715 = vmatpush1.msra.mxu0 0.0
    %1716 = vmatprep.subr.mxu0 0.0
    %1717 = vmatpush1.msra.mxu0 0.0
    %1718 = vmatprep.subr.mxu0 0.0
    %1719 = vmatpush1.msra.mxu0 0.0
    %1720 = vmatprep.subr.mxu0 0.0
    %1721 = vmatpush1.msra.mxu0 0.0
    %1722 = vmatprep.subr.mxu0 0.0
    %1723 = vmatpush1.msra.mxu0 0.0
    %1724 = vmatprep.subr.mxu0 0.0
    %1725 = vmatpush1.msra.mxu0 0.0
    %1726 = vmatprep.subr.mxu0 0.0
    %1727 = vmatpush1.msra.mxu0 0.0
    %1728 = vmatprep.subr.mxu0 0.0
    %1729 = vmatpush1.msra.mxu0 0.0
    %1730 = vmatprep.subr.mxu0 0.0
    %1731 = vmatpush1.msra.mxu0 0.0
    %1732 = vmatprep.subr.mxu0 0.0
    %1733 = vmatpush1.msra.mxu0 0.0
    %1734 = vmatprep.subr.mxu0 0.0
    %1735 = vmatpush1.msra.mxu0 0.0
    %1736 = vmatprep.subr.mxu0 0.0
    %1737 = vmatpush1.msra.mxu0 0.0
    %1738 = vmatprep.subr.mxu0 0.0
    %1739 = vmatpush1.msra.mxu0 0.0
    %1740 = vmatprep.subr.mxu0 0.0
    %1741 = vmatpush1.msra.mxu0 0.0
    %1742 = vmatprep.subr.mxu0 0.0
    %1743 = vmatpush1.msra.mxu0 0.0
    %1744 = vmatprep.subr.mxu0 0.0
    %1745 = vmatpush1.msra.mxu0 0.0
    %1746 = vmatprep.subr.mxu0 0.0
    %1747 = vmatpush1.msra.mxu0 0.0
    %1748 = vmatprep.subr.mxu0 0.0
    %1749 = vmatpush1.msra.mxu0 0.0
    %1750 = vmatprep.subr.mxu0 0.0
    %1751 = vmatpush1.msra.mxu0 0.0
    %1752 = vmatprep.subr.mxu0 0.0
    %1753 = vmatpush1.msra.mxu0 0.0
    %1754 = vmatprep.mubr.f32.mxu0 0.0
    %1755 = vmatmul.mubr.f32.gmra.mrb[0].mxu0 %v1688
    %v1756 = vpop.f32.mrb[0].mxu0
    %v1757 = vadd.f32 0.0, %v1756
    %v1758 = vpop.f32.mrb[0].mxu0
    %1759 = vdwg.mxu0
    %1760 = vrot.lane.b32.xlu0 %v1496, 64
    %v1761 = vpop.permute.xlu0 %1760
    %v1764 = vsel %vm426, %v1683, 0
    %1766 = vmatprep.subr.mxu0 0.0
    %1767 = vmatpush1.msra.mxu0 %v1761
    %1768 = vmatprep.subr.mxu0 0.0
    %1769 = vmatpush1.msra.mxu0 0.0
    %1770 = vmatprep.subr.mxu0 0.0
    %1771 = vmatpush1.msra.mxu0 0.0
    %1772 = vmatprep.subr.mxu0 0.0
    %1773 = vmatpush1.msra.mxu0 0.0
    %1774 = vmatprep.subr.mxu0 0.0
    %1775 = vmatpush1.msra.mxu0 0.0
    %1776 = vmatprep.subr.mxu0 0.0
    %1777 = vmatpush1.msra.mxu0 0.0
    %1778 = vmatprep.subr.mxu0 0.0
    %1779 = vmatpush1.msra.mxu0 0.0
    %1780 = vmatprep.subr.mxu0 0.0
    %1781 = vmatpush1.msra.mxu0 0.0
    %1782 = vmatprep.subr.mxu0 0.0
    %1783 = vmatpush1.msra.mxu0 0.0
    %1784 = vmatprep.subr.mxu0 0.0
    %1785 = vmatpush1.msra.mxu0 0.0
    %1786 = vmatprep.subr.mxu0 0.0
    %1787 = vmatpush1.msra.mxu0 0.0
    %1788 = vmatprep.subr.mxu0 0.0
    %1789 = vmatpush1.msra.mxu0 0.0
    %1790 = vmatprep.subr.mxu0 0.0
    %1791 = vmatpush1.msra.mxu0 0.0
    %1792 = vmatprep.subr.mxu0 0.0
    %1793 = vmatpush1.msra.mxu0 0.0
    %1794 = vmatprep.subr.mxu0 0.0
    %1795 = vmatpush1.msra.mxu0 0.0
    %1796 = vmatprep.subr.mxu0 0.0
    %1797 = vmatpush1.msra.mxu0 0.0
    %1798 = vmatprep.subr.mxu0 0.0
    %1799 = vmatpush1.msra.mxu0 0.0
    %1800 = vmatprep.subr.mxu0 0.0
    %1801 = vmatpush1.msra.mxu0 0.0
    %1802 = vmatprep.subr.mxu0 0.0
    %1803 = vmatpush1.msra.mxu0 0.0
    %1804 = vmatprep.subr.mxu0 0.0
    %1805 = vmatpush1.msra.mxu0 0.0
    %1806 = vmatprep.subr.mxu0 0.0
    %1807 = vmatpush1.msra.mxu0 0.0
    %1808 = vmatprep.subr.mxu0 0.0
    %1809 = vmatpush1.msra.mxu0 0.0
    %1810 = vmatprep.subr.mxu0 0.0
    %1811 = vmatpush1.msra.mxu0 0.0
    %1812 = vmatprep.subr.mxu0 0.0
    %1813 = vmatpush1.msra.mxu0 0.0
    %1814 = vmatprep.subr.mxu0 0.0
    %1815 = vmatpush1.msra.mxu0 0.0
    %1816 = vmatprep.subr.mxu0 0.0
    %1817 = vmatpush1.msra.mxu0 0.0
    %1818 = vmatprep.subr.mxu0 0.0
    %1819 = vmatpush1.msra.mxu0 0.0
    %1820 = vmatprep.subr.mxu0 0.0
    %1821 = vmatpush1.msra.mxu0 0.0
    %1822 = vmatprep.subr.mxu0 0.0
    %1823 = vmatpush1.msra.mxu0 0.0
    %1824 = vmatprep.subr.mxu0 0.0
    %1825 = vmatpush1.msra.mxu0 0.0
    %1826 = vmatprep.subr.mxu0 0.0
    %1827 = vmatpush1.msra.mxu0 0.0
    %1828 = vmatprep.subr.mxu0 0.0
    %1829 = vmatpush1.msra.mxu0 0.0
    %1830 = vmatprep.mubr.f32.mxu0 0.0
    %1831 = vmatmul.mubr.f32.gmra.mrb[0].mxu0 %v1764
    %v1832 = vpop.f32.mrb[0].mxu0
    %v1833 = vadd.f32 0.0, %v1832
    %v1834 = vpop.f32.mrb[0].mxu0
    %1835 = vdwg.mxu0
    %1836 = vrot.lane.b32.xlu0 %v1491, 112
    %v1837 = vpop.permute.xlu0 %1836
    %1838 = vrot.lane.b32.xlu0 %v1491, 80
    %v1839 = vpop.permute.xlu0 %1838
    %v1840 = vsel %vm260, %v1837, 0
    %v1842 = vsel %vm260, %v1839, 0
    %1844 = vmatprep.subr.mxu0 0.0
    %1845 = vmatpush1.xpose.msra.mxu0 %v1842
    %1846 = vmatprep.subr.mxu0 0.0
    %1847 = vmatpush1.xpose.msra.mxu0 0.0
    %1848 = vmatprep.subr.mxu0 0.0
    %1849 = vmatpush1.xpose.msra.mxu0 0.0
    %1850 = vmatprep.subr.mxu0 0.0
    %1851 = vmatpush1.xpose.msra.mxu0 0.0
    %1852 = vmatprep.subr.mxu0 0.0
    %1853 = vmatpush1.xpose.msra.mxu0 0.0
    %1854 = vmatprep.subr.mxu0 0.0
    %1855 = vmatpush1.xpose.msra.mxu0 0.0
    %1856 = vmatprep.subr.mxu0 0.0
    %1857 = vmatpush1.xpose.msra.mxu0 0.0
    %1858 = vmatprep.subr.mxu0 0.0
    %1859 = vmatpush1.xpose.msra.mxu0 0.0
    %1860 = vmatprep.subr.mxu0 0.0
    %1861 = vmatpush1.xpose.msra.mxu0 0.0
    %1862 = vmatprep.subr.mxu0 0.0
    %1863 = vmatpush1.xpose.msra.mxu0 0.0
    %1864 = vmatprep.subr.mxu0 0.0
    %1865 = vmatpush1.xpose.msra.mxu0 0.0
    %1866 = vmatprep.subr.mxu0 0.0
    %1867 = vmatpush1.xpose.msra.mxu0 0.0
    %1868 = vmatprep.subr.mxu0 0.0
    %1869 = vmatpush1.xpose.msra.mxu0 0.0
    %1870 = vmatprep.subr.mxu0 0.0
    %1871 = vmatpush1.xpose.msra.mxu0 0.0
    %1872 = vmatprep.subr.mxu0 0.0
    %1873 = vmatpush1.xpose.msra.mxu0 0.0
    %1874 = vmatprep.subr.mxu0 0.0
    %1875 = vmatpush1.xpose.msra.mxu0 0.0
    %1876 = vmatprep.subr.mxu0 0.0
    %1877 = vmatpush1.xpose.msra.mxu0 0.0
    %1878 = vmatprep.subr.mxu0 0.0
    %1879 = vmatpush1.xpose.msra.mxu0 0.0
    %1880 = vmatprep.subr.mxu0 0.0
    %1881 = vmatpush1.xpose.msra.mxu0 0.0
    %1882 = vmatprep.subr.mxu0 0.0
    %1883 = vmatpush1.xpose.msra.mxu0 0.0
    %1884 = vmatprep.subr.mxu0 0.0
    %1885 = vmatpush1.xpose.msra.mxu0 0.0
    %1886 = vmatprep.subr.mxu0 0.0
    %1887 = vmatpush1.xpose.msra.mxu0 0.0
    %1888 = vmatprep.subr.mxu0 0.0
    %1889 = vmatpush1.xpose.msra.mxu0 0.0
    %1890 = vmatprep.subr.mxu0 0.0
    %1891 = vmatpush1.xpose.msra.mxu0 0.0
    %1892 = vmatprep.subr.mxu0 0.0
    %1893 = vmatpush1.xpose.msra.mxu0 0.0
    %1894 = vmatprep.subr.mxu0 0.0
    %1895 = vmatpush1.xpose.msra.mxu0 0.0
    %1896 = vmatprep.subr.mxu0 0.0
    %1897 = vmatpush1.xpose.msra.mxu0 0.0
    %1898 = vmatprep.subr.mxu0 0.0
    %1899 = vmatpush1.xpose.msra.mxu0 0.0
    %1900 = vmatprep.subr.mxu0 0.0
    %1901 = vmatpush1.xpose.msra.mxu0 0.0
    %1902 = vmatprep.subr.mxu0 0.0
    %1903 = vmatpush1.xpose.msra.mxu0 0.0
    %1904 = vmatprep.subr.mxu0 0.0
    %1905 = vmatpush1.xpose.msra.mxu0 0.0
    %1906 = vmatprep.subr.mxu0 0.0
    %1907 = vmatpush1.xpose.msra.mxu0 0.0
    %1908 = vmatprep.mubr.f32.mxu0 0.0
    %1909 = vmatmul.mubr.f32.gmra.mrb[0].mxu0 %v1840
    %v1910 = vpop.f32.mrb[0].mxu0
    %v1911 = vadd.f32 0.0, %v1910
    %v1912 = vpop.f32.mrb[0].mxu0
    %1913 = vdwg.mxu0
    %1914 = vrot.lane.b32.xlu0 %v1496, 112
    %v1915 = vpop.permute.xlu0 %1914
    %1916 = vrot.lane.b32.xlu0 %v1496, 80
    %v1917 = vpop.permute.xlu0 %1916
    %v1918 = vsel %vm260, %v1915, 0
    %v1920 = vsel %vm260, %v1917, 0
    %1922 = vmatprep.subr.mxu0 0.0
    %1923 = vmatpush1.xpose.msra.mxu0 %v1920
    %1924 = vmatprep.subr.mxu0 0.0
    %1925 = vmatpush1.xpose.msra.mxu0 0.0
    %1926 = vmatprep.subr.mxu0 0.0
    %1927 = vmatpush1.xpose.msra.mxu0 0.0
    %1928 = vmatprep.subr.mxu0 0.0
    %1929 = vmatpush1.xpose.msra.mxu0 0.0
    %1930 = vmatprep.subr.mxu0 0.0
    %1931 = vmatpush1.xpose.msra.mxu0 0.0
    %1932 = vmatprep.subr.mxu0 0.0
    %1933 = vmatpush1.xpose.msra.mxu0 0.0
    %1934 = vmatprep.subr.mxu0 0.0
    %1935 = vmatpush1.xpose.msra.mxu0 0.0
    %1936 = vmatprep.subr.mxu0 0.0
    %1937 = vmatpush1.xpose.msra.mxu0 0.0
    %1938 = vmatprep.subr.mxu0 0.0
    %1939 = vmatpush1.xpose.msra.mxu0 0.0
    %1940 = vmatprep.subr.mxu0 0.0
    %1941 = vmatpush1.xpose.msra.mxu0 0.0
    %1942 = vmatprep.subr.mxu0 0.0
    %1943 = vmatpush1.xpose.msra.mxu0 0.0
    %1944 = vmatprep.subr.mxu0 0.0
    %1945 = vmatpush1.xpose.msra.mxu0 0.0
    %1946 = vmatprep.subr.mxu0 0.0
    %1947 = vmatpush1.xpose.msra.mxu0 0.0
    %1948 = vmatprep.subr.mxu0 0.0
    %1949 = vmatpush1.xpose.msra.mxu0 0.0
    %1950 = vmatprep.subr.mxu0 0.0
    %1951 = vmatpush1.xpose.msra.mxu0 0.0
    %1952 = vmatprep.subr.mxu0 0.0
    %1953 = vmatpush1.xpose.msra.mxu0 0.0
    %1954 = vmatprep.subr.mxu0 0.0
    %1955 = vmatpush1.xpose.msra.mxu0 0.0
    %1956 = vmatprep.subr.mxu0 0.0
    %1957 = vmatpush1.xpose.msra.mxu0 0.0
    %1958 = vmatprep.subr.mxu0 0.0
    %1959 = vmatpush1.xpose.msra.mxu0 0.0
    %1960 = vmatprep.subr.mxu0 0.0
    %1961 = vmatpush1.xpose.msra.mxu0 0.0
    %1962 = vmatprep.subr.mxu0 0.0
    %1963 = vmatpush1.xpose.msra.mxu0 0.0
    %1964 = vmatprep.subr.mxu0 0.0
    %1965 = vmatpush1.xpose.msra.mxu0 0.0
    %1966 = vmatprep.subr.mxu0 0.0
    %1967 = vmatpush1.xpose.msra.mxu0 0.0
    %1968 = vmatprep.subr.mxu0 0.0
    %1969 = vmatpush1.xpose.msra.mxu0 0.0
    %1970 = vmatprep.subr.mxu0 0.0
    %1971 = vmatpush1.xpose.msra.mxu0 0.0
    %1972 = vmatprep.subr.mxu0 0.0
    %1973 = vmatpush1.xpose.msra.mxu0 0.0
    %1974 = vmatprep.subr.mxu0 0.0
    %1975 = vmatpush1.xpose.msra.mxu0 0.0
    %1976 = vmatprep.subr.mxu0 0.0
    %1977 = vmatpush1.xpose.msra.mxu0 0.0
    %1978 = vmatprep.subr.mxu0 0.0
    %1979 = vmatpush1.xpose.msra.mxu0 0.0
    %1980 = vmatprep.subr.mxu0 0.0
    %1981 = vmatpush1.xpose.msra.mxu0 0.0
    %1982 = vmatprep.subr.mxu0 0.0
    %1983 = vmatpush1.xpose.msra.mxu0 0.0
    %1984 = vmatprep.subr.mxu0 0.0
    %1985 = vmatpush1.xpose.msra.mxu0 0.0
    %1986 = vmatprep.mubr.f32.mxu0 0.0
    %1987 = vmatmul.mubr.f32.gmra.mrb[0].mxu0 %v1918
    %v1988 = vpop.f32.mrb[0].mxu0
    %v1989 = vadd.f32 0.0, %v1988
    %v1990 = vpop.f32.mrb[0].mxu0
    %1991 = vdwg.mxu0
    %v1992 = vmul.f32 %v1911, 0.25
    %v1993 = vmul.f32 %v1989, 0.25
    %v1994 = vadd.f32 %v1992, %v417
    %v1995 = vadd.f32 %v1993, %v421
    %v1996 = vsel %vm426, %v1994, -inf
    %1997 = vmax.xlane.f32.xlu0 %v1996
    %v1998 = vpop.xlane.xlu0 %1997
    %v1999 = vsel %vm426, %v1995, -inf
    %2000 = vmax.xlane.f32.xlu0 %v1999
    %v2001 = vpop.xlane.xlu0 %2000
    %v2002 = vsub.f32 %v1994, %v1998
    %v2003 = vsub.f32 %v1995, %v2001
    %v2004 = vmul.f32 %v2002, 1.442695
    %v2005 = vpow.pop %v2004
    %v2006 = vmul.f32 %v2003, 1.442695
    %v2007 = vpow.pop %v2006
    %v2008 = vsel %vm426, %v2005, 0.0
    %2009 = vadd.xlane.f32.xlu0 %v2008
    %v2010 = vpop.xlane.xlu0 %2009
    %v2011 = vsel %vm426, %v2007, 0.0
    %2012 = vadd.xlane.f32.xlu0 %v2011
    %v2013 = vpop.xlane.xlu0 %2012
    %v2014 = vrcp.pop %v2010
    %v2015 = vrcp.pop %v2013
    %v2016 = vmul.f32 %v2005, %v2014
    %v2017 = vmul.f32 %v2007, %v2015
    %2018 = vrot.lane.b32.xlu0 %v1491, 48
    %v2019 = vpop.permute.xlu0 %2018
    %v2022 = vsel %vm426, %v2016, 0
    %2024 = vmatprep.subr.mxu0 0.0
    %2025 = vmatpush1.msra.mxu0 %v2019
    %2026 = vmatprep.subr.mxu0 0.0
    %2027 = vmatpush1.msra.mxu0 0.0
    %2028 = vmatprep.subr.mxu0 0.0
    %2029 = vmatpush1.msra.mxu0 0.0
    %2030 = vmatprep.subr.mxu0 0.0
    %2031 = vmatpush1.msra.mxu0 0.0
    %2032 = vmatprep.subr.mxu0 0.0
    %2033 = vmatpush1.msra.mxu0 0.0
    %2034 = vmatprep.subr.mxu0 0.0
    %2035 = vmatpush1.msra.mxu0 0.0
    %2036 = vmatprep.subr.mxu0 0.0
    %2037 = vmatpush1.msra.mxu0 0.0
    %2038 = vmatprep.subr.mxu0 0.0
    %2039 = vmatpush1.msra.mxu0 0.0
    %2040 = vmatprep.subr.mxu0 0.0
    %2041 = vmatpush1.msra.mxu0 0.0
    %2042 = vmatprep.subr.mxu0 0.0
    %2043 = vmatpush1.msra.mxu0 0.0
    %2044 = vmatprep.subr.mxu0 0.0
    %2045 = vmatpush1.msra.mxu0 0.0
    %2046 = vmatprep.subr.mxu0 0.0
    %2047 = vmatpush1.msra.mxu0 0.0
    %2048 = vmatprep.subr.mxu0 0.0
    %2049 = vmatpush1.msra.mxu0 0.0
    %2050 = vmatprep.subr.mxu0 0.0
    %2051 = vmatpush1.msra.mxu0 0.0
    %2052 = vmatprep.subr.mxu0 0.0
    %2053 = vmatpush1.msra.mxu0 0.0
    %2054 = vmatprep.subr.mxu0 0.0
    %2055 = vmatpush1.msra.mxu0 0.0
    %2056 = vmatprep.subr.mxu0 0.0
    %2057 = vmatpush1.msra.mxu0 0.0
    %2058 = vmatprep.subr.mxu0 0.0
    %2059 = vmatpush1.msra.mxu0 0.0
    %2060 = vmatprep.subr.mxu0 0.0
    %2061 = vmatpush1.msra.mxu0 0.0
    %2062 = vmatprep.subr.mxu0 0.0
    %2063 = vmatpush1.msra.mxu0 0.0
    %2064 = vmatprep.subr.mxu0 0.0
    %2065 = vmatpush1.msra.mxu0 0.0
    %2066 = vmatprep.subr.mxu0 0.0
    %2067 = vmatpush1.msra.mxu0 0.0
    %2068 = vmatprep.subr.mxu0 0.0
    %2069 = vmatpush1.msra.mxu0 0.0
    %2070 = vmatprep.subr.mxu0 0.0
    %2071 = vmatpush1.msra.mxu0 0.0
    %2072 = vmatprep.subr.mxu0 0.0
    %2073 = vmatpush1.msra.mxu0 0.0
    %2074 = vmatprep.subr.mxu0 0.0
    %2075 = vmatpush1.msra.mxu0 0.0
    %2076 = vmatprep.subr.mxu0 0.0
    %2077 = vmatpush1.msra.mxu0 0.0
    %2078 = vmatprep.subr.mxu0 0.0
    %2079 = vmatpush1.msra.mxu0 0.0
    %2080 = vmatprep.subr.mxu0 0.0
    %2081 = vmatpush1.msra.mxu0 0.0
    %2082 = vmatprep.subr.mxu0 0.0
    %2083 = vmatpush1.msra.mxu0 0.0
    %2084 = vmatprep.subr.mxu0 0.0
    %2085 = vmatpush1.msra.mxu0 0.0
    %2086 = vmatprep.subr.mxu0 0.0
    %2087 = vmatpush1.msra.mxu0 0.0
    %2088 = vmatprep.mubr.f32.mxu0 0.0
    %2089 = vmatmul.mubr.f32.gmra.mrb[0].mxu0 %v2022
    %v2090 = vpop.f32.mrb[0].mxu0
    %v2091 = vadd.f32 0.0, %v2090
    %v2092 = vpop.f32.mrb[0].mxu0
    %2093 = vdwg.mxu0
    %2094 = vrot.lane.b32.xlu0 %v1496, 48
    %v2095 = vpop.permute.xlu0 %2094
    %v2098 = vsel %vm426, %v2017, 0
    %2100 = vmatprep.subr.mxu0 0.0
    %2101 = vmatpush1.msra.mxu0 %v2095
    %2102 = vmatprep.subr.mxu0 0.0
    %2103 = vmatpush1.msra.mxu0 0.0
    %2104 = vmatprep.subr.mxu0 0.0
    %2105 = vmatpush1.msra.mxu0 0.0
    %2106 = vmatprep.subr.mxu0 0.0
    %2107 = vmatpush1.msra.mxu0 0.0
    %2108 = vmatprep.subr.mxu0 0.0
    %2109 = vmatpush1.msra.mxu0 0.0
    %2110 = vmatprep.subr.mxu0 0.0
    %2111 = vmatpush1.msra.mxu0 0.0
    %2112 = vmatprep.subr.mxu0 0.0
    %2113 = vmatpush1.msra.mxu0 0.0
    %2114 = vmatprep.subr.mxu0 0.0
    %2115 = vmatpush1.msra.mxu0 0.0
    %2116 = vmatprep.subr.mxu0 0.0
    %2117 = vmatpush1.msra.mxu0 0.0
    %2118 = vmatprep.subr.mxu0 0.0
    %2119 = vmatpush1.msra.mxu0 0.0
    %2120 = vmatprep.subr.mxu0 0.0
    %2121 = vmatpush1.msra.mxu0 0.0
    %2122 = vmatprep.subr.mxu0 0.0
    %2123 = vmatpush1.msra.mxu0 0.0
    %2124 = vmatprep.subr.mxu0 0.0
    %2125 = vmatpush1.msra.mxu0 0.0
    %2126 = vmatprep.subr.mxu0 0.0
    %2127 = vmatpush1.msra.mxu0 0.0
    %2128 = vmatprep.subr.mxu0 0.0
    %2129 = vmatpush1.msra.mxu0 0.0
    %2130 = vmatprep.subr.mxu0 0.0
    %2131 = vmatpush1.msra.mxu0 0.0
    %2132 = vmatprep.subr.mxu0 0.0
    %2133 = vmatpush1.msra.mxu0 0.0
    %2134 = vmatprep.subr.mxu0 0.0
    %2135 = vmatpush1.msra.mxu0 0.0
    %2136 = vmatprep.subr.mxu0 0.0
    %2137 = vmatpush1.msra.mxu0 0.0
    %2138 = vmatprep.subr.mxu0 0.0
    %2139 = vmatpush1.msra.mxu0 0.0
    %2140 = vmatprep.subr.mxu0 0.0
    %2141 = vmatpush1.msra.mxu0 0.0
    %2142 = vmatprep.subr.mxu0 0.0
    %2143 = vmatpush1.msra.mxu0 0.0
    %2144 = vmatprep.subr.mxu0 0.0
    %2145 = vmatpush1.msra.mxu0 0.0
    %2146 = vmatprep.subr.mxu0 0.0
    %2147 = vmatpush1.msra.mxu0 0.0
    %2148 = vmatprep.subr.mxu0 0.0
    %2149 = vmatpush1.msra.mxu0 0.0
    %2150 = vmatprep.subr.mxu0 0.0
    %2151 = vmatpush1.msra.mxu0 0.0
    %2152 = vmatprep.subr.mxu0 0.0
    %2153 = vmatpush1.msra.mxu0 0.0
    %2154 = vmatprep.subr.mxu0 0.0
    %2155 = vmatpush1.msra.mxu0 0.0
    %2156 = vmatprep.subr.mxu0 0.0
    %2157 = vmatpush1.msra.mxu0 0.0
    %2158 = vmatprep.subr.mxu0 0.0
    %2159 = vmatpush1.msra.mxu0 0.0
    %2160 = vmatprep.subr.mxu0 0.0
    %2161 = vmatpush1.msra.mxu0 0.0
    %2162 = vmatprep.subr.mxu0 0.0
    %2163 = vmatpush1.msra.mxu0 0.0
    %2164 = vmatprep.mubr.f32.mxu0 0.0
    %2165 = vmatmul.mubr.f32.gmra.mrb[0].mxu0 %v2098
    %v2166 = vpop.f32.mrb[0].mxu0
    %v2167 = vadd.f32 0.0, %v2166
    %v2168 = vpop.f32.mrb[0].mxu0
    %2169 = vdwg.mxu0
    %v2171 = vsel %vm260, %v2091, 0
    %v2174 = vsel %vm260, %v2167, 0
    %2176 = vmatprep.subr.mxu0 0.0
    %2177 = vmatpush1.msra.mxu0 %v1502
    %2178 = vmatprep.subr.mxu0 0.0
    %2179 = vmatpush1.msra.mxu0 %v1503
    %2180 = vmatprep.subr.mxu0 0.0
    %2181 = vmatpush1.msra.mxu0 0.0
    %2182 = vmatprep.subr.mxu0 0.0
    %2183 = vmatpush1.msra.mxu0 0.0
    %2184 = vmatprep.subr.mxu0 0.0
    %2185 = vmatpush1.msra.mxu0 0.0
    %2186 = vmatprep.subr.mxu0 0.0
    %2187 = vmatpush1.msra.mxu0 0.0
    %2188 = vmatprep.subr.mxu0 0.0
    %2189 = vmatpush1.msra.mxu0 0.0
    %2190 = vmatprep.subr.mxu0 0.0
    %2191 = vmatpush1.msra.mxu0 0.0
    %2192 = vmatprep.subr.mxu0 0.0
    %2193 = vmatpush1.msra.mxu0 0.0
    %2194 = vmatprep.subr.mxu0 0.0
    %2195 = vmatpush1.msra.mxu0 0.0
    %2196 = vmatprep.subr.mxu0 0.0
    %2197 = vmatpush1.msra.mxu0 0.0
    %2198 = vmatprep.subr.mxu0 0.0
    %2199 = vmatpush1.msra.mxu0 0.0
    %2200 = vmatprep.subr.mxu0 0.0
    %2201 = vmatpush1.msra.mxu0 0.0
    %2202 = vmatprep.subr.mxu0 0.0
    %2203 = vmatpush1.msra.mxu0 0.0
    %2204 = vmatprep.subr.mxu0 0.0
    %2205 = vmatpush1.msra.mxu0 0.0
    %2206 = vmatprep.subr.mxu0 0.0
    %2207 = vmatpush1.msra.mxu0 0.0
    %2208 = vmatprep.subr.mxu0 0.0
    %2209 = vmatpush1.msra.mxu0 0.0
    %2210 = vmatprep.subr.mxu0 0.0
    %2211 = vmatpush1.msra.mxu0 0.0
    %2212 = vmatprep.subr.mxu0 0.0
    %2213 = vmatpush1.msra.mxu0 0.0
    %2214 = vmatprep.subr.mxu0 0.0
    %2215 = vmatpush1.msra.mxu0 0.0
    %2216 = vmatprep.subr.mxu0 0.0
    %2217 = vmatpush1.msra.mxu0 0.0
    %2218 = vmatprep.subr.mxu0 0.0
    %2219 = vmatpush1.msra.mxu0 0.0
    %2220 = vmatprep.subr.mxu0 0.0
    %2221 = vmatpush1.msra.mxu0 0.0
    %2222 = vmatprep.subr.mxu0 0.0
    %2223 = vmatpush1.msra.mxu0 0.0
    %2224 = vmatprep.subr.mxu0 0.0
    %2225 = vmatpush1.msra.mxu0 0.0
    %2226 = vmatprep.subr.mxu0 0.0
    %2227 = vmatpush1.msra.mxu0 0.0
    %2228 = vmatprep.subr.mxu0 0.0
    %2229 = vmatpush1.msra.mxu0 0.0
    %2230 = vmatprep.subr.mxu0 0.0
    %2231 = vmatpush1.msra.mxu0 0.0
    %2232 = vmatprep.subr.mxu0 0.0
    %2233 = vmatpush1.msra.mxu0 0.0
    %2234 = vmatprep.subr.mxu0 0.0
    %2235 = vmatpush1.msra.mxu0 0.0
    %2236 = vmatprep.subr.mxu0 0.0
    %2237 = vmatpush1.msra.mxu0 0.0
    %2238 = vmatprep.subr.mxu0 0.0
    %2239 = vmatpush1.msra.mxu0 0.0
    %2240 = vmatprep.mubr.f32.mxu0 0.0
    %2241 = vmatmul.mubr.f32.gmra.mrb[0].mxu0 %v2171
    %v2242 = vpop.f32.mrb[0].mxu0
    %v2243 = vadd.f32 0.0, %v2242
    %v2244 = vpop.f32.mrb[0].mxu0
    %2245 = vmatprep.mubr.f32.mxu0 0.0
    %2246 = vmatmul.mubr.f32.gmra.mrb[0].mxu0 %v2174
    %v2247 = vpop.f32.mrb[0].mxu0
    %v2248 = vadd.f32 0.0, %v2247
    %v2249 = vpop.f32.mrb[0].mxu0
    %2250 = vdwg.mxu0
    %v2252 = vsel %vm260, %v1757, 0
    %v2255 = vsel %vm260, %v1833, 0
    %2257 = vmatprep.subr.mxu0 0.0
    %2258 = vmatpush1.msra.mxu0 %v1500
    %2259 = vmatprep.subr.mxu0 0.0
    %2260 = vmatpush1.msra.mxu0 %v1501
    %2261 = vmatprep.subr.mxu0 0.0
    %2262 = vmatpush1.msra.mxu0 0.0
    %2263 = vmatprep.subr.mxu0 0.0
    %2264 = vmatpush1.msra.mxu0 0.0
    %2265 = vmatprep.subr.mxu0 0.0
    %2266 = vmatpush1.msra.mxu0 0.0
    %2267 = vmatprep.subr.mxu0 0.0
    %2268 = vmatpush1.msra.mxu0 0.0
    %2269 = vmatprep.subr.mxu0 0.0
    %2270 = vmatpush1.msra.mxu0 0.0
    %2271 = vmatprep.subr.mxu0 0.0
    %2272 = vmatpush1.msra.mxu0 0.0
    %2273 = vmatprep.subr.mxu0 0.0
    %2274 = vmatpush1.msra.mxu0 0.0
    %2275 = vmatprep.subr.mxu0 0.0
    %2276 = vmatpush1.msra.mxu0 0.0
    %2277 = vmatprep.subr.mxu0 0.0
    %2278 = vmatpush1.msra.mxu0 0.0
    %2279 = vmatprep.subr.mxu0 0.0
    %2280 = vmatpush1.msra.mxu0 0.0
    %2281 = vmatprep.subr.mxu0 0.0
    %2282 = vmatpush1.msra.mxu0 0.0
    %2283 = vmatprep.subr.mxu0 0.0
    %2284 = vmatpush1.msra.mxu0 0.0
    %2285 = vmatprep.subr.mxu0 0.0
    %2286 = vmatpush1.msra.mxu0 0.0
    %2287 = vmatprep.subr.mxu0 0.0
    %2288 = vmatpush1.msra.mxu0 0.0
    %2289 = vmatprep.subr.mxu0 0.0
    %2290 = vmatpush1.msra.mxu0 0.0
    %2291 = vmatprep.subr.mxu0 0.0
    %2292 = vmatpush1.msra.mxu0 0.0
    %2293 = vmatprep.subr.mxu0 0.0
    %2294 = vmatpush1.msra.mxu0 0.0
    %2295 = vmatprep.subr.mxu0 0.0
    %2296 = vmatpush1.msra.mxu0 0.0
    %2297 = vmatprep.subr.mxu0 0.0
    %2298 = vmatpush1.msra.mxu0 0.0
    %2299 = vmatprep.subr.mxu0 0.0
    %2300 = vmatpush1.msra.mxu0 0.0
    %2301 = vmatprep.subr.mxu0 0.0
    %2302 = vmatpush1.msra.mxu0 0.0
    %2303 = vmatprep.subr.mxu0 0.0
    %2304 = vmatpush1.msra.mxu0 0.0
    %2305 = vmatprep.subr.mxu0 0.0
    %2306 = vmatpush1.msra.mxu0 0.0
    %2307 = vmatprep.subr.mxu0 0.0
    %2308 = vmatpush1.msra.mxu0 0.0
    %2309 = vmatprep.subr.mxu0 0.0
    %2310 = vmatpush1.msra.mxu0 0.0
    %2311 = vmatprep.subr.mxu0 0.0
    %2312 = vmatpush1.msra.mxu0 0.0
    %2313 = vmatprep.subr.mxu0 0.0
    %2314 = vmatpush1.msra.mxu0 0.0
    %2315 = vmatprep.subr.mxu0 0.0
    %2316 = vmatpush1.msra.mxu0 0.0
    %2317 = vmatprep.subr.mxu0 0.0
    %2318 = vmatpush1.msra.mxu0 0.0
    %2319 = vmatprep.subr.mxu0 0.0
    %2320 = vmatpush1.msra.mxu0 0.0
    %2321 = vmatprep.mubr.f32.mxu0 0.0
    %2322 = vmatmul.mubr.f32.gmra.mrb[0].mxu0 %v2252
    %v2323 = vpop.f32.mrb[0].mxu0
    %v2324 = vadd.f32 %v2243, %v2323
    %v2325 = vpop.f32.mrb[0].mxu0
    %2326 = vmatprep.mubr.f32.mxu0 0.0
    %2327 = vmatmul.mubr.f32.gmra.mrb[0].mxu0 %v2255
    %v2328 = vpop.f32.mrb[0].mxu0
    %v2329 = vadd.f32 %v2248, %v2328
    %v2330 = vpop.f32.mrb[0].mxu0
    %2331 = vdwg.mxu0
    %s2332 = scalar_lea.vmem %s7, 1
    %v2333 = vld [vmem:[%s2332] sm:$0x1]
    %v2335 = vlaneseq
    %v2336 = vshrl.u32 %v2335, 7
    %v2337 = vsub.s32 0, %v2336
    %v2338 = vrot.slane %v2333, %v2337
    %v2340 = vadd.f32 %v2324, %v2338
    %v2341 = vadd.f32 %v2329, %v2338
    %v2342 = vadd.f32 %v2340, %v1403
    %v2343 = vadd.f32 %v2341, %v1404
    %s2344 = scalar_lea.vmem %s8, 1
    %v2345 = vld [vmem:[%s2344] sm:$0x1]
    %s2346 = scalar_lea.vmem %s9, 1
    %v2347 = vld [vmem:[%s2346] sm:$0x1]
    %v2348 = vsel %vm91, %v2342, 0.0
    %2349 = vadd.xlane.f32.xlu0 %v2348
    %v2350 = vpop.xlane.xlu0 %2349
    %v2351 = vsel %vm91, %v2343, 0.0
    %2352 = vadd.xlane.f32.xlu0 %v2351
    %v2353 = vpop.xlane.xlu0 %2352
    %v2354 = vmul.f32 %v2350, %v98
    %v2355 = vmul.f32 %v2353, %v98
    %v2356 = vsub.f32 %v2342, %v2354
    %v2357 = vsub.f32 %v2343, %v2355
    %v2358 = vmul.f32 %v2356, %v2356
    %v2359 = vmul.f32 %v2357, %v2357
    %v2360 = vsel %vm91, %v2358, 0.0
    %2361 = vadd.xlane.f32.xlu0 %v2360
    %v2362 = vpop.xlane.xlu0 %2361
    %v2363 = vsel %vm91, %v2359, 0.0
    %2364 = vadd.xlane.f32.xlu0 %v2363
    %v2365 = vpop.xlane.xlu0 %2364
    %v2366 = vmul.f32 %v2362, %v98
    %v2367 = vmul.f32 %v2365, %v98
    %v2368 = vadd.f32 %v2366, 1e-12
    %v2369 = vadd.f32 %v2367, 1e-12
    %v2370 = vrsqrt.pop %v2368
    %v2371 = vrsqrt.pop %v2369
    %v2372 = vmul.f32 %v2356, %v2370
    %v2373 = vmul.f32 %v2357, %v2371
    %v2375 = vlaneseq
    %v2376 = vshrl.u32 %v2375, 7
    %v2377 = vsub.s32 0, %v2376
    %v2378 = vrot.slane %v2345, %v2377
    %v2380 = vmul.f32 %v2372, %v2378
    %v2381 = vmul.f32 %v2373, %v2378
    %v2383 = vlaneseq
    %v2384 = vshrl.u32 %v2383, 7
    %v2385 = vsub.s32 0, %v2384
    %v2386 = vrot.slane %v2347, %v2385
    %v2388 = vadd.f32 %v2380, %v2386
    %v2389 = vadd.f32 %v2381, %v2386
    %s2390 = scalar_lea.vmem [#allocation4], 32
    %v2391 = vld [vmem:[%s2390] sm:$0xff]
    %v2392 = vld [vmem:[%s2390 + $0x8] sm:$0xff]
    %v2393 = vld [vmem:[%s2390 + $0x10] sm:$0xff]
    %v2394 = vld [vmem:[%s2390 + $0x18] sm:$0xff]
    %s2395 = scalar_lea.vmem %s11, 1
    %v2396 = vld [vmem:[%s2395] sm:$0x1]
    %v2398 = vlaneseq
    %v2399 = vshrl.u32 %v2398, 7
    %v2400 = vsub.s32 0, %v2399
    %v2401 = vrot.slane %v2396, %v2400
    %v2404 = vsel %vm91, %v2388, 0
    %v2407 = vsel %vm91, %v2389, 0
    %2409 = vmatprep.subr.mxu0 0.0
    %2410 = vmatpush1.msra.mxu0 %v2391
    %2411 = vmatprep.subr.mxu0 0.0
    %2412 = vmatpush1.msra.mxu0 %v2392
    %2413 = vmatprep.subr.mxu0 0.0
    %2414 = vmatpush1.msra.mxu0 %v2393
    %2415 = vmatprep.subr.mxu0 0.0
    %2416 = vmatpush1.msra.mxu0 %v2394
    %2417 = vmatprep.subr.mxu0 0.0
    %2418 = vmatpush1.msra.mxu0 0.0
    %2419 = vmatprep.subr.mxu0 0.0
    %2420 = vmatpush1.msra.mxu0 0.0
    %2421 = vmatprep.subr.mxu0 0.0
    %2422 = vmatpush1.msra.mxu0 0.0
    %2423 = vmatprep.subr.mxu0 0.0
    %2424 = vmatpush1.msra.mxu0 0.0
    %2425 = vmatprep.subr.mxu0 0.0
    %2426 = vmatpush1.msra.mxu0 0.0
    %2427 = vmatprep.subr.mxu0 0.0
    %2428 = vmatpush1.msra.mxu0 0.0
    %2429 = vmatprep.subr.mxu0 0.0
    %2430 = vmatpush1.msra.mxu0 0.0
    %2431 = vmatprep.subr.mxu0 0.0
    %2432 = vmatpush1.msra.mxu0 0.0
    %2433 = vmatprep.subr.mxu0 0.0
    %2434 = vmatpush1.msra.mxu0 0.0
    %2435 = vmatprep.subr.mxu0 0.0
    %2436 = vmatpush1.msra.mxu0 0.0
    %2437 = vmatprep.subr.mxu0 0.0
    %2438 = vmatpush1.msra.mxu0 0.0
    %2439 = vmatprep.subr.mxu0 0.0
    %2440 = vmatpush1.msra.mxu0 0.0
    %2441 = vmatprep.subr.mxu0 0.0
    %2442 = vmatpush1.msra.mxu0 0.0
    %2443 = vmatprep.subr.mxu0 0.0
    %2444 = vmatpush1.msra.mxu0 0.0
    %2445 = vmatprep.subr.mxu0 0.0
    %2446 = vmatpush1.msra.mxu0 0.0
    %2447 = vmatprep.subr.mxu0 0.0
    %2448 = vmatpush1.msra.mxu0 0.0
    %2449 = vmatprep.subr.mxu0 0.0
    %2450 = vmatpush1.msra.mxu0 0.0
    %2451 = vmatprep.subr.mxu0 0.0
    %2452 = vmatpush1.msra.mxu0 0.0
    %2453 = vmatprep.subr.mxu0 0.0
    %2454 = vmatpush1.msra.mxu0 0.0
    %2455 = vmatprep.subr.mxu0 0.0
    %2456 = vmatpush1.msra.mxu0 0.0
    %2457 = vmatprep.subr.mxu0 0.0
    %2458 = vmatpush1.msra.mxu0 0.0
    %2459 = vmatprep.subr.mxu0 0.0
    %2460 = vmatpush1.msra.mxu0 0.0
    %2461 = vmatprep.subr.mxu0 0.0
    %2462 = vmatpush1.msra.mxu0 0.0
    %2463 = vmatprep.subr.mxu0 0.0
    %2464 = vmatpush1.msra.mxu0 0.0
    %2465 = vmatprep.subr.mxu0 0.0
    %2466 = vmatpush1.msra.mxu0 0.0
    %2467 = vmatprep.subr.mxu0 0.0
    %2468 = vmatpush1.msra.mxu0 0.0
    %2469 = vmatprep.subr.mxu0 0.0
    %2470 = vmatpush1.msra.mxu0 0.0
    %2471 = vmatprep.subr.mxu0 0.0
    %2472 = vmatpush1.msra.mxu0 0.0
    %2473 = vmatprep.mubr.f32.mxu0 0.0
    %2474 = vmatmul.mubr.f32.gmra.mrb[0].mxu0 %v2404
    %v2475 = vpop.f32.mrb[0].mxu0
    %v2476 = vadd.f32 %v2401, %v2475
    %v2477 = vpop.f32.mrb[0].mxu0
    %2478 = vmatprep.mubr.f32.mxu0 0.0
    %2479 = vmatmul.mubr.f32.gmra.mrb[0].mxu0 %v2407
    %v2480 = vpop.f32.mrb[0].mxu0
    %v2481 = vadd.f32 %v2401, %v2480
    %v2482 = vpop.f32.mrb[0].mxu0
    %2483 = vdwg.mxu0
    %v2484 = vmul.f32 %v2476, 0.5
    %v2485 = vmul.f32 %v2481, 0.5
    %v2486 = vmul.f32 %v2476, 0.044715
    %v2487 = vmul.f32 %v2481, 0.044715
    %v2488 = vmul.f32 %v2486, %v2476
    %v2489 = vmul.f32 %v2487, %v2481
    %v2490 = vmul.f32 %v2488, %v2476
    %v2491 = vmul.f32 %v2489, %v2481
    %v2492 = vadd.f32 %v2476, %v2490
    %v2493 = vadd.f32 %v2481, %v2491
    %v2494 = vmul.f32 %v2492, 0.7978846
    %v2495 = vmul.f32 %v2493, 0.7978846
    %v2496 = vtanh.pop %v2494
    %v2497 = vtanh.pop %v2495
    %v2498 = vadd.f32 %v2496, 1.0
    %v2499 = vadd.f32 %v2497, 1.0
    %v2500 = vmul.f32 %v2484, %v2498
    %v2501 = vmul.f32 %v2485, %v2499
    %s2502 = scalar_lea.vmem %s12, 64
    %v2503 = vld [vmem:[%s2502] sm:$0xff]
    %v2504 = vld [vmem:[%s2502 + $0x8] sm:$0xff]
    %v2505 = vld [vmem:[%s2502 + $0x10] sm:$0xff]
    %v2506 = vld [vmem:[%s2502 + $0x18] sm:$0xff]
    %v2507 = vld [vmem:[%s2502 + $0x20] sm:$0xff]
    %v2508 = vld [vmem:[%s2502 + $0x28] sm:$0xff]
    %v2509 = vld [vmem:[%s2502 + $0x30] sm:$0xff]
    %v2510 = vld [vmem:[%s2502 + $0x38] sm:$0xff]
    %s2511 = scalar_lea.vmem %s13, 1
    %v2512 = vld [vmem:[%s2511] sm:$0x1]
    %v2514 = vlaneseq
    %v2515 = vshrl.u32 %v2514, 7
    %v2516 = vsub.s32 0, %v2515
    %v2517 = vrot.slane %v2512, %v2516
    %v2520 = vsel %vm1277, %v2500, 0
    %v2523 = vsel %vm1277, %v2501, 0
    %2525 = vmatprep.subr.mxu0 0.0
    %2526 = vmatpush1.msra.mxu0 %v2503
    %2527 = vmatprep.subr.mxu0 0.0
    %2528 = vmatpush1.msra.mxu0 %v2504
    %2529 = vmatprep.subr.mxu0 0.0
    %2530 = vmatpush1.msra.mxu0 %v2505
    %2531 = vmatprep.subr.mxu0 0.0
    %2532 = vmatpush1.msra.mxu0 %v2506
    %2533 = vmatprep.subr.mxu0 0.0
    %2534 = vmatpush1.msra.mxu0 %v2507
    %2535 = vmatprep.subr.mxu0 0.0
    %2536 = vmatpush1.msra.mxu0 %v2508
    %2537 = vmatprep.subr.mxu0 0.0
    %2538 = vmatpush1.msra.mxu0 %v2509
    %2539 = vmatprep.subr.mxu0 0.0
    %2540 = vmatpush1.msra.mxu0 %v2510
    %2541 = vmatprep.subr.mxu0 0.0
    %2542 = vmatpush1.msra.mxu0 0.0
    %2543 = vmatprep.subr.mxu0 0.0
    %2544 = vmatpush1.msra.mxu0 0.0
    %2545 = vmatprep.subr.mxu0 0.0
    %2546 = vmatpush1.msra.mxu0 0.0
    %2547 = vmatprep.subr.mxu0 0.0
    %2548 = vmatpush1.msra.mxu0 0.0
    %2549 = vmatprep.subr.mxu0 0.0
    %2550 = vmatpush1.msra.mxu0 0.0
    %2551 = vmatprep.subr.mxu0 0.0
    %2552 = vmatpush1.msra.mxu0 0.0
    %2553 = vmatprep.subr.mxu0 0.0
    %2554 = vmatpush1.msra.mxu0 0.0
    %2555 = vmatprep.subr.mxu0 0.0
    %2556 = vmatpush1.msra.mxu0 0.0
    %2557 = vmatprep.subr.mxu0 0.0
    %2558 = vmatpush1.msra.mxu0 0.0
    %2559 = vmatprep.subr.mxu0 0.0
    %2560 = vmatpush1.msra.mxu0 0.0
    %2561 = vmatprep.subr.mxu0 0.0
    %2562 = vmatpush1.msra.mxu0 0.0
    %2563 = vmatprep.subr.mxu0 0.0
    %2564 = vmatpush1.msra.mxu0 0.0
    %2565 = vmatprep.subr.mxu0 0.0
    %2566 = vmatpush1.msra.mxu0 0.0
    %2567 = vmatprep.subr.mxu0 0.0
    %2568 = vmatpush1.msra.mxu0 0.0
    %2569 = vmatprep.subr.mxu0 0.0
    %2570 = vmatpush1.msra.mxu0 0.0
    %2571 = vmatprep.subr.mxu0 0.0
    %2572 = vmatpush1.msra.mxu0 0.0
    %2573 = vmatprep.subr.mxu0 0.0
    %2574 = vmatpush1.msra.mxu0 0.0
    %2575 = vmatprep.subr.mxu0 0.0
    %2576 = vmatpush1.msra.mxu0 0.0
    %2577 = vmatprep.subr.mxu0 0.0
    %2578 = vmatpush1.msra.mxu0 0.0
    %2579 = vmatprep.subr.mxu0 0.0
    %2580 = vmatpush1.msra.mxu0 0.0
    %2581 = vmatprep.subr.mxu0 0.0
    %2582 = vmatpush1.msra.mxu0 0.0
    %2583 = vmatprep.subr.mxu0 0.0
    %2584 = vmatpush1.msra.mxu0 0.0
    %2585 = vmatprep.subr.mxu0 0.0
    %2586 = vmatpush1.msra.mxu0 0.0
    %2587 = vmatprep.subr.mxu0 0.0
    %2588 = vmatpush1.msra.mxu0 0.0
    %2589 = vmatprep.mubr.f32.mxu0 0.0
    %2590 = vmatmul.mubr.f32.gmra.mrb[0].mxu0 %v2520
    %v2591 = vpop.f32.mrb[0].mxu0
    %v2592 = vadd.f32 %v2517, %v2591
    %v2593 = vpop.f32.mrb[0].mxu0
    %2594 = vmatprep.mubr.f32.mxu0 0.0
    %2595 = vmatmul.mubr.f32.gmra.mrb[0].mxu0 %v2523
    %v2596 = vpop.f32.mrb[0].mxu0
    %v2597 = vadd.f32 %v2517, %v2596
    %v2598 = vpop.f32.mrb[0].mxu0
    %2599 = vdwg.mxu0
    %v2600 = vadd.f32 %v2592, %v2388
    %v2601 = vadd.f32 %v2597, %v2389
    %s2602 = scalar_lea.vmem %s14, 1
    %v2603 = vld [vmem:[%s2602] sm:$0x1]
    %s2604 = scalar_lea.vmem %s15, 1
    %v2605 = vld [vmem:[%s2604] sm:$0x1]
    %v2606 = vsel %vm91, %v2600, 0.0
    %2607 = vadd.xlane.f32.xlu0 %v2606
    %v2608 = vpop.xlane.xlu0 %2607
    %v2609 = vsel %vm91, %v2601, 0.0
    %2610 = vadd.xlane.f32.xlu0 %v2609
    %v2611 = vpop.xlane.xlu0 %2610
    %v2612 = vmul.f32 %v2608, %v98
    %v2613 = vmul.f32 %v2611, %v98
    %v2614 = vsub.f32 %v2600, %v2612
    %v2615 = vsub.f32 %v2601, %v2613
    %v2616 = vmul.f32 %v2614, %v2614
    %v2617 = vmul.f32 %v2615, %v2615
    %v2618 = vsel %vm91, %v2616, 0.0
    %2619 = vadd.xlane.f32.xlu0 %v2618
    %v2620 = vpop.xlane.xlu0 %2619
    %v2621 = vsel %vm91, %v2617, 0.0
    %2622 = vadd.xlane.f32.xlu0 %v2621
    %v2623 = vpop.xlane.xlu0 %2622
    %v2624 = vmul.f32 %v2620, %v98
    %v2625 = vmul.f32 %v2623, %v98
    %v2626 = vadd.f32 %v2624, 1e-12
    %v2627 = vadd.f32 %v2625, 1e-12
    %v2628 = vrsqrt.pop %v2626
    %v2629 = vrsqrt.pop %v2627
    %v2630 = vmul.f32 %v2614, %v2628
    %v2631 = vmul.f32 %v2615, %v2629
    %v2633 = vlaneseq
    %v2634 = vshrl.u32 %v2633, 7
    %v2635 = vsub.s32 0, %v2634
    %v2636 = vrot.slane %v2603, %v2635
    %v2638 = vmul.f32 %v2630, %v2636
    %v2639 = vmul.f32 %v2631, %v2636
    %v2641 = vlaneseq
    %v2642 = vshrl.u32 %v2641, 7
    %v2643 = vsub.s32 0, %v2642
    %v2644 = vrot.slane %v2605, %v2643
    %v2646 = vadd.f32 %v2638, %v2644
    %v2647 = vadd.f32 %v2639, %v2644
    %v2649 = vrot.slane %v2647, 7
    %vm2651 = vcmask 1040384
    %v2652 = vsel %vm2651, %v2646, %v2649
    %v2653 = vld [vmem:[%s16] sm:$0xff]
    %v2654 = vld [vmem:[%s16 + $0x8] sm:$0xff]
    %v2655 = vld [vmem:[%s16 + $0x10] sm:$0xff]
    %v2656 = vld [vmem:[%s16 + $0x18] sm:$0xff]
    %v2657 = vld [vmem:[%s17] sm:$0x1]
    %v2659 = vlaneseq
    %v2660 = vshrl.u32 %v2659, 7
    %v2661 = vsub.s32 0, %v2660
    %v2662 = vrot.slane %v2657, %v2661
    %v2665 = vsel %vm91, %v2652, 0
    %2667 = vmatprep.subr.mxu0 0.0
    %2668 = vmatpush1.msra.mxu0 %v2653
    %2669 = vmatprep.subr.mxu0 0.0
    %2670 = vmatpush1.msra.mxu0 %v2654
    %2671 = vmatprep.subr.mxu0 0.0
    %2672 = vmatpush1.msra.mxu0 %v2655
    %2673 = vmatprep.subr.mxu0 0.0
    %2674 = vmatpush1.msra.mxu0 %v2656
    %2675 = vmatprep.subr.mxu0 0.0
    %2676 = vmatpush1.msra.mxu0 0.0
    %2677 = vmatprep.subr.mxu0 0.0
    %2678 = vmatpush1.msra.mxu0 0.0
    %2679 = vmatprep.subr.mxu0 0.0
    %2680 = vmatpush1.msra.mxu0 0.0
    %2681 = vmatprep.subr.mxu0 0.0
    %2682 = vmatpush1.msra.mxu0 0.0
    %2683 = vmatprep.subr.mxu0 0.0
    %2684 = vmatpush1.msra.mxu0 0.0
    %2685 = vmatprep.subr.mxu0 0.0
    %2686 = vmatpush1.msra.mxu0 0.0
    %2687 = vmatprep.subr.mxu0 0.0
    %2688 = vmatpush1.msra.mxu0 0.0
    %2689 = vmatprep.subr.mxu0 0.0
    %2690 = vmatpush1.msra.mxu0 0.0
    %2691 = vmatprep.subr.mxu0 0.0
    %2692 = vmatpush1.msra.mxu0 0.0
    %2693 = vmatprep.subr.mxu0 0.0
    %2694 = vmatpush1.msra.mxu0 0.0
    %2695 = vmatprep.subr.mxu0 0.0
    %2696 = vmatpush1.msra.mxu0 0.0
    %2697 = vmatprep.subr.mxu0 0.0
    %2698 = vmatpush1.msra.mxu0 0.0
    %2699 = vmatprep.subr.mxu0 0.0
    %2700 = vmatpush1.msra.mxu0 0.0
    %2701 = vmatprep.subr.mxu0 0.0
    %2702 = vmatpush1.msra.mxu0 0.0
    %2703 = vmatprep.subr.mxu0 0.0
    %2704 = vmatpush1.msra.mxu0 0.0
    %2705 = vmatprep.subr.mxu0 0.0
    %2706 = vmatpush1.msra.mxu0 0.0
    %2707 = vmatprep.subr.mxu0 0.0
    %2708 = vmatpush1.msra.mxu0 0.0
    %2709 = vmatprep.subr.mxu0 0.0
    %2710 = vmatpush1.msra.mxu0 0.0
    %2711 = vmatprep.subr.mxu0 0.0
    %2712 = vmatpush1.msra.mxu0 0.0
    %2713 = vmatprep.subr.mxu0 0.0
    %2714 = vmatpush1.msra.mxu0 0.0
    %2715 = vmatprep.subr.mxu0 0.0
    %2716 = vmatpush1.msra.mxu0 0.0
    %2717 = vmatprep.subr.mxu0 0.0
    %2718 = vmatpush1.msra.mxu0 0.0
    %2719 = vmatprep.subr.mxu0 0.0
    %2720 = vmatpush1.msra.mxu0 0.0
    %2721 = vmatprep.subr.mxu0 0.0
    %2722 = vmatpush1.msra.mxu0 0.0
    %2723 = vmatprep.subr.mxu0 0.0
    %2724 = vmatpush1.msra.mxu0 0.0
    %2725 = vmatprep.subr.mxu0 0.0
    %2726 = vmatpush1.msra.mxu0 0.0
    %2727 = vmatprep.subr.mxu0 0.0
    %2728 = vmatpush1.msra.mxu0 0.0
    %2729 = vmatprep.subr.mxu0 0.0
    %2730 = vmatpush1.msra.mxu0 0.0
    %2731 = vmatprep.mubr.f32.mxu0 0.0
    %2732 = vmatmul.mubr.f32.gmra.mrb[0].mxu0 %v2665
    %v2733 = vpop.f32.mrb[0].mxu0
    %v2734 = vadd.f32 %v2662, %v2733
    %v2735 = vpop.f32.mrb[0].mxu0
    %2736 = vdwg.mxu0
    %v2737 = vsub.f32 0.0, %v2734
    %v2738 = vmul.f32 %v2737, 1.442695
    %v2739 = vpow.pop %v2738
    %v2740 = vadd.f32 %v2739, 1.0
    %v2741 = vrcp.pop %v2740
    %2742 = vst [vmem:[%s18] sm:$0x3] %v2741
    // Predicated region
    $region82: #{bert_classifier_forward.1} parent=1 // pred_check
      _
    $region83: #{bert_classifier_forward.1} parent=1 // pred_check_branch
      %2744 = sbr.rel (0) target = $region85
    $region84: #{bert_classifier_forward.1} parent=1 // pred_region
      _
    $region85: #{bert_classifier_forward.1} parent=1 // pred_fallthru
      _
    // Predicated region
    $region86: #{bert_classifier_forward.1} parent=1 // pred_check
      _
    $region87: #{bert_classifier_forward.1} parent=1 // pred_check_branch
      %2746 = sbr.rel (0) target = $region89
    $region88: #{bert_classifier_forward.1} parent=1 // pred_region
      _
    $region89: #{bert_classifier_forward.1} parent=1 // pred_fallthru
      _
    %2747 = vsyncpa [#allocation3], 1
    %2748 = vsyncpa [#allocation5], 1

</llo_original>
